<compile_context>
chip_gen: v7x
topology: tpu7x:2x2x1
jax: 0.10.0
libtpu: 0.0.40
codegen_flags: <defaults>
</compile_context>

<pallas_src>
import jax
import jax.numpy as jnp
from jax.experimental import pallas as pl
from jax.experimental.pallas import tpu as pltpu

LANE = 128      # vreg lane width   (last dim)
SUBLANE = 8     # vreg sublane rows (second-to-last dim)


def _layer_dims(input_shape):
    """(in, out) per Linear layer, encoder then decoder, in forward order."""
    enc = [(input_shape, 512), (512, 256), (256, 128), (128, 32), (32, 16)]
    dec = [(16, 32), (32, 128), (128, 256), (256, 512), (512, input_shape)]
    return enc + dec


def _round_up(n, m):
    return ((n + m - 1) // m) * m


def ae_kernel(*refs):
    """refs = (x_ref, w1, b1, ..., w10, b10, out_ref); all blocks in VMEM.

    The composed convAE forward applies ReLU after every one of the 10 layers
    (the decoder's leading relu(code) covers the encoder's un-activated output).
    """
    x_ref, out_ref = refs[0], refs[-1]
    param_refs = refs[1:-1]
    h = x_ref[...]                                   # f32 (tb, Dp)
    n_layers = len(param_refs) // 2
    for li in range(n_layers):                       # static unroll (10 layers)
        w = param_refs[2 * li][...]                  # bf16 (in_p, out_p), pre-transposed
        b = param_refs[2 * li + 1][...]              # f32  (1, out_p)
        # bf16 operands -> native MXU pass; f32 accumulation + f32 bias / ReLU.
        h = jnp.dot(h.astype(jnp.bfloat16), w,
                    preferred_element_type=jnp.float32) + b
        h = jnp.maximum(h, 0.0)                      # ReLU after every layer
    out_ref[...] = h.astype(out_ref.dtype)


# Stay under the smallest scoped-VMEM default (v5e: 16 MiB); leaves headroom for
# Mosaic's own scratch without needing vmem_limit_bytes overrides anywhere.
_VMEM_BUDGET_BYTES = 12 * 1024 * 1024


def conv_ae_forward(x, params, *, batch_tile=512):
    """x: (B, D) float; params: list of 10 (w, b) with w:(in, out), b:(1, out)."""
    x = x.astype(jnp.float32)
    B, D = x.shape

    # --- lane-dense feature dim: pad D to a multiple of 128, slice back later.
    Dp = _round_up(D, LANE)
    if Dp != D:
        x = jnp.pad(x, ((0, 0), (0, Dp - D)))

    # --- pad every layer to lane-dense widths and cast weights to bf16.
    flat_params = []
    param_specs = []
    const_bytes = 0
    for w, b in params:
        din, dout = w.shape
        din_p, dout_p = _round_up(din, LANE), _round_up(dout, LANE)
        w_p = jnp.zeros((din_p, dout_p), jnp.bfloat16)
        w_p = w_p.at[:din, :dout].set(w.astype(jnp.bfloat16))
        b_p = jnp.zeros((1, dout_p), jnp.float32)
        b_p = b_p.at[:, :dout].set(b.reshape(1, dout).astype(jnp.float32))
        flat_params += [w_p, b_p]
        # Constant index_map -> DMA'd once, resident in VMEM across grid steps.
        param_specs.append(pl.BlockSpec((din_p, dout_p), lambda i: (0, 0)))
        param_specs.append(pl.BlockSpec((1, dout_p), lambda i: (0, 0)))
        const_bytes += din_p * dout_p * 2 + dout_p * 4
    const_bytes *= 2  # default pipelining double-buffers even constant blocks
    # TODO(synk): for very large input_shape (Dp*512 weight blocks approaching
    # v7x's 32 MiB scoped VMEM), give the first/last layers a K/N-tiled grid
    # axis (or a pltpu.emit_pipeline inner loop) instead of whole-block constants.

    # --- batch tile: as large as the VMEM budget allows (amortizes the ~0.35us
    #     per-grid-step overhead and the MXU weight push), sublane-aligned.
    tb = max(SUBLANE, min(batch_tile, _round_up(B, SUBLANE)))

    def _stream_bytes(t):        # x + out tiles, f32, double-buffered
        return 2 * 2 * t * Dp * 4

    while tb > SUBLANE and const_bytes + _stream_bytes(tb) > _VMEM_BUDGET_BYTES:
        tb = _round_up(tb // 2, SUBLANE)
    Bp = _round_up(B, tb)

    # --- v7x megacore: ensure the "parallel" batch axis has >=2 steps so the
    #     second TensorCore gets work (one extra tiny step on v5e/v6e).
    if Bp // tb == 1 and Bp >= 2 * SUBLANE:
        tb = _round_up(Bp // 2, SUBLANE)
        Bp = _round_up(B, tb)

    if Bp != B:
        x = jnp.pad(x, ((0, Bp - B), (0, 0)))        # padded rows sliced off below

    in_specs = [pl.BlockSpec((tb, Dp), lambda i: (i, 0))] + param_specs

    out = pl.pallas_call(
        ae_kernel,
        out_shape=jax.ShapeDtypeStruct((Bp, Dp), jnp.float32),
        grid=(Bp // tb,),
        in_specs=in_specs,
        out_specs=pl.BlockSpec((tb, Dp), lambda i: (i, 0)),
        compiler_params=pltpu.CompilerParams(
            dimension_semantics=("parallel",)),      # batch rows are independent
    )(x, *flat_params)
    return out[:B, :D]


def ref_forward(x, params, *, bf16_matmul=False):
    """Pure-JAX reference mirroring the torch module structure exactly."""
    def lin(h, wb):
        w, b = wb
        b = b.reshape(1, -1).astype(jnp.float32)
        if bf16_matmul:   # same numeric recipe as the kernel
            return jnp.dot(h.astype(jnp.bfloat16), w.astype(jnp.bfloat16),
                           preferred_element_type=jnp.float32) + b
        return h @ w + b
    enc, dec = params[:5], params[5:]
    h = x.astype(jnp.float32)
    for wb in enc[:-1]:
        h = jnp.maximum(lin(h, wb), 0.0)
    code = lin(h, enc[-1])                            # encoder output, no ReLU
    h = jnp.maximum(code, 0.0)                        # decoder: relu(features)
    for wb in dec[:-1]:
        h = jnp.maximum(lin(h, wb), 0.0)
    return jnp.maximum(lin(h, dec[-1]), 0.0)          # decoder output ReLU


if __name__ == "__main__":
    key = jax.random.PRNGKey(0)
    D = 256                                           # kwargs['input_shape'] (lane-dense)
    B = 16                                            # small batch (exercises >=2 grid steps)
    dims = _layer_dims(D)

    keys = jax.random.split(key, 2 * len(dims) + 1)
    params = []
    for li, (din, dout) in enumerate(dims):
        s = 1.0 / (din ** 0.5)                        # PyTorch Linear default init range
        w = jax.random.uniform(keys[2 * li], (din, dout), jnp.float32, -s, s)
        b = jax.random.uniform(keys[2 * li + 1], (1, dout), jnp.float32, -s, s)
        params.append((w, b))

    x = jax.random.normal(keys[-1], (B, D), jnp.float32)

    fwd = jax.jit(conv_ae_forward)
    y = fwd(x, params)
    jax.block_until_ready(y)
    assert y.shape == (B, D)

    # 1) Exact-recipe check: plain-JAX forward with the same bf16-operand /
    #    f32-accumulate matmuls. Should match up to MXU-vs-XLA reassociation.
    y_bf16 = ref_forward(x, params, bf16_matmul=True)
    assert jnp.allclose(y, y_bf16, atol=2e-3, rtol=2e-3), "bf16-path mismatch"

    # 2) Semantics check vs the full-f32 torch-structured forward; tolerance
    #    covers bf16 weight/activation rounding compounded over 10 layers.
    y_f32 = ref_forward(x, params, bf16_matmul=False)
    assert jnp.allclose(y, y_f32, atol=5e-2, rtol=5e-2), "convAE output mismatch"

    print("KERNEL_OK")
</pallas_src>

<mosaic_0001>
module attributes {stable_mosaic.version = 11 : i64} {
  func.func @ae_kernel(%arg0: i32, %arg1: memref<8x256xf32, #tpu.memory_space<vmem>>, %arg2: memref<256x512xbf16, #tpu.memory_space<vmem>>, %arg3: memref<1x512xf32, #tpu.memory_space<vmem>>, %arg4: memref<512x256xbf16, #tpu.memory_space<vmem>>, %arg5: memref<1x256xf32, #tpu.memory_space<vmem>>, %arg6: memref<256x128xbf16, #tpu.memory_space<vmem>>, %arg7: memref<1x128xf32, #tpu.memory_space<vmem>>, %arg8: memref<128x128xbf16, #tpu.memory_space<vmem>>, %arg9: memref<1x128xf32, #tpu.memory_space<vmem>>, %arg10: memref<128x128xbf16, #tpu.memory_space<vmem>>, %arg11: memref<1x128xf32, #tpu.memory_space<vmem>>, %arg12: memref<128x128xbf16, #tpu.memory_space<vmem>>, %arg13: memref<1x128xf32, #tpu.memory_space<vmem>>, %arg14: memref<128x128xbf16, #tpu.memory_space<vmem>>, %arg15: memref<1x128xf32, #tpu.memory_space<vmem>>, %arg16: memref<128x256xbf16, #tpu.memory_space<vmem>>, %arg17: memref<1x256xf32, #tpu.memory_space<vmem>>, %arg18: memref<256x512xbf16, #tpu.memory_space<vmem>>, %arg19: memref<1x512xf32, #tpu.memory_space<vmem>>, %arg20: memref<512x256xbf16, #tpu.memory_space<vmem>>, %arg21: memref<1x256xf32, #tpu.memory_space<vmem>>, %arg22: memref<8x256xf32, #tpu.memory_space<vmem>>) attributes {dimension_semantics = [#tpu.dimension_semantics<parallel>], iteration_bounds = array<i64: 2>, scalar_prefetch = 0 : i64, scratch_operands = 0 : i64, tpu.core_type = #tpu.core_type<tc>, window_params = [{transform_indices = @transform_0, window_bounds = array<i64: 8, 256>}, {pipeline_mode = #tpu.pipeline_mode<synchronous>, transform_indices = @transform_1, window_bounds = array<i64: 256, 512>}, {pipeline_mode = #tpu.pipeline_mode<synchronous>, transform_indices = @transform_2, window_bounds = array<i64: 1, 512>}, {pipeline_mode = #tpu.pipeline_mode<synchronous>, transform_indices = @transform_3, window_bounds = array<i64: 512, 256>}, {pipeline_mode = #tpu.pipeline_mode<synchronous>, transform_indices = @transform_4, window_bounds = array<i64: 1, 256>}, {pipeline_mode = #tpu.pipeline_mode<synchronous>, transform_indices = @transform_5, window_bounds = array<i64: 256, 128>}, {pipeline_mode = #tpu.pipeline_mode<synchronous>, transform_indices = @transform_6, window_bounds = array<i64: 1, 128>}, {pipeline_mode = #tpu.pipeline_mode<synchronous>, transform_indices = @transform_7, window_bounds = array<i64: 128, 128>}, {pipeline_mode = #tpu.pipeline_mode<synchronous>, transform_indices = @transform_8, window_bounds = array<i64: 1, 128>}, {pipeline_mode = #tpu.pipeline_mode<synchronous>, transform_indices = @transform_9, window_bounds = array<i64: 128, 128>}, {pipeline_mode = #tpu.pipeline_mode<synchronous>, transform_indices = @transform_10, window_bounds = array<i64: 1, 128>}, {pipeline_mode = #tpu.pipeline_mode<synchronous>, transform_indices = @transform_11, window_bounds = array<i64: 128, 128>}, {pipeline_mode = #tpu.pipeline_mode<synchronous>, transform_indices = @transform_12, window_bounds = array<i64: 1, 128>}, {pipeline_mode = #tpu.pipeline_mode<synchronous>, transform_indices = @transform_13, window_bounds = array<i64: 128, 128>}, {pipeline_mode = #tpu.pipeline_mode<synchronous>, transform_indices = @transform_14, window_bounds = array<i64: 1, 128>}, {pipeline_mode = #tpu.pipeline_mode<synchronous>, transform_indices = @transform_15, window_bounds = array<i64: 128, 256>}, {pipeline_mode = #tpu.pipeline_mode<synchronous>, transform_indices = @transform_16, window_bounds = array<i64: 1, 256>}, {pipeline_mode = #tpu.pipeline_mode<synchronous>, transform_indices = @transform_17, window_bounds = array<i64: 256, 512>}, {pipeline_mode = #tpu.pipeline_mode<synchronous>, transform_indices = @transform_18, window_bounds = array<i64: 1, 512>}, {pipeline_mode = #tpu.pipeline_mode<synchronous>, transform_indices = @transform_19, window_bounds = array<i64: 512, 256>}, {pipeline_mode = #tpu.pipeline_mode<synchronous>, transform_indices = @transform_20, window_bounds = array<i64: 1, 256>}, {transform_indices = @transform_21, window_bounds = array<i64: 8, 256>}]} {
    %c0 = arith.constant 0 : index
    %c0_0 = arith.constant 0 : index
    %0 = vector.load %arg1[%c0, %c0_0] : memref<8x256xf32, #tpu.memory_space<vmem>>, vector<8x256xf32>
    %c0_1 = arith.constant 0 : index
    %c0_2 = arith.constant 0 : index
    %1 = vector.load %arg2[%c0_1, %c0_2] : memref<256x512xbf16, #tpu.memory_space<vmem>>, vector<256x512xbf16>
    %c0_3 = arith.constant 0 : index
    %c0_4 = arith.constant 0 : index
    %2 = vector.load %arg3[%c0_3, %c0_4] : memref<1x512xf32, #tpu.memory_space<vmem>>, vector<1x512xf32>
    %3 = arith.truncf %0 : vector<8x256xf32> to vector<8x256xbf16>
    %cst = arith.constant dense<0.000000e+00> : vector<8x512xf32>
    %4 = tpu.matmul %3, %1, %cst {dimension_numbers = #tpu.dot_dimension_numbers<[1], [0], [0], [1], [0, 0, 1, 1], [], []>} : vector<8x256xbf16>, vector<256x512xbf16>, vector<8x512xf32> -> vector<8x512xf32>
    %5 = vector.broadcast %2 : vector<1x512xf32> to vector<8x512xf32>
    %6 = arith.addf %4, %5 : vector<8x512xf32>
    %cst_5 = arith.constant 0.000000e+00 : f32
    %7 = vector.broadcast %cst_5 : f32 to vector<8x512xf32>
    %8 = arith.maximumf %6, %7 : vector<8x512xf32>
    %c0_6 = arith.constant 0 : index
    %c0_7 = arith.constant 0 : index
    %9 = vector.load %arg4[%c0_6, %c0_7] : memref<512x256xbf16, #tpu.memory_space<vmem>>, vector<512x256xbf16>
    %c0_8 = arith.constant 0 : index
    %c0_9 = arith.constant 0 : index
    %10 = vector.load %arg5[%c0_8, %c0_9] : memref<1x256xf32, #tpu.memory_space<vmem>>, vector<1x256xf32>
    %11 = arith.truncf %8 : vector<8x512xf32> to vector<8x512xbf16>
    %cst_10 = arith.constant dense<0.000000e+00> : vector<8x256xf32>
    %12 = tpu.matmul %11, %9, %cst_10 {dimension_numbers = #tpu.dot_dimension_numbers<[1], [0], [0], [1], [0, 0, 1, 1], [], []>} : vector<8x512xbf16>, vector<512x256xbf16>, vector<8x256xf32> -> vector<8x256xf32>
    %13 = vector.broadcast %10 : vector<1x256xf32> to vector<8x256xf32>
    %14 = arith.addf %12, %13 : vector<8x256xf32>
    %cst_11 = arith.constant 0.000000e+00 : f32
    %15 = vector.broadcast %cst_11 : f32 to vector<8x256xf32>
    %16 = arith.maximumf %14, %15 : vector<8x256xf32>
    %c0_12 = arith.constant 0 : index
    %c0_13 = arith.constant 0 : index
    %17 = vector.load %arg6[%c0_12, %c0_13] : memref<256x128xbf16, #tpu.memory_space<vmem>>, vector<256x128xbf16>
    %c0_14 = arith.constant 0 : index
    %c0_15 = arith.constant 0 : index
    %18 = vector.load %arg7[%c0_14, %c0_15] : memref<1x128xf32, #tpu.memory_space<vmem>>, vector<1x128xf32>
    %19 = arith.truncf %16 : vector<8x256xf32> to vector<8x256xbf16>
    %cst_16 = arith.constant dense<0.000000e+00> : vector<8x128xf32>
    %20 = tpu.matmul %19, %17, %cst_16 {dimension_numbers = #tpu.dot_dimension_numbers<[1], [0], [0], [1], [0, 0, 1, 1], [], []>} : vector<8x256xbf16>, vector<256x128xbf16>, vector<8x128xf32> -> vector<8x128xf32>
    %21 = vector.broadcast %18 : vector<1x128xf32> to vector<8x128xf32>
    %22 = arith.addf %20, %21 : vector<8x128xf32>
    %cst_17 = arith.constant 0.000000e+00 : f32
    %23 = vector.broadcast %cst_17 : f32 to vector<8x128xf32>
    %24 = arith.maximumf %22, %23 : vector<8x128xf32>
    %c0_18 = arith.constant 0 : index
    %c0_19 = arith.constant 0 : index
    %25 = vector.load %arg8[%c0_18, %c0_19] : memref<128x128xbf16, #tpu.memory_space<vmem>>, vector<128x128xbf16>
    %c0_20 = arith.constant 0 : index
    %c0_21 = arith.constant 0 : index
    %26 = vector.load %arg9[%c0_20, %c0_21] : memref<1x128xf32, #tpu.memory_space<vmem>>, vector<1x128xf32>
    %27 = arith.truncf %24 : vector<8x128xf32> to vector<8x128xbf16>
    %cst_22 = arith.constant dense<0.000000e+00> : vector<8x128xf32>
    %28 = tpu.matmul %27, %25, %cst_22 {dimension_numbers = #tpu.dot_dimension_numbers<[1], [0], [0], [1], [0, 0, 1, 1], [], []>} : vector<8x128xbf16>, vector<128x128xbf16>, vector<8x128xf32> -> vector<8x128xf32>
    %29 = vector.broadcast %26 : vector<1x128xf32> to vector<8x128xf32>
    %30 = arith.addf %28, %29 : vector<8x128xf32>
    %cst_23 = arith.constant 0.000000e+00 : f32
    %31 = vector.broadcast %cst_23 : f32 to vector<8x128xf32>
    %32 = arith.maximumf %30, %31 : vector<8x128xf32>
    %c0_24 = arith.constant 0 : index
    %c0_25 = arith.constant 0 : index
    %33 = vector.load %arg10[%c0_24, %c0_25] : memref<128x128xbf16, #tpu.memory_space<vmem>>, vector<128x128xbf16>
    %c0_26 = arith.constant 0 : index
    %c0_27 = arith.constant 0 : index
    %34 = vector.load %arg11[%c0_26, %c0_27] : memref<1x128xf32, #tpu.memory_space<vmem>>, vector<1x128xf32>
    %35 = arith.truncf %32 : vector<8x128xf32> to vector<8x128xbf16>
    %cst_28 = arith.constant dense<0.000000e+00> : vector<8x128xf32>
    %36 = tpu.matmul %35, %33, %cst_28 {dimension_numbers = #tpu.dot_dimension_numbers<[1], [0], [0], [1], [0, 0, 1, 1], [], []>} : vector<8x128xbf16>, vector<128x128xbf16>, vector<8x128xf32> -> vector<8x128xf32>
    %37 = vector.broadcast %34 : vector<1x128xf32> to vector<8x128xf32>
    %38 = arith.addf %36, %37 : vector<8x128xf32>
    %cst_29 = arith.constant 0.000000e+00 : f32
    %39 = vector.broadcast %cst_29 : f32 to vector<8x128xf32>
    %40 = arith.maximumf %38, %39 : vector<8x128xf32>
    %c0_30 = arith.constant 0 : index
    %c0_31 = arith.constant 0 : index
    %41 = vector.load %arg12[%c0_30, %c0_31] : memref<128x128xbf16, #tpu.memory_space<vmem>>, vector<128x128xbf16>
    %c0_32 = arith.constant 0 : index
    %c0_33 = arith.constant 0 : index
    %42 = vector.load %arg13[%c0_32, %c0_33] : memref<1x128xf32, #tpu.memory_space<vmem>>, vector<1x128xf32>
    %43 = arith.truncf %40 : vector<8x128xf32> to vector<8x128xbf16>
    %cst_34 = arith.constant dense<0.000000e+00> : vector<8x128xf32>
    %44 = tpu.matmul %43, %41, %cst_34 {dimension_numbers = #tpu.dot_dimension_numbers<[1], [0], [0], [1], [0, 0, 1, 1], [], []>} : vector<8x128xbf16>, vector<128x128xbf16>, vector<8x128xf32> -> vector<8x128xf32>
    %45 = vector.broadcast %42 : vector<1x128xf32> to vector<8x128xf32>
    %46 = arith.addf %44, %45 : vector<8x128xf32>
    %cst_35 = arith.constant 0.000000e+00 : f32
    %47 = vector.broadcast %cst_35 : f32 to vector<8x128xf32>
    %48 = arith.maximumf %46, %47 : vector<8x128xf32>
    %c0_36 = arith.constant 0 : index
    %c0_37 = arith.constant 0 : index
    %49 = vector.load %arg14[%c0_36, %c0_37] : memref<128x128xbf16, #tpu.memory_space<vmem>>, vector<128x128xbf16>
    %c0_38 = arith.constant 0 : index
    %c0_39 = arith.constant 0 : index
    %50 = vector.load %arg15[%c0_38, %c0_39] : memref<1x128xf32, #tpu.memory_space<vmem>>, vector<1x128xf32>
    %51 = arith.truncf %48 : vector<8x128xf32> to vector<8x128xbf16>
    %cst_40 = arith.constant dense<0.000000e+00> : vector<8x128xf32>
    %52 = tpu.matmul %51, %49, %cst_40 {dimension_numbers = #tpu.dot_dimension_numbers<[1], [0], [0], [1], [0, 0, 1, 1], [], []>} : vector<8x128xbf16>, vector<128x128xbf16>, vector<8x128xf32> -> vector<8x128xf32>
    %53 = vector.broadcast %50 : vector<1x128xf32> to vector<8x128xf32>
    %54 = arith.addf %52, %53 : vector<8x128xf32>
    %cst_41 = arith.constant 0.000000e+00 : f32
    %55 = vector.broadcast %cst_41 : f32 to vector<8x128xf32>
    %56 = arith.maximumf %54, %55 : vector<8x128xf32>
    %c0_42 = arith.constant 0 : index
    %c0_43 = arith.constant 0 : index
    %57 = vector.load %arg16[%c0_42, %c0_43] : memref<128x256xbf16, #tpu.memory_space<vmem>>, vector<128x256xbf16>
    %c0_44 = arith.constant 0 : index
    %c0_45 = arith.constant 0 : index
    %58 = vector.load %arg17[%c0_44, %c0_45] : memref<1x256xf32, #tpu.memory_space<vmem>>, vector<1x256xf32>
    %59 = arith.truncf %56 : vector<8x128xf32> to vector<8x128xbf16>
    %cst_46 = arith.constant dense<0.000000e+00> : vector<8x256xf32>
    %60 = tpu.matmul %59, %57, %cst_46 {dimension_numbers = #tpu.dot_dimension_numbers<[1], [0], [0], [1], [0, 0, 1, 1], [], []>} : vector<8x128xbf16>, vector<128x256xbf16>, vector<8x256xf32> -> vector<8x256xf32>
    %61 = vector.broadcast %58 : vector<1x256xf32> to vector<8x256xf32>
    %62 = arith.addf %60, %61 : vector<8x256xf32>
    %cst_47 = arith.constant 0.000000e+00 : f32
    %63 = vector.broadcast %cst_47 : f32 to vector<8x256xf32>
    %64 = arith.maximumf %62, %63 : vector<8x256xf32>
    %c0_48 = arith.constant 0 : index
    %c0_49 = arith.constant 0 : index
    %65 = vector.load %arg18[%c0_48, %c0_49] : memref<256x512xbf16, #tpu.memory_space<vmem>>, vector<256x512xbf16>
    %c0_50 = arith.constant 0 : index
    %c0_51 = arith.constant 0 : index
    %66 = vector.load %arg19[%c0_50, %c0_51] : memref<1x512xf32, #tpu.memory_space<vmem>>, vector<1x512xf32>
    %67 = arith.truncf %64 : vector<8x256xf32> to vector<8x256xbf16>
    %cst_52 = arith.constant dense<0.000000e+00> : vector<8x512xf32>
    %68 = tpu.matmul %67, %65, %cst_52 {dimension_numbers = #tpu.dot_dimension_numbers<[1], [0], [0], [1], [0, 0, 1, 1], [], []>} : vector<8x256xbf16>, vector<256x512xbf16>, vector<8x512xf32> -> vector<8x512xf32>
    %69 = vector.broadcast %66 : vector<1x512xf32> to vector<8x512xf32>
    %70 = arith.addf %68, %69 : vector<8x512xf32>
    %cst_53 = arith.constant 0.000000e+00 : f32
    %71 = vector.broadcast %cst_53 : f32 to vector<8x512xf32>
    %72 = arith.maximumf %70, %71 : vector<8x512xf32>
    %c0_54 = arith.constant 0 : index
    %c0_55 = arith.constant 0 : index
    %73 = vector.load %arg20[%c0_54, %c0_55] : memref<512x256xbf16, #tpu.memory_space<vmem>>, vector<512x256xbf16>
    %c0_56 = arith.constant 0 : index
    %c0_57 = arith.constant 0 : index
    %74 = vector.load %arg21[%c0_56, %c0_57] : memref<1x256xf32, #tpu.memory_space<vmem>>, vector<1x256xf32>
    %75 = arith.truncf %72 : vector<8x512xf32> to vector<8x512xbf16>
    %cst_58 = arith.constant dense<0.000000e+00> : vector<8x256xf32>
    %76 = tpu.matmul %75, %73, %cst_58 {dimension_numbers = #tpu.dot_dimension_numbers<[1], [0], [0], [1], [0, 0, 1, 1], [], []>} : vector<8x512xbf16>, vector<512x256xbf16>, vector<8x256xf32> -> vector<8x256xf32>
    %77 = vector.broadcast %74 : vector<1x256xf32> to vector<8x256xf32>
    %78 = arith.addf %76, %77 : vector<8x256xf32>
    %cst_59 = arith.constant 0.000000e+00 : f32
    %79 = vector.broadcast %cst_59 : f32 to vector<8x256xf32>
    %80 = arith.maximumf %78, %79 : vector<8x256xf32>
    %c0_60 = arith.constant 0 : index
    %c0_61 = arith.constant 0 : index
    %81 = vector.load %arg22[%c0_60, %c0_61] : memref<8x256xf32, #tpu.memory_space<vmem>>, vector<8x256xf32>
    tpu.vector_store %arg22[%c0_60, %c0_61], %80 {strides = array<i32>} : memref<8x256xf32, #tpu.memory_space<vmem>>, vector<8x256xf32>,
    return
  }
  func.func @transform_0(%arg0: i32) -> (i32, i32) {
    %c0_i32 = arith.constant 0 : i32
    %c0_i32_0 = arith.constant 0 : i32
    return %arg0, %c0_i32 : i32, i32
  }
  func.func @transform_1(%arg0: i32) -> (i32, i32) {
    %c0_i32 = arith.constant 0 : i32
    %c0_i32_0 = arith.constant 0 : i32
    %c0_i32_1 = arith.constant 0 : i32
    return %c0_i32, %c0_i32_0 : i32, i32
  }
  func.func @transform_2(%arg0: i32) -> (i32, i32) {
    %c0_i32 = arith.constant 0 : i32
    %c0_i32_0 = arith.constant 0 : i32
    %c0_i32_1 = arith.constant 0 : i32
    return %c0_i32, %c0_i32_0 : i32, i32
  }
  func.func @transform_3(%arg0: i32) -> (i32, i32) {
    %c0_i32 = arith.constant 0 : i32
    %c0_i32_0 = arith.constant 0 : i32
    %c0_i32_1 = arith.constant 0 : i32
    return %c0_i32, %c0_i32_0 : i32, i32
  }
  func.func @transform_4(%arg0: i32) -> (i32, i32) {
    %c0_i32 = arith.constant 0 : i32
    %c0_i32_0 = arith.constant 0 : i32
    %c0_i32_1 = arith.constant 0 : i32
    return %c0_i32, %c0_i32_0 : i32, i32
  }
  func.func @transform_5(%arg0: i32) -> (i32, i32) {
    %c0_i32 = arith.constant 0 : i32
    %c0_i32_0 = arith.constant 0 : i32
    %c0_i32_1 = arith.constant 0 : i32
    return %c0_i32, %c0_i32_0 : i32, i32
  }
  func.func @transform_6(%arg0: i32) -> (i32, i32) {
    %c0_i32 = arith.constant 0 : i32
    %c0_i32_0 = arith.constant 0 : i32
    %c0_i32_1 = arith.constant 0 : i32
    return %c0_i32, %c0_i32_0 : i32, i32
  }
  func.func @transform_7(%arg0: i32) -> (i32, i32) {
    %c0_i32 = arith.constant 0 : i32
    %c0_i32_0 = arith.constant 0 : i32
    %c0_i32_1 = arith.constant 0 : i32
    return %c0_i32, %c0_i32_0 : i32, i32
  }
  func.func @transform_8(%arg0: i32) -> (i32, i32) {
    %c0_i32 = arith.constant 0 : i32
    %c0_i32_0 = arith.constant 0 : i32
    %c0_i32_1 = arith.constant 0 : i32
    return %c0_i32, %c0_i32_0 : i32, i32
  }
  func.func @transform_9(%arg0: i32) -> (i32, i32) {
    %c0_i32 = arith.constant 0 : i32
    %c0_i32_0 = arith.constant 0 : i32
    %c0_i32_1 = arith.constant 0 : i32
    return %c0_i32, %c0_i32_0 : i32, i32
  }
  func.func @transform_10(%arg0: i32) -> (i32, i32) {
    %c0_i32 = arith.constant 0 : i32
    %c0_i32_0 = arith.constant 0 : i32
    %c0_i32_1 = arith.constant 0 : i32
    return %c0_i32, %c0_i32_0 : i32, i32
  }
  func.func @transform_11(%arg0: i32) -> (i32, i32) {
    %c0_i32 = arith.constant 0 : i32
    %c0_i32_0 = arith.constant 0 : i32
    %c0_i32_1 = arith.constant 0 : i32
    return %c0_i32, %c0_i32_0 : i32, i32
  }
  func.func @transform_12(%arg0: i32) -> (i32, i32) {
    %c0_i32 = arith.constant 0 : i32
    %c0_i32_0 = arith.constant 0 : i32
    %c0_i32_1 = arith.constant 0 : i32
    return %c0_i32, %c0_i32_0 : i32, i32
  }
  func.func @transform_13(%arg0: i32) -> (i32, i32) {
    %c0_i32 = arith.constant 0 : i32
    %c0_i32_0 = arith.constant 0 : i32
    %c0_i32_1 = arith.constant 0 : i32
    return %c0_i32, %c0_i32_0 : i32, i32
  }
  func.func @transform_14(%arg0: i32) -> (i32, i32) {
    %c0_i32 = arith.constant 0 : i32
    %c0_i32_0 = arith.constant 0 : i32
    %c0_i32_1 = arith.constant 0 : i32
    return %c0_i32, %c0_i32_0 : i32, i32
  }
  func.func @transform_15(%arg0: i32) -> (i32, i32) {
    %c0_i32 = arith.constant 0 : i32
    %c0_i32_0 = arith.constant 0 : i32
    %c0_i32_1 = arith.constant 0 : i32
    return %c0_i32, %c0_i32_0 : i32, i32
  }
  func.func @transform_16(%arg0: i32) -> (i32, i32) {
    %c0_i32 = arith.constant 0 : i32
    %c0_i32_0 = arith.constant 0 : i32
    %c0_i32_1 = arith.constant 0 : i32
    return %c0_i32, %c0_i32_0 : i32, i32
  }
  func.func @transform_17(%arg0: i32) -> (i32, i32) {
    %c0_i32 = arith.constant 0 : i32
    %c0_i32_0 = arith.constant 0 : i32
    %c0_i32_1 = arith.constant 0 : i32
    return %c0_i32, %c0_i32_0 : i32, i32
  }
  func.func @transform_18(%arg0: i32) -> (i32, i32) {
    %c0_i32 = arith.constant 0 : i32
    %c0_i32_0 = arith.constant 0 : i32
    %c0_i32_1 = arith.constant 0 : i32
    return %c0_i32, %c0_i32_0 : i32, i32
  }
  func.func @transform_19(%arg0: i32) -> (i32, i32) {
    %c0_i32 = arith.constant 0 : i32
    %c0_i32_0 = arith.constant 0 : i32
    %c0_i32_1 = arith.constant 0 : i32
    return %c0_i32, %c0_i32_0 : i32, i32
  }
  func.func @transform_20(%arg0: i32) -> (i32, i32) {
    %c0_i32 = arith.constant 0 : i32
    %c0_i32_0 = arith.constant 0 : i32
    %c0_i32_1 = arith.constant 0 : i32
    return %c0_i32, %c0_i32_0 : i32, i32
  }
  func.func @transform_21(%arg0: i32) -> (i32, i32) {
    %c0_i32 = arith.constant 0 : i32
    %c0_i32_0 = arith.constant 0 : i32
    return %arg0, %c0_i32 : i32, i32
  }
}

</mosaic_0001>

<llo_original>
// kernel: conv_ae_forward.1
$region0: #{conv_ae_forward.1}
  #allocation0 [shape = 'u32[]', space=smem, size = 0x4, offset = 0x4, fixed_abs, tag = 'smem constant byte address 0x4 - core index']
  #allocation1 [shape = 'u32[144,128]{1,0:T(1,128)}', space=vmem, size = 0x12000, scoped, tag = 'internal scratch']
  %s0 = inlined_call_operand.vmem [shape: f32[16,256], index: 0, kind: input, shape index: {}]
  %s1 = inlined_call_operand.vmem [shape: bf16[256,512], index: 1, kind: input, shape index: {}]
  %s2 = inlined_call_operand.vmem [shape: f32[1,512], index: 2, kind: input, shape index: {}]
  %s3 = inlined_call_operand.vmem [shape: bf16[512,256], index: 3, kind: input, shape index: {}]
  %s4 = inlined_call_operand.vmem [shape: f32[1,256], index: 4, kind: input, shape index: {}]
  %s5 = inlined_call_operand.vmem [shape: bf16[256,128], index: 5, kind: input, shape index: {}]
  %s6 = inlined_call_operand.vmem [shape: f32[1,128], index: 6, kind: input, shape index: {}]
  %s7 = inlined_call_operand.vmem [shape: bf16[128,128], index: 7, kind: input, shape index: {}]
  %s8 = inlined_call_operand.vmem [shape: f32[1,128], index: 8, kind: input, shape index: {}]
  %s9 = inlined_call_operand.vmem [shape: bf16[128,128], index: 9, kind: input, shape index: {}]
  %s10 = inlined_call_operand.vmem [shape: f32[1,128], index: 10, kind: input, shape index: {}]
  %s11 = inlined_call_operand.vmem [shape: bf16[128,128], index: 11, kind: input, shape index: {}]
  %s12 = inlined_call_operand.vmem [shape: f32[1,128], index: 12, kind: input, shape index: {}]
  %s13 = inlined_call_operand.vmem [shape: bf16[128,128], index: 13, kind: input, shape index: {}]
  %s14 = inlined_call_operand.vmem [shape: f32[1,128], index: 14, kind: input, shape index: {}]
  %s15 = inlined_call_operand.vmem [shape: bf16[128,256], index: 15, kind: input, shape index: {}]
  %s16 = inlined_call_operand.vmem [shape: f32[1,256], index: 16, kind: input, shape index: {}]
  %s17 = inlined_call_operand.vmem [shape: bf16[256,512], index: 17, kind: input, shape index: {}]
  %s18 = inlined_call_operand.vmem [shape: f32[1,512], index: 18, kind: input, shape index: {}]
  %s19 = inlined_call_operand.vmem [shape: bf16[512,256], index: 19, kind: input, shape index: {}]
  %s20 = inlined_call_operand.vmem [shape: f32[1,256], index: 20, kind: input, shape index: {}]
  %s21 = inlined_call_operand.hbm [shape: f32[16,256], index: 21, kind: output, shape index: {}]
  %s22 = sld [smem:[#allocation0]]
  $region117: #{conv_ae_forward.1} parent=0
    _
  %s24 = ssub.s32 1, %s22
  %s25 = scalar_select 0, %s24, %s22
  $region1: #{conv_ae_forward.1} parent=0
    #allocation2 [shape = 'u8[16384]{0}', space=vmem, size = 0x4000, scoped, tag = 'output window, operand 0']
    #allocation3 [shape = 's32[2]{0}', space=sflag, size = 0x8, scoped, tag = 'scoped memory for conv_ae_forward.1']
    %26 = vsyncpa [#allocation3], 0
    %s27 = scalar_lea.sflag [#allocation3], 1
    %28 = vsyncpa %s27, 0
    loop: start=0, step=1, limit=4
    $region2: #{conv_ae_forward.1} parent=1 // loop_pre_header
      _
    $region3: #{conv_ae_forward.1} parent=1 // loop_header
      %s30 = sphi 0, %s34
      %p31 = scmp.ge.s32.totalorder %s30, 4
      %s40 = sphi 0, %s42
      %s43 = sphi 0, %s40
      %s44 = sphi 0, %s43
      %s60 = sphi 0, %s44
      %s64 = sphi 0, %s64
      %s66 = sphi 0, %s64
      %s67 = sphi 0, %s66
      %s81 = sphi 0, %s67
      %s85 = sphi 0, %s85
      %s87 = sphi 0, %s85
      %s88 = sphi 0, %s87
      %s102 = sphi 0, %s88
      %s106 = sphi 0, %s106
      %s108 = sphi 0, %s106
      %s109 = sphi 0, %s108
      %s123 = sphi 0, %s109
      %s127 = sphi 0, %s127
      %s129 = sphi 0, %s127
      %s130 = sphi 0, %s129
      %s144 = sphi 0, %s130
      %s148 = sphi 0, %s148
      %s150 = sphi 0, %s148
      %s151 = sphi 0, %s150
      %s165 = sphi 0, %s151
      %s169 = sphi 0, %s169
      %s171 = sphi 0, %s169
      %s172 = sphi 0, %s171
      %s186 = sphi 0, %s172
      %s190 = sphi 0, %s190
      %s192 = sphi 0, %s190
      %s193 = sphi 0, %s192
      %s207 = sphi 0, %s193
      %s211 = sphi 0, %s211
      %s213 = sphi 0, %s211
      %s214 = sphi 0, %s213
      %s228 = sphi 0, %s214
      %s232 = sphi 0, %s232
      %s234 = sphi 0, %s232
      %s235 = sphi 0, %s234
      %s249 = sphi 0, %s235
      %s253 = sphi 0, %s253
      %s255 = sphi 0, %s253
      %s256 = sphi 0, %s255
      %s270 = sphi 0, %s256
      %s274 = sphi 0, %s274
      %s276 = sphi 0, %s274
      %s277 = sphi 0, %s276
      %s291 = sphi 0, %s277
      %s295 = sphi 0, %s295
      %s297 = sphi 0, %s295
      %s298 = sphi 0, %s297
      %s312 = sphi 0, %s298
      %s316 = sphi 0, %s316
      %s318 = sphi 0, %s316
      %s319 = sphi 0, %s318
      %s333 = sphi 0, %s319
      %s337 = sphi 0, %s337
      %s339 = sphi 0, %s337
      %s340 = sphi 0, %s339
      %s354 = sphi 0, %s340
      %s358 = sphi 0, %s358
      %s360 = sphi 0, %s358
      %s361 = sphi 0, %s360
      %s375 = sphi 0, %s361
      %s379 = sphi 0, %s379
      %s381 = sphi 0, %s379
      %s382 = sphi 0, %s381
      %s396 = sphi 0, %s382
      %s400 = sphi 0, %s400
      %s402 = sphi 0, %s400
      %s403 = sphi 0, %s402
      %s417 = sphi 0, %s403
      %s421 = sphi 0, %s421
      %s423 = sphi 0, %s421
      %s424 = sphi 0, %s423
      %s438 = sphi 0, %s424
      %s442 = sphi 0, %s442
      %s444 = sphi 0, %s442
      %s445 = sphi 0, %s444
      %s459 = sphi 0, %s445
      %s463 = sphi 0, %s463
      %s465 = sphi 0, %s463
      %s466 = sphi 0, %s465
      %s480 = sphi 0, %s466
      %s486 = sphi 0, %s488
      %s489 = sphi 0, %s486
      %s490 = sphi 0, %s489
      %s506 = sphi 0, %s490
    $region4: #{conv_ae_forward.1} parent=1 // loop_header_branch
      %33 = sbr.rel (%p31) target = $region8
    $region5: #{conv_ae_forward.1} parent=1 // loop_body
      %s35 = ssub.s32 %s30, 1
      %s36 = ssub.s32 %s30, 2
      %s37 = sadd.s32 %s30, 1
      %s38 = ssub.s32 %s30, %s37
      %p39 = scmp.eq.s32.totalorder %s38, 0
      %s41 = sadd.s32 %s40, 1
      %s42 = scalar_select %p39, %s40, %s41
      %p45 = pneg %p39
      %p46 = scmp.eq.s32.totalorder %s30, 1
      %p47 = por %p45, %p46
      %p48 = scmp.ne.s32.totalorder %s40, %s43
      %p49 = scmp.eq.s32.totalorder %s30, 0
      %p50 = por %p48, %p49
      %p51 = scmp.ne.s32.totalorder %s40, %s43
      %p52 = scmp.eq.s32.totalorder %s35, 1
      %p53 = por %p51, %p52
      %p54 = scmp.ne.s32.totalorder %s43, %s44
      %p55 = scmp.eq.s32.totalorder %s35, 0
      %p56 = por %p54, %p55
      %p57 = scmp.ne.s32.totalorder %s43, %s44
      %p58 = scmp.eq.s32.totalorder %s36, 1
      %p59 = por %p57, %p58
      %p61 = scmp.ne.s32.totalorder %s44, %s60
      %p62 = scmp.eq.s32.totalorder %s36, 0
      %p63 = por %p61, %p62
      %s65 = sadd.s32 %s64, 1
      %p68 = scmp.eq.s32.totalorder %s30, 1
      %p69 = scmp.ne.s32.totalorder %s64, %s66
      %p70 = scmp.eq.s32.totalorder %s30, 0
      %p71 = por %p69, %p70
      %p72 = scmp.ne.s32.totalorder %s64, %s66
      %p73 = scmp.eq.s32.totalorder %s35, 1
      %p74 = por %p72, %p73
      %p75 = scmp.ne.s32.totalorder %s66, %s67
      %p76 = scmp.eq.s32.totalorder %s35, 0
      %p77 = por %p75, %p76
      %p78 = scmp.ne.s32.totalorder %s66, %s67
      %p79 = scmp.eq.s32.totalorder %s36, 1
      %p80 = por %p78, %p79
      %p82 = scmp.ne.s32.totalorder %s67, %s81
      %p83 = scmp.eq.s32.totalorder %s36, 0
      %p84 = por %p82, %p83
      %s86 = sadd.s32 %s85, 1
      %p89 = scmp.eq.s32.totalorder %s30, 1
      %p90 = scmp.ne.s32.totalorder %s85, %s87
      %p91 = scmp.eq.s32.totalorder %s30, 0
      %p92 = por %p90, %p91
      %p93 = scmp.ne.s32.totalorder %s85, %s87
      %p94 = scmp.eq.s32.totalorder %s35, 1
      %p95 = por %p93, %p94
      %p96 = scmp.ne.s32.totalorder %s87, %s88
      %p97 = scmp.eq.s32.totalorder %s35, 0
      %p98 = por %p96, %p97
      %p99 = scmp.ne.s32.totalorder %s87, %s88
      %p100 = scmp.eq.s32.totalorder %s36, 1
      %p101 = por %p99, %p100
      %p103 = scmp.ne.s32.totalorder %s88, %s102
      %p104 = scmp.eq.s32.totalorder %s36, 0
      %p105 = por %p103, %p104
      %s107 = sadd.s32 %s106, 1
      %p110 = scmp.eq.s32.totalorder %s30, 1
      %p111 = scmp.ne.s32.totalorder %s106, %s108
      %p112 = scmp.eq.s32.totalorder %s30, 0
      %p113 = por %p111, %p112
      %p114 = scmp.ne.s32.totalorder %s106, %s108
      %p115 = scmp.eq.s32.totalorder %s35, 1
      %p116 = por %p114, %p115
      %p117 = scmp.ne.s32.totalorder %s108, %s109
      %p118 = scmp.eq.s32.totalorder %s35, 0
      %p119 = por %p117, %p118
      %p120 = scmp.ne.s32.totalorder %s108, %s109
      %p121 = scmp.eq.s32.totalorder %s36, 1
      %p122 = por %p120, %p121
      %p124 = scmp.ne.s32.totalorder %s109, %s123
      %p125 = scmp.eq.s32.totalorder %s36, 0
      %p126 = por %p124, %p125
      %s128 = sadd.s32 %s127, 1
      %p131 = scmp.eq.s32.totalorder %s30, 1
      %p132 = scmp.ne.s32.totalorder %s127, %s129
      %p133 = scmp.eq.s32.totalorder %s30, 0
      %p134 = por %p132, %p133
      %p135 = scmp.ne.s32.totalorder %s127, %s129
      %p136 = scmp.eq.s32.totalorder %s35, 1
      %p137 = por %p135, %p136
      %p138 = scmp.ne.s32.totalorder %s129, %s130
      %p139 = scmp.eq.s32.totalorder %s35, 0
      %p140 = por %p138, %p139
      %p141 = scmp.ne.s32.totalorder %s129, %s130
      %p142 = scmp.eq.s32.totalorder %s36, 1
      %p143 = por %p141, %p142
      %p145 = scmp.ne.s32.totalorder %s130, %s144
      %p146 = scmp.eq.s32.totalorder %s36, 0
      %p147 = por %p145, %p146
      %s149 = sadd.s32 %s148, 1
      %p152 = scmp.eq.s32.totalorder %s30, 1
      %p153 = scmp.ne.s32.totalorder %s148, %s150
      %p154 = scmp.eq.s32.totalorder %s30, 0
      %p155 = por %p153, %p154
      %p156 = scmp.ne.s32.totalorder %s148, %s150
      %p157 = scmp.eq.s32.totalorder %s35, 1
      %p158 = por %p156, %p157
      %p159 = scmp.ne.s32.totalorder %s150, %s151
      %p160 = scmp.eq.s32.totalorder %s35, 0
      %p161 = por %p159, %p160
      %p162 = scmp.ne.s32.totalorder %s150, %s151
      %p163 = scmp.eq.s32.totalorder %s36, 1
      %p164 = por %p162, %p163
      %p166 = scmp.ne.s32.totalorder %s151, %s165
      %p167 = scmp.eq.s32.totalorder %s36, 0
      %p168 = por %p166, %p167
      %s170 = sadd.s32 %s169, 1
      %p173 = scmp.eq.s32.totalorder %s30, 1
      %p174 = scmp.ne.s32.totalorder %s169, %s171
      %p175 = scmp.eq.s32.totalorder %s30, 0
      %p176 = por %p174, %p175
      %p177 = scmp.ne.s32.totalorder %s169, %s171
      %p178 = scmp.eq.s32.totalorder %s35, 1
      %p179 = por %p177, %p178
      %p180 = scmp.ne.s32.totalorder %s171, %s172
      %p181 = scmp.eq.s32.totalorder %s35, 0
      %p182 = por %p180, %p181
      %p183 = scmp.ne.s32.totalorder %s171, %s172
      %p184 = scmp.eq.s32.totalorder %s36, 1
      %p185 = por %p183, %p184
      %p187 = scmp.ne.s32.totalorder %s172, %s186
      %p188 = scmp.eq.s32.totalorder %s36, 0
      %p189 = por %p187, %p188
      %s191 = sadd.s32 %s190, 1
      %p194 = scmp.eq.s32.totalorder %s30, 1
      %p195 = scmp.ne.s32.totalorder %s190, %s192
      %p196 = scmp.eq.s32.totalorder %s30, 0
      %p197 = por %p195, %p196
      %p198 = scmp.ne.s32.totalorder %s190, %s192
      %p199 = scmp.eq.s32.totalorder %s35, 1
      %p200 = por %p198, %p199
      %p201 = scmp.ne.s32.totalorder %s192, %s193
      %p202 = scmp.eq.s32.totalorder %s35, 0
      %p203 = por %p201, %p202
      %p204 = scmp.ne.s32.totalorder %s192, %s193
      %p205 = scmp.eq.s32.totalorder %s36, 1
      %p206 = por %p204, %p205
      %p208 = scmp.ne.s32.totalorder %s193, %s207
      %p209 = scmp.eq.s32.totalorder %s36, 0
      %p210 = por %p208, %p209
      %s212 = sadd.s32 %s211, 1
      %p215 = scmp.eq.s32.totalorder %s30, 1
      %p216 = scmp.ne.s32.totalorder %s211, %s213
      %p217 = scmp.eq.s32.totalorder %s30, 0
      %p218 = por %p216, %p217
      %p219 = scmp.ne.s32.totalorder %s211, %s213
      %p220 = scmp.eq.s32.totalorder %s35, 1
      %p221 = por %p219, %p220
      %p222 = scmp.ne.s32.totalorder %s213, %s214
      %p223 = scmp.eq.s32.totalorder %s35, 0
      %p224 = por %p222, %p223
      %p225 = scmp.ne.s32.totalorder %s213, %s214
      %p226 = scmp.eq.s32.totalorder %s36, 1
      %p227 = por %p225, %p226
      %p229 = scmp.ne.s32.totalorder %s214, %s228
      %p230 = scmp.eq.s32.totalorder %s36, 0
      %p231 = por %p229, %p230
      %s233 = sadd.s32 %s232, 1
      %p236 = scmp.eq.s32.totalorder %s30, 1
      %p237 = scmp.ne.s32.totalorder %s232, %s234
      %p238 = scmp.eq.s32.totalorder %s30, 0
      %p239 = por %p237, %p238
      %p240 = scmp.ne.s32.totalorder %s232, %s234
      %p241 = scmp.eq.s32.totalorder %s35, 1
      %p242 = por %p240, %p241
      %p243 = scmp.ne.s32.totalorder %s234, %s235
      %p244 = scmp.eq.s32.totalorder %s35, 0
      %p245 = por %p243, %p244
      %p246 = scmp.ne.s32.totalorder %s234, %s235
      %p247 = scmp.eq.s32.totalorder %s36, 1
      %p248 = por %p246, %p247
      %p250 = scmp.ne.s32.totalorder %s235, %s249
      %p251 = scmp.eq.s32.totalorder %s36, 0
      %p252 = por %p250, %p251
      %s254 = sadd.s32 %s253, 1
      %p257 = scmp.eq.s32.totalorder %s30, 1
      %p258 = scmp.ne.s32.totalorder %s253, %s255
      %p259 = scmp.eq.s32.totalorder %s30, 0
      %p260 = por %p258, %p259
      %p261 = scmp.ne.s32.totalorder %s253, %s255
      %p262 = scmp.eq.s32.totalorder %s35, 1
      %p263 = por %p261, %p262
      %p264 = scmp.ne.s32.totalorder %s255, %s256
      %p265 = scmp.eq.s32.totalorder %s35, 0
      %p266 = por %p264, %p265
      %p267 = scmp.ne.s32.totalorder %s255, %s256
      %p268 = scmp.eq.s32.totalorder %s36, 1
      %p269 = por %p267, %p268
      %p271 = scmp.ne.s32.totalorder %s256, %s270
      %p272 = scmp.eq.s32.totalorder %s36, 0
      %p273 = por %p271, %p272
      %s275 = sadd.s32 %s274, 1
      %p278 = scmp.eq.s32.totalorder %s30, 1
      %p279 = scmp.ne.s32.totalorder %s274, %s276
      %p280 = scmp.eq.s32.totalorder %s30, 0
      %p281 = por %p279, %p280
      %p282 = scmp.ne.s32.totalorder %s274, %s276
      %p283 = scmp.eq.s32.totalorder %s35, 1
      %p284 = por %p282, %p283
      %p285 = scmp.ne.s32.totalorder %s276, %s277
      %p286 = scmp.eq.s32.totalorder %s35, 0
      %p287 = por %p285, %p286
      %p288 = scmp.ne.s32.totalorder %s276, %s277
      %p289 = scmp.eq.s32.totalorder %s36, 1
      %p290 = por %p288, %p289
      %p292 = scmp.ne.s32.totalorder %s277, %s291
      %p293 = scmp.eq.s32.totalorder %s36, 0
      %p294 = por %p292, %p293
      %s296 = sadd.s32 %s295, 1
      %p299 = scmp.eq.s32.totalorder %s30, 1
      %p300 = scmp.ne.s32.totalorder %s295, %s297
      %p301 = scmp.eq.s32.totalorder %s30, 0
      %p302 = por %p300, %p301
      %p303 = scmp.ne.s32.totalorder %s295, %s297
      %p304 = scmp.eq.s32.totalorder %s35, 1
      %p305 = por %p303, %p304
      %p306 = scmp.ne.s32.totalorder %s297, %s298
      %p307 = scmp.eq.s32.totalorder %s35, 0
      %p308 = por %p306, %p307
      %p309 = scmp.ne.s32.totalorder %s297, %s298
      %p310 = scmp.eq.s32.totalorder %s36, 1
      %p311 = por %p309, %p310
      %p313 = scmp.ne.s32.totalorder %s298, %s312
      %p314 = scmp.eq.s32.totalorder %s36, 0
      %p315 = por %p313, %p314
      %s317 = sadd.s32 %s316, 1
      %p320 = scmp.eq.s32.totalorder %s30, 1
      %p321 = scmp.ne.s32.totalorder %s316, %s318
      %p322 = scmp.eq.s32.totalorder %s30, 0
      %p323 = por %p321, %p322
      %p324 = scmp.ne.s32.totalorder %s316, %s318
      %p325 = scmp.eq.s32.totalorder %s35, 1
      %p326 = por %p324, %p325
      %p327 = scmp.ne.s32.totalorder %s318, %s319
      %p328 = scmp.eq.s32.totalorder %s35, 0
      %p329 = por %p327, %p328
      %p330 = scmp.ne.s32.totalorder %s318, %s319
      %p331 = scmp.eq.s32.totalorder %s36, 1
      %p332 = por %p330, %p331
      %p334 = scmp.ne.s32.totalorder %s319, %s333
      %p335 = scmp.eq.s32.totalorder %s36, 0
      %p336 = por %p334, %p335
      %s338 = sadd.s32 %s337, 1
      %p341 = scmp.eq.s32.totalorder %s30, 1
      %p342 = scmp.ne.s32.totalorder %s337, %s339
      %p343 = scmp.eq.s32.totalorder %s30, 0
      %p344 = por %p342, %p343
      %p345 = scmp.ne.s32.totalorder %s337, %s339
      %p346 = scmp.eq.s32.totalorder %s35, 1
      %p347 = por %p345, %p346
      %p348 = scmp.ne.s32.totalorder %s339, %s340
      %p349 = scmp.eq.s32.totalorder %s35, 0
      %p350 = por %p348, %p349
      %p351 = scmp.ne.s32.totalorder %s339, %s340
      %p352 = scmp.eq.s32.totalorder %s36, 1
      %p353 = por %p351, %p352
      %p355 = scmp.ne.s32.totalorder %s340, %s354
      %p356 = scmp.eq.s32.totalorder %s36, 0
      %p357 = por %p355, %p356
      %s359 = sadd.s32 %s358, 1
      %p362 = scmp.eq.s32.totalorder %s30, 1
      %p363 = scmp.ne.s32.totalorder %s358, %s360
      %p364 = scmp.eq.s32.totalorder %s30, 0
      %p365 = por %p363, %p364
      %p366 = scmp.ne.s32.totalorder %s358, %s360
      %p367 = scmp.eq.s32.totalorder %s35, 1
      %p368 = por %p366, %p367
      %p369 = scmp.ne.s32.totalorder %s360, %s361
      %p370 = scmp.eq.s32.totalorder %s35, 0
      %p371 = por %p369, %p370
      %p372 = scmp.ne.s32.totalorder %s360, %s361
      %p373 = scmp.eq.s32.totalorder %s36, 1
      %p374 = por %p372, %p373
      %p376 = scmp.ne.s32.totalorder %s361, %s375
      %p377 = scmp.eq.s32.totalorder %s36, 0
      %p378 = por %p376, %p377
      %s380 = sadd.s32 %s379, 1
      %p383 = scmp.eq.s32.totalorder %s30, 1
      %p384 = scmp.ne.s32.totalorder %s379, %s381
      %p385 = scmp.eq.s32.totalorder %s30, 0
      %p386 = por %p384, %p385
      %p387 = scmp.ne.s32.totalorder %s379, %s381
      %p388 = scmp.eq.s32.totalorder %s35, 1
      %p389 = por %p387, %p388
      %p390 = scmp.ne.s32.totalorder %s381, %s382
      %p391 = scmp.eq.s32.totalorder %s35, 0
      %p392 = por %p390, %p391
      %p393 = scmp.ne.s32.totalorder %s381, %s382
      %p394 = scmp.eq.s32.totalorder %s36, 1
      %p395 = por %p393, %p394
      %p397 = scmp.ne.s32.totalorder %s382, %s396
      %p398 = scmp.eq.s32.totalorder %s36, 0
      %p399 = por %p397, %p398
      %s401 = sadd.s32 %s400, 1
      %p404 = scmp.eq.s32.totalorder %s30, 1
      %p405 = scmp.ne.s32.totalorder %s400, %s402
      %p406 = scmp.eq.s32.totalorder %s30, 0
      %p407 = por %p405, %p406
      %p408 = scmp.ne.s32.totalorder %s400, %s402
      %p409 = scmp.eq.s32.totalorder %s35, 1
      %p410 = por %p408, %p409
      %p411 = scmp.ne.s32.totalorder %s402, %s403
      %p412 = scmp.eq.s32.totalorder %s35, 0
      %p413 = por %p411, %p412
      %p414 = scmp.ne.s32.totalorder %s402, %s403
      %p415 = scmp.eq.s32.totalorder %s36, 1
      %p416 = por %p414, %p415
      %p418 = scmp.ne.s32.totalorder %s403, %s417
      %p419 = scmp.eq.s32.totalorder %s36, 0
      %p420 = por %p418, %p419
      %s422 = sadd.s32 %s421, 1
      %p425 = scmp.eq.s32.totalorder %s30, 1
      %p426 = scmp.ne.s32.totalorder %s421, %s423
      %p427 = scmp.eq.s32.totalorder %s30, 0
      %p428 = por %p426, %p427
      %p429 = scmp.ne.s32.totalorder %s421, %s423
      %p430 = scmp.eq.s32.totalorder %s35, 1
      %p431 = por %p429, %p430
      %p432 = scmp.ne.s32.totalorder %s423, %s424
      %p433 = scmp.eq.s32.totalorder %s35, 0
      %p434 = por %p432, %p433
      %p435 = scmp.ne.s32.totalorder %s423, %s424
      %p436 = scmp.eq.s32.totalorder %s36, 1
      %p437 = por %p435, %p436
      %p439 = scmp.ne.s32.totalorder %s424, %s438
      %p440 = scmp.eq.s32.totalorder %s36, 0
      %p441 = por %p439, %p440
      %s443 = sadd.s32 %s442, 1
      %p446 = scmp.eq.s32.totalorder %s30, 1
      %p447 = scmp.ne.s32.totalorder %s442, %s444
      %p448 = scmp.eq.s32.totalorder %s30, 0
      %p449 = por %p447, %p448
      %p450 = scmp.ne.s32.totalorder %s442, %s444
      %p451 = scmp.eq.s32.totalorder %s35, 1
      %p452 = por %p450, %p451
      %p453 = scmp.ne.s32.totalorder %s444, %s445
      %p454 = scmp.eq.s32.totalorder %s35, 0
      %p455 = por %p453, %p454
      %p456 = scmp.ne.s32.totalorder %s444, %s445
      %p457 = scmp.eq.s32.totalorder %s36, 1
      %p458 = por %p456, %p457
      %p460 = scmp.ne.s32.totalorder %s445, %s459
      %p461 = scmp.eq.s32.totalorder %s36, 0
      %p462 = por %p460, %p461
      %s464 = sadd.s32 %s463, 1
      %p467 = scmp.eq.s32.totalorder %s30, 1
      %p468 = scmp.ne.s32.totalorder %s463, %s465
      %p469 = scmp.eq.s32.totalorder %s30, 0
      %p470 = por %p468, %p469
      %p471 = scmp.ne.s32.totalorder %s463, %s465
      %p472 = scmp.eq.s32.totalorder %s35, 1
      %p473 = por %p471, %p472
      %p474 = scmp.ne.s32.totalorder %s465, %s466
      %p475 = scmp.eq.s32.totalorder %s35, 0
      %p476 = por %p474, %p475
      %p477 = scmp.ne.s32.totalorder %s465, %s466
      %p478 = scmp.eq.s32.totalorder %s36, 1
      %p479 = por %p477, %p478
      %p481 = scmp.ne.s32.totalorder %s466, %s480
      %p482 = scmp.eq.s32.totalorder %s36, 0
      %p483 = por %p481, %p482
      %s484 = ssub.s32 %s30, %s37
      %p485 = scmp.eq.s32.totalorder %s484, 0
      %s487 = sadd.s32 %s486, 1
      %s488 = scalar_select %p485, %s486, %s487
      %p491 = pneg %p485
      %p492 = scmp.eq.s32.totalorder %s30, 1
      %p493 = por %p491, %p492
      %p494 = scmp.ne.s32.totalorder %s486, %s489
      %p495 = scmp.eq.s32.totalorder %s30, 0
      %p496 = por %p494, %p495
      %p497 = scmp.ne.s32.totalorder %s486, %s489
      %p498 = scmp.eq.s32.totalorder %s35, 1
      %p499 = por %p497, %p498
      %p500 = scmp.ne.s32.totalorder %s489, %s490
      %p501 = scmp.eq.s32.totalorder %s35, 0
      %p502 = por %p500, %p501
      %p503 = scmp.ne.s32.totalorder %s489, %s490
      %p504 = scmp.eq.s32.totalorder %s36, 1
      %p505 = por %p503, %p504
      %p507 = scmp.ne.s32.totalorder %s490, %s506
      %p508 = scmp.eq.s32.totalorder %s36, 0
      %p509 = por %p507, %p508
      %p510 = scmp.le.s32.totalorder 1, %s30
      %p511 = scmp.lt.s32.totalorder %s30, 3
      %p512 = pnand %p510, %p511
      %p513 = pneg %p512
      // Predicated region
      $region9: #{conv_ae_forward.1} parent=5 // pred_check
        _
      $region10: #{conv_ae_forward.1} parent=5 // pred_check_branch
        %515 = sbr.rel (%p512) target = $region12
      $region11: #{conv_ae_forward.1} parent=5 // pred_region
        %s516 = ssub.s32 %s30, 1
        // Predicated region
        $region13: #{conv_ae_forward.1} parent=11 // pred_check
          %p517 = pneg %p77
        $region14: #{conv_ae_forward.1} parent=11 // pred_check_branch
          %519 = sbr.rel (%p517) target = $region16
        $region15: #{conv_ae_forward.1} parent=11 // pred_region
          _
        $region16: #{conv_ae_forward.1} parent=11 // pred_fallthru
          _
        // Predicated region
        $region17: #{conv_ae_forward.1} parent=11 // pred_check
          %p520 = pneg %p98
        $region18: #{conv_ae_forward.1} parent=11 // pred_check_branch
          %522 = sbr.rel (%p520) target = $region20
        $region19: #{conv_ae_forward.1} parent=11 // pred_region
          _
        $region20: #{conv_ae_forward.1} parent=11 // pred_fallthru
          _
        // Predicated region
        $region21: #{conv_ae_forward.1} parent=11 // pred_check
          %p523 = pneg %p119
        $region22: #{conv_ae_forward.1} parent=11 // pred_check_branch
          %525 = sbr.rel (%p523) target = $region24
        $region23: #{conv_ae_forward.1} parent=11 // pred_region
          _
        $region24: #{conv_ae_forward.1} parent=11 // pred_fallthru
          _
        // Predicated region
        $region25: #{conv_ae_forward.1} parent=11 // pred_check
          %p526 = pneg %p140
        $region26: #{conv_ae_forward.1} parent=11 // pred_check_branch
          %528 = sbr.rel (%p526) target = $region28
        $region27: #{conv_ae_forward.1} parent=11 // pred_region
          _
        $region28: #{conv_ae_forward.1} parent=11 // pred_fallthru
          _
        // Predicated region
        $region29: #{conv_ae_forward.1} parent=11 // pred_check
          %p529 = pneg %p161
        $region30: #{conv_ae_forward.1} parent=11 // pred_check_branch
          %531 = sbr.rel (%p529) target = $region32
        $region31: #{conv_ae_forward.1} parent=11 // pred_region
          _
        $region32: #{conv_ae_forward.1} parent=11 // pred_fallthru
          _
        // Predicated region
        $region33: #{conv_ae_forward.1} parent=11 // pred_check
          %p532 = pneg %p182
        $region34: #{conv_ae_forward.1} parent=11 // pred_check_branch
          %534 = sbr.rel (%p532) target = $region36
        $region35: #{conv_ae_forward.1} parent=11 // pred_region
          _
        $region36: #{conv_ae_forward.1} parent=11 // pred_fallthru
          _
        // Predicated region
        $region37: #{conv_ae_forward.1} parent=11 // pred_check
          %p535 = pneg %p203
        $region38: #{conv_ae_forward.1} parent=11 // pred_check_branch
          %537 = sbr.rel (%p535) target = $region40
        $region39: #{conv_ae_forward.1} parent=11 // pred_region
          _
        $region40: #{conv_ae_forward.1} parent=11 // pred_fallthru
          _
        // Predicated region
        $region41: #{conv_ae_forward.1} parent=11 // pred_check
          %p538 = pneg %p224
        $region42: #{conv_ae_forward.1} parent=11 // pred_check_branch
          %540 = sbr.rel (%p538) target = $region44
        $region43: #{conv_ae_forward.1} parent=11 // pred_region
          _
        $region44: #{conv_ae_forward.1} parent=11 // pred_fallthru
          _
        // Predicated region
        $region45: #{conv_ae_forward.1} parent=11 // pred_check
          %p541 = pneg %p245
        $region46: #{conv_ae_forward.1} parent=11 // pred_check_branch
          %543 = sbr.rel (%p541) target = $region48
        $region47: #{conv_ae_forward.1} parent=11 // pred_region
          _
        $region48: #{conv_ae_forward.1} parent=11 // pred_fallthru
          _
        // Predicated region
        $region49: #{conv_ae_forward.1} parent=11 // pred_check
          %p544 = pneg %p266
        $region50: #{conv_ae_forward.1} parent=11 // pred_check_branch
          %546 = sbr.rel (%p544) target = $region52
        $region51: #{conv_ae_forward.1} parent=11 // pred_region
          _
        $region52: #{conv_ae_forward.1} parent=11 // pred_fallthru
          _
        // Predicated region
        $region53: #{conv_ae_forward.1} parent=11 // pred_check
          %p547 = pneg %p287
        $region54: #{conv_ae_forward.1} parent=11 // pred_check_branch
          %549 = sbr.rel (%p547) target = $region56
        $region55: #{conv_ae_forward.1} parent=11 // pred_region
          _
        $region56: #{conv_ae_forward.1} parent=11 // pred_fallthru
          _
        // Predicated region
        $region57: #{conv_ae_forward.1} parent=11 // pred_check
          %p550 = pneg %p308
        $region58: #{conv_ae_forward.1} parent=11 // pred_check_branch
          %552 = sbr.rel (%p550) target = $region60
        $region59: #{conv_ae_forward.1} parent=11 // pred_region
          _
        $region60: #{conv_ae_forward.1} parent=11 // pred_fallthru
          _
        // Predicated region
        $region61: #{conv_ae_forward.1} parent=11 // pred_check
          %p553 = pneg %p329
        $region62: #{conv_ae_forward.1} parent=11 // pred_check_branch
          %555 = sbr.rel (%p553) target = $region64
        $region63: #{conv_ae_forward.1} parent=11 // pred_region
          _
        $region64: #{conv_ae_forward.1} parent=11 // pred_fallthru
          _
        // Predicated region
        $region65: #{conv_ae_forward.1} parent=11 // pred_check
          %p556 = pneg %p350
        $region66: #{conv_ae_forward.1} parent=11 // pred_check_branch
          %558 = sbr.rel (%p556) target = $region68
        $region67: #{conv_ae_forward.1} parent=11 // pred_region
          _
        $region68: #{conv_ae_forward.1} parent=11 // pred_fallthru
          _
        // Predicated region
        $region69: #{conv_ae_forward.1} parent=11 // pred_check
          %p559 = pneg %p371
        $region70: #{conv_ae_forward.1} parent=11 // pred_check_branch
          %561 = sbr.rel (%p559) target = $region72
        $region71: #{conv_ae_forward.1} parent=11 // pred_region
          _
        $region72: #{conv_ae_forward.1} parent=11 // pred_fallthru
          _
        // Predicated region
        $region73: #{conv_ae_forward.1} parent=11 // pred_check
          %p562 = pneg %p392
        $region74: #{conv_ae_forward.1} parent=11 // pred_check_branch
          %564 = sbr.rel (%p562) target = $region76
        $region75: #{conv_ae_forward.1} parent=11 // pred_region
          _
        $region76: #{conv_ae_forward.1} parent=11 // pred_fallthru
          _
        // Predicated region
        $region77: #{conv_ae_forward.1} parent=11 // pred_check
          %p565 = pneg %p413
        $region78: #{conv_ae_forward.1} parent=11 // pred_check_branch
          %567 = sbr.rel (%p565) target = $region80
        $region79: #{conv_ae_forward.1} parent=11 // pred_region
          _
        $region80: #{conv_ae_forward.1} parent=11 // pred_fallthru
          _
        // Predicated region
        $region81: #{conv_ae_forward.1} parent=11 // pred_check
          %p568 = pneg %p434
        $region82: #{conv_ae_forward.1} parent=11 // pred_check_branch
          %570 = sbr.rel (%p568) target = $region84
        $region83: #{conv_ae_forward.1} parent=11 // pred_region
          _
        $region84: #{conv_ae_forward.1} parent=11 // pred_fallthru
          _
        // Predicated region
        $region85: #{conv_ae_forward.1} parent=11 // pred_check
          %p571 = pneg %p455
        $region86: #{conv_ae_forward.1} parent=11 // pred_check_branch
          %573 = sbr.rel (%p571) target = $region88
        $region87: #{conv_ae_forward.1} parent=11 // pred_region
          _
        $region88: #{conv_ae_forward.1} parent=11 // pred_fallthru
          _
        // Predicated region
        $region89: #{conv_ae_forward.1} parent=11 // pred_check
          %p574 = pneg %p476
        $region90: #{conv_ae_forward.1} parent=11 // pred_check_branch
          %576 = sbr.rel (%p574) target = $region92
        $region91: #{conv_ae_forward.1} parent=11 // pred_region
          _
        $region92: #{conv_ae_forward.1} parent=11 // pred_fallthru
          _
      $region12: #{conv_ae_forward.1} parent=5 // pred_fallthru
        _
      %p577 = scmp.lt.s32.totalorder %s30, 2
      // Predicated region
      $region93: #{conv_ae_forward.1} parent=5 // pred_check
        %p578 = pneg %p577
      $region94: #{conv_ae_forward.1} parent=5 // pred_check_branch
        %580 = sbr.rel (%p578) target = $region96
      $region95: #{conv_ae_forward.1} parent=5 // pred_region
        // Predicated region
        $region97: #{conv_ae_forward.1} parent=95 // pred_check
          %p581 = pneg %p50
        $region98: #{conv_ae_forward.1} parent=95 // pred_check_branch
          %583 = sbr.rel (%p581) target = $region100
        $region99: #{conv_ae_forward.1} parent=95 // pred_region
          %p584 = scmp.lt.s32.totalorder %s30, 1
          %s585 = scalar_select %p584, %s30, 1
          %s586 = smul.addr %s585, 2
          %s587 = smul.addr %s586, 8
          %s588 = scalar_lea.vmem %s0, %s587
        $region100: #{conv_ae_forward.1} parent=95 // pred_fallthru
          _
      $region96: #{conv_ae_forward.1} parent=5 // pred_fallthru
        _
      %p589 = scmp.le.s32.totalorder 1, %s30
      %p590 = scmp.lt.s32.totalorder %s30, 3
      %p591 = pnand %p589, %p590
      %p592 = pneg %p591
      // Predicated region
      $region101: #{conv_ae_forward.1} parent=5 // pred_check
        _
      $region102: #{conv_ae_forward.1} parent=5 // pred_check_branch
        %594 = sbr.rel (%p591) target = $region104
      $region103: #{conv_ae_forward.1} parent=5 // pred_region
        %s595 = ssub.s32 %s30, 1
        %p596 = scmp.lt.s32.totalorder %s35, 1
        %s597 = scalar_select %p596, %s35, 1
        %s598 = smul.addr %s597, 2
        %s599 = smul.addr %s598, 8
        %s600 = scalar_lea.vmem %s0, %s599
        %p601 = pneg %p56
        %p602 = pneg %p53
        %p603 = pneg %p77
        %p604 = pneg %p74
        %p605 = pneg %p98
        %p606 = pneg %p95
        %p607 = pneg %p119
        %p608 = pneg %p116
        %p609 = pneg %p140
        %p610 = pneg %p137
        %p611 = pneg %p161
        %p612 = pneg %p158
        %p613 = pneg %p182
        %p614 = pneg %p179
        %p615 = pneg %p203
        %p616 = pneg %p200
        %p617 = pneg %p224
        %p618 = pneg %p221
        %p619 = pneg %p245
        %p620 = pneg %p242
        %p621 = pneg %p266
        %p622 = pneg %p263
        %p623 = pneg %p287
        %p624 = pneg %p284
        %p625 = pneg %p308
        %p626 = pneg %p305
        %p627 = pneg %p329
        %p628 = pneg %p326
        %p629 = pneg %p350
        %p630 = pneg %p347
        %p631 = pneg %p371
        %p632 = pneg %p368
        %p633 = pneg %p392
        %p634 = pneg %p389
        %p635 = pneg %p413
        %p636 = pneg %p410
        %p637 = pneg %p434
        %p638 = pneg %p431
        %p639 = pneg %p455
        %p640 = pneg %p452
        %p641 = pneg %p476
        %p642 = pneg %p473
        %p643 = pneg %p502
        %p644 = pneg %p499
        %s645 = sand.u32 %s489, 1
        %s646 = scalar_lea.sflag [#allocation3], %s645
        %s647 = sand.u32 %s489, 1
        %s648 = smul.addr %s647, 16
        %s649 = scalar_lea.vmem [#allocation2], %s648
        %p650 = scmp.lt.s32.totalorder %s35, 1
        %s651 = scalar_select %p650, %s35, 1
        %s652 = smul.addr %s651, 2
        %s653 = smul.addr %s652, 8
        %s654 = scalar_lea.vmem %s0, %s653
        %v656 = vld [vmem:[%s654] sm:$0xff]
        %v657 = vld [vmem:[%s654 + $0x8] sm:$0xff]
        %v658 = vld [vmem:[%s1] sm:$0xff]
        %v659 = vld [vmem:[%s1 + $0x8] sm:$0xff]
        %v660 = vld [vmem:[%s1 + $0x10] sm:$0xff]
        %v661 = vld [vmem:[%s1 + $0x18] sm:$0xff]
        %v662 = vld [vmem:[%s1 + $0x20] sm:$0xff]
        %v663 = vld [vmem:[%s1 + $0x28] sm:$0xff]
        %v664 = vld [vmem:[%s1 + $0x30] sm:$0xff]
        %v665 = vld [vmem:[%s1 + $0x38] sm:$0xff]
        %v666 = vld [vmem:[%s1 + $0x40] sm:$0xff]
        %v667 = vld [vmem:[%s1 + $0x48] sm:$0xff]
        %v668 = vld [vmem:[%s1 + $0x50] sm:$0xff]
        %v669 = vld [vmem:[%s1 + $0x58] sm:$0xff]
        %v670 = vld [vmem:[%s1 + $0x60] sm:$0xff]
        %v671 = vld [vmem:[%s1 + $0x68] sm:$0xff]
        %v672 = vld [vmem:[%s1 + $0x70] sm:$0xff]
        %v673 = vld [vmem:[%s1 + $0x78] sm:$0xff]
        %v674 = vld [vmem:[%s1 + $0x80] sm:$0xff]
        %v675 = vld [vmem:[%s1 + $0x88] sm:$0xff]
        %v676 = vld [vmem:[%s1 + $0x90] sm:$0xff]
        %v677 = vld [vmem:[%s1 + $0x98] sm:$0xff]
        %v678 = vld [vmem:[%s1 + $0xa0] sm:$0xff]
        %v679 = vld [vmem:[%s1 + $0xa8] sm:$0xff]
        %v680 = vld [vmem:[%s1 + $0xb0] sm:$0xff]
        %v681 = vld [vmem:[%s1 + $0xb8] sm:$0xff]
        %v682 = vld [vmem:[%s1 + $0xc0] sm:$0xff]
        %v683 = vld [vmem:[%s1 + $0xc8] sm:$0xff]
        %v684 = vld [vmem:[%s1 + $0xd0] sm:$0xff]
        %v685 = vld [vmem:[%s1 + $0xd8] sm:$0xff]
        %v686 = vld [vmem:[%s1 + $0xe0] sm:$0xff]
        %v687 = vld [vmem:[%s1 + $0xe8] sm:$0xff]
        %v688 = vld [vmem:[%s1 + $0xf0] sm:$0xff]
        %v689 = vld [vmem:[%s1 + $0xf8] sm:$0xff]
        %v690 = vld [vmem:[%s1 + $0x100] sm:$0xff]
        %v691 = vld [vmem:[%s1 + $0x108] sm:$0xff]
        %v692 = vld [vmem:[%s1 + $0x110] sm:$0xff]
        %v693 = vld [vmem:[%s1 + $0x118] sm:$0xff]
        %v694 = vld [vmem:[%s1 + $0x120] sm:$0xff]
        %v695 = vld [vmem:[%s1 + $0x128] sm:$0xff]
        %v696 = vld [vmem:[%s1 + $0x130] sm:$0xff]
        %v697 = vld [vmem:[%s1 + $0x138] sm:$0xff]
        %v698 = vld [vmem:[%s1 + $0x140] sm:$0xff]
        %v699 = vld [vmem:[%s1 + $0x148] sm:$0xff]
        %v700 = vld [vmem:[%s1 + $0x150] sm:$0xff]
        %v701 = vld [vmem:[%s1 + $0x158] sm:$0xff]
        %v702 = vld [vmem:[%s1 + $0x160] sm:$0xff]
        %v703 = vld [vmem:[%s1 + $0x168] sm:$0xff]
        %v704 = vld [vmem:[%s1 + $0x170] sm:$0xff]
        %v705 = vld [vmem:[%s1 + $0x178] sm:$0xff]
        %v706 = vld [vmem:[%s1 + $0x180] sm:$0xff]
        %v707 = vld [vmem:[%s1 + $0x188] sm:$0xff]
        %v708 = vld [vmem:[%s1 + $0x190] sm:$0xff]
        %v709 = vld [vmem:[%s1 + $0x198] sm:$0xff]
        %v710 = vld [vmem:[%s1 + $0x1a0] sm:$0xff]
        %v711 = vld [vmem:[%s1 + $0x1a8] sm:$0xff]
        %v712 = vld [vmem:[%s1 + $0x1b0] sm:$0xff]
        %v713 = vld [vmem:[%s1 + $0x1b8] sm:$0xff]
        %v714 = vld [vmem:[%s1 + $0x1c0] sm:$0xff]
        %v715 = vld [vmem:[%s1 + $0x1c8] sm:$0xff]
        %v716 = vld [vmem:[%s1 + $0x1d0] sm:$0xff]
        %v717 = vld [vmem:[%s1 + $0x1d8] sm:$0xff]
        %v718 = vld [vmem:[%s1 + $0x1e0] sm:$0xff]
        %v719 = vld [vmem:[%s1 + $0x1e8] sm:$0xff]
        %v720 = vld [vmem:[%s1 + $0x1f0] sm:$0xff]
        %v721 = vld [vmem:[%s1 + $0x1f8] sm:$0xff]
        %v722 = vld [vmem:[%s2] sm:$0xf]
        %v723 = vpack.c.bf16 %v656, %v656
        %v724 = vpack.c.bf16 %v657, %v657
        %v726 = vlaneseq
        %v727 = vshrl.u32 %v726, 7
        %v728 = vsub.s32 0, %v727
        %v729 = vrot.slane %v722, %v728
        %v730 = vlaneseq
        %v731 = vshrl.u32 %v730, 7
        %v732 = vsub.s32 1, %v731
        %v733 = vrot.slane %v722, %v732
        %v734 = vlaneseq
        %v735 = vshrl.u32 %v734, 7
        %v736 = vsub.s32 2, %v735
        %v737 = vrot.slane %v722, %v736
        %v738 = vlaneseq
        %v739 = vshrl.u32 %v738, 7
        %v740 = vsub.s32 3, %v739
        %v741 = vrot.slane %v722, %v740
        %v810 = vunpack.c.l.b16 %v658
        %v811 = vunpack.c.h.b16 %v658
        %v812 = vunpack.c.l.b16 %v659
        %v813 = vunpack.c.h.b16 %v659
        %v814 = vunpack.c.l.b16 %v660
        %v815 = vunpack.c.h.b16 %v660
        %v816 = vunpack.c.l.b16 %v661
        %v817 = vunpack.c.h.b16 %v661
        %v818 = vunpack.c.l.b16 %v662
        %v819 = vunpack.c.h.b16 %v662
        %v820 = vunpack.c.l.b16 %v663
        %v821 = vunpack.c.h.b16 %v663
        %v822 = vunpack.c.l.b16 %v664
        %v823 = vunpack.c.h.b16 %v664
        %v824 = vunpack.c.l.b16 %v665
        %v825 = vunpack.c.h.b16 %v665
        %v826 = vunpack.c.l.b16 %v666
        %v827 = vunpack.c.h.b16 %v666
        %v828 = vunpack.c.l.b16 %v667
        %v829 = vunpack.c.h.b16 %v667
        %v830 = vunpack.c.l.b16 %v668
        %v831 = vunpack.c.h.b16 %v668
        %v832 = vunpack.c.l.b16 %v669
        %v833 = vunpack.c.h.b16 %v669
        %v834 = vunpack.c.l.b16 %v670
        %v835 = vunpack.c.h.b16 %v670
        %v836 = vunpack.c.l.b16 %v671
        %v837 = vunpack.c.h.b16 %v671
        %v838 = vunpack.c.l.b16 %v672
        %v839 = vunpack.c.h.b16 %v672
        %v840 = vunpack.c.l.b16 %v673
        %v841 = vunpack.c.h.b16 %v673
        %v842 = vunpack.c.l.b16 %v674
        %v843 = vunpack.c.h.b16 %v674
        %v844 = vunpack.c.l.b16 %v675
        %v845 = vunpack.c.h.b16 %v675
        %v846 = vunpack.c.l.b16 %v676
        %v847 = vunpack.c.h.b16 %v676
        %v848 = vunpack.c.l.b16 %v677
        %v849 = vunpack.c.h.b16 %v677
        %v850 = vunpack.c.l.b16 %v678
        %v851 = vunpack.c.h.b16 %v678
        %v852 = vunpack.c.l.b16 %v679
        %v853 = vunpack.c.h.b16 %v679
        %v854 = vunpack.c.l.b16 %v680
        %v855 = vunpack.c.h.b16 %v680
        %v856 = vunpack.c.l.b16 %v681
        %v857 = vunpack.c.h.b16 %v681
        %v858 = vunpack.c.l.b16 %v682
        %v859 = vunpack.c.h.b16 %v682
        %v860 = vunpack.c.l.b16 %v683
        %v861 = vunpack.c.h.b16 %v683
        %v862 = vunpack.c.l.b16 %v684
        %v863 = vunpack.c.h.b16 %v684
        %v864 = vunpack.c.l.b16 %v685
        %v865 = vunpack.c.h.b16 %v685
        %v866 = vunpack.c.l.b16 %v686
        %v867 = vunpack.c.h.b16 %v686
        %v868 = vunpack.c.l.b16 %v687
        %v869 = vunpack.c.h.b16 %v687
        %v870 = vunpack.c.l.b16 %v688
        %v871 = vunpack.c.h.b16 %v688
        %v872 = vunpack.c.l.b16 %v689
        %v873 = vunpack.c.h.b16 %v689
        %v874 = vunpack.c.l.b16 %v690
        %v875 = vunpack.c.h.b16 %v690
        %v876 = vunpack.c.l.b16 %v691
        %v877 = vunpack.c.h.b16 %v691
        %v878 = vunpack.c.l.b16 %v692
        %v879 = vunpack.c.h.b16 %v692
        %v880 = vunpack.c.l.b16 %v693
        %v881 = vunpack.c.h.b16 %v693
        %v882 = vunpack.c.l.b16 %v694
        %v883 = vunpack.c.h.b16 %v694
        %v884 = vunpack.c.l.b16 %v695
        %v885 = vunpack.c.h.b16 %v695
        %v886 = vunpack.c.l.b16 %v696
        %v887 = vunpack.c.h.b16 %v696
        %v888 = vunpack.c.l.b16 %v697
        %v889 = vunpack.c.h.b16 %v697
        %v890 = vunpack.c.l.b16 %v698
        %v891 = vunpack.c.h.b16 %v698
        %v892 = vunpack.c.l.b16 %v699
        %v893 = vunpack.c.h.b16 %v699
        %v894 = vunpack.c.l.b16 %v700
        %v895 = vunpack.c.h.b16 %v700
        %v896 = vunpack.c.l.b16 %v701
        %v897 = vunpack.c.h.b16 %v701
        %v898 = vunpack.c.l.b16 %v702
        %v899 = vunpack.c.h.b16 %v702
        %v900 = vunpack.c.l.b16 %v703
        %v901 = vunpack.c.h.b16 %v703
        %v902 = vunpack.c.l.b16 %v704
        %v903 = vunpack.c.h.b16 %v704
        %v904 = vunpack.c.l.b16 %v705
        %v905 = vunpack.c.h.b16 %v705
        %v906 = vunpack.c.l.b16 %v706
        %v907 = vunpack.c.h.b16 %v706
        %v908 = vunpack.c.l.b16 %v707
        %v909 = vunpack.c.h.b16 %v707
        %v910 = vunpack.c.l.b16 %v708
        %v911 = vunpack.c.h.b16 %v708
        %v912 = vunpack.c.l.b16 %v709
        %v913 = vunpack.c.h.b16 %v709
        %v914 = vunpack.c.l.b16 %v710
        %v915 = vunpack.c.h.b16 %v710
        %v916 = vunpack.c.l.b16 %v711
        %v917 = vunpack.c.h.b16 %v711
        %v918 = vunpack.c.l.b16 %v712
        %v919 = vunpack.c.h.b16 %v712
        %v920 = vunpack.c.l.b16 %v713
        %v921 = vunpack.c.h.b16 %v713
        %v922 = vunpack.c.l.b16 %v714
        %v923 = vunpack.c.h.b16 %v714
        %v924 = vunpack.c.l.b16 %v715
        %v925 = vunpack.c.h.b16 %v715
        %v926 = vunpack.c.l.b16 %v716
        %v927 = vunpack.c.h.b16 %v716
        %v928 = vunpack.c.l.b16 %v717
        %v929 = vunpack.c.h.b16 %v717
        %v930 = vunpack.c.l.b16 %v718
        %v931 = vunpack.c.h.b16 %v718
        %v932 = vunpack.c.l.b16 %v719
        %v933 = vunpack.c.h.b16 %v719
        %v934 = vunpack.c.l.b16 %v720
        %v935 = vunpack.c.h.b16 %v720
        %v936 = vunpack.c.l.b16 %v721
        %v937 = vunpack.c.h.b16 %v721
        %v938 = vpack.c.b16 %v814, %v810
        %v939 = vpack.c.b16 %v815, %v811
        %v940 = vpack.c.b16 %v816, %v812
        %v941 = vpack.c.b16 %v817, %v813
        %v942 = vpack.c.b16 %v822, %v818
        %v943 = vpack.c.b16 %v823, %v819
        %v944 = vpack.c.b16 %v824, %v820
        %v945 = vpack.c.b16 %v825, %v821
        %v946 = vpack.c.b16 %v830, %v826
        %v947 = vpack.c.b16 %v831, %v827
        %v948 = vpack.c.b16 %v832, %v828
        %v949 = vpack.c.b16 %v833, %v829
        %v950 = vpack.c.b16 %v838, %v834
        %v951 = vpack.c.b16 %v839, %v835
        %v952 = vpack.c.b16 %v840, %v836
        %v953 = vpack.c.b16 %v841, %v837
        %v954 = vpack.c.b16 %v846, %v842
        %v955 = vpack.c.b16 %v847, %v843
        %v956 = vpack.c.b16 %v848, %v844
        %v957 = vpack.c.b16 %v849, %v845
        %v958 = vpack.c.b16 %v854, %v850
        %v959 = vpack.c.b16 %v855, %v851
        %v960 = vpack.c.b16 %v856, %v852
        %v961 = vpack.c.b16 %v857, %v853
        %v962 = vpack.c.b16 %v862, %v858
        %v963 = vpack.c.b16 %v863, %v859
        %v964 = vpack.c.b16 %v864, %v860
        %v965 = vpack.c.b16 %v865, %v861
        %v966 = vpack.c.b16 %v870, %v866
        %v967 = vpack.c.b16 %v871, %v867
        %v968 = vpack.c.b16 %v872, %v868
        %v969 = vpack.c.b16 %v873, %v869
        %v970 = vpack.c.b16 %v878, %v874
        %v971 = vpack.c.b16 %v879, %v875
        %v972 = vpack.c.b16 %v880, %v876
        %v973 = vpack.c.b16 %v881, %v877
        %v974 = vpack.c.b16 %v886, %v882
        %v975 = vpack.c.b16 %v887, %v883
        %v976 = vpack.c.b16 %v888, %v884
        %v977 = vpack.c.b16 %v889, %v885
        %v978 = vpack.c.b16 %v894, %v890
        %v979 = vpack.c.b16 %v895, %v891
        %v980 = vpack.c.b16 %v896, %v892
        %v981 = vpack.c.b16 %v897, %v893
        %v982 = vpack.c.b16 %v902, %v898
        %v983 = vpack.c.b16 %v903, %v899
        %v984 = vpack.c.b16 %v904, %v900
        %v985 = vpack.c.b16 %v905, %v901
        %v986 = vpack.c.b16 %v910, %v906
        %v987 = vpack.c.b16 %v911, %v907
        %v988 = vpack.c.b16 %v912, %v908
        %v989 = vpack.c.b16 %v913, %v909
        %v990 = vpack.c.b16 %v918, %v914
        %v991 = vpack.c.b16 %v919, %v915
        %v992 = vpack.c.b16 %v920, %v916
        %v993 = vpack.c.b16 %v921, %v917
        %v994 = vpack.c.b16 %v926, %v922
        %v995 = vpack.c.b16 %v927, %v923
        %v996 = vpack.c.b16 %v928, %v924
        %v997 = vpack.c.b16 %v929, %v925
        %v998 = vpack.c.b16 %v934, %v930
        %v999 = vpack.c.b16 %v935, %v931
        %v1000 = vpack.c.b16 %v936, %v932
        %v1001 = vpack.c.b16 %v937, %v933
        %1066 = vmatprep.subr.bf16.mxu0 %v939
        %1067 = vmatpush1.bf16.msra.mxu0 %v938
        %1068 = vmatprep.subr.bf16.mxu0 %v943
        %1069 = vmatpush1.bf16.msra.mxu0 %v942
        %1070 = vmatprep.subr.bf16.mxu0 %v947
        %1071 = vmatpush1.bf16.msra.mxu0 %v946
        %1072 = vmatprep.subr.bf16.mxu0 %v951
        %1073 = vmatpush1.bf16.msra.mxu0 %v950
        %1074 = vmatprep.subr.bf16.mxu0 %v955
        %1075 = vmatpush1.bf16.msra.mxu0 %v954
        %1076 = vmatprep.subr.bf16.mxu0 %v959
        %1077 = vmatpush1.bf16.msra.mxu0 %v958
        %1078 = vmatprep.subr.bf16.mxu0 %v963
        %1079 = vmatpush1.bf16.msra.mxu0 %v962
        %1080 = vmatprep.subr.bf16.mxu0 %v967
        %1081 = vmatpush1.bf16.msra.mxu0 %v966
        %1082 = vmatprep.subr.bf16.mxu0 %v971
        %1083 = vmatpush1.bf16.msra.mxu0 %v970
        %1084 = vmatprep.subr.bf16.mxu0 %v975
        %1085 = vmatpush1.bf16.msra.mxu0 %v974
        %1086 = vmatprep.subr.bf16.mxu0 %v979
        %1087 = vmatpush1.bf16.msra.mxu0 %v978
        %1088 = vmatprep.subr.bf16.mxu0 %v983
        %1089 = vmatpush1.bf16.msra.mxu0 %v982
        %1090 = vmatprep.subr.bf16.mxu0 %v987
        %1091 = vmatpush1.bf16.msra.mxu0 %v986
        %1092 = vmatprep.subr.bf16.mxu0 %v991
        %1093 = vmatpush1.bf16.msra.mxu0 %v990
        %1094 = vmatprep.subr.bf16.mxu0 %v995
        %1095 = vmatpush1.bf16.msra.mxu0 %v994
        %1096 = vmatprep.subr.bf16.mxu0 %v999
        %1097 = vmatpush1.bf16.msra.mxu0 %v998
        %1098 = vmatprep.mubr.bf16.mxu0 %v724
        %1099 = vmatmul.mubr.bf16.gmra.mrb[0].mxu0 %v723
        %v1100 = vpop.f32.mrb[0].mxu0
        %v1101 = vadd.f32 %v729, %v1100
        %v1102 = vpop.f32.mrb[0].mxu0
        %v1103 = vadd.f32 %v733, %v1102
        %v1104 = vpop.f32.mrb[0].mxu0
        %v1105 = vpop.f32.mrb[0].mxu0
        %1106 = vdwg.mxu0
        %1107 = vmatprep.subr.bf16.mxu0 %v941
        %1108 = vmatpush1.bf16.msra.mxu0 %v940
        %1109 = vmatprep.subr.bf16.mxu0 %v945
        %1110 = vmatpush1.bf16.msra.mxu0 %v944
        %1111 = vmatprep.subr.bf16.mxu0 %v949
        %1112 = vmatpush1.bf16.msra.mxu0 %v948
        %1113 = vmatprep.subr.bf16.mxu0 %v953
        %1114 = vmatpush1.bf16.msra.mxu0 %v952
        %1115 = vmatprep.subr.bf16.mxu0 %v957
        %1116 = vmatpush1.bf16.msra.mxu0 %v956
        %1117 = vmatprep.subr.bf16.mxu0 %v961
        %1118 = vmatpush1.bf16.msra.mxu0 %v960
        %1119 = vmatprep.subr.bf16.mxu0 %v965
        %1120 = vmatpush1.bf16.msra.mxu0 %v964
        %1121 = vmatprep.subr.bf16.mxu0 %v969
        %1122 = vmatpush1.bf16.msra.mxu0 %v968
        %1123 = vmatprep.subr.bf16.mxu0 %v973
        %1124 = vmatpush1.bf16.msra.mxu0 %v972
        %1125 = vmatprep.subr.bf16.mxu0 %v977
        %1126 = vmatpush1.bf16.msra.mxu0 %v976
        %1127 = vmatprep.subr.bf16.mxu0 %v981
        %1128 = vmatpush1.bf16.msra.mxu0 %v980
        %1129 = vmatprep.subr.bf16.mxu0 %v985
        %1130 = vmatpush1.bf16.msra.mxu0 %v984
        %1131 = vmatprep.subr.bf16.mxu0 %v989
        %1132 = vmatpush1.bf16.msra.mxu0 %v988
        %1133 = vmatprep.subr.bf16.mxu0 %v993
        %1134 = vmatpush1.bf16.msra.mxu0 %v992
        %1135 = vmatprep.subr.bf16.mxu0 %v997
        %1136 = vmatpush1.bf16.msra.mxu0 %v996
        %1137 = vmatprep.subr.bf16.mxu0 %v1001
        %1138 = vmatpush1.bf16.msra.mxu0 %v1000
        %1139 = vmatprep.mubr.bf16.mxu0 %v724
        %1140 = vmatmul.mubr.bf16.gmra.mrb[0].mxu0 %v723
        %v1141 = vpop.f32.mrb[0].mxu0
        %v1142 = vadd.f32 %v737, %v1141
        %v1143 = vpop.f32.mrb[0].mxu0
        %v1144 = vadd.f32 %v741, %v1143
        %v1145 = vpop.f32.mrb[0].mxu0
        %v1146 = vpop.f32.mrb[0].mxu0
        %1147 = vdwg.mxu0
        %v1148 = vmax.f32 %v1101, 0.0
        %v1149 = vmax.f32 %v1103, 0.0
        %v1150 = vmax.f32 %v1142, 0.0
        %v1151 = vmax.f32 %v1144, 0.0
        %v1152 = vld [vmem:[%s3] sm:$0xff]
        %v1153 = vld [vmem:[%s3 + $0x8] sm:$0xff]
        %v1154 = vld [vmem:[%s3 + $0x10] sm:$0xff]
        %v1155 = vld [vmem:[%s3 + $0x18] sm:$0xff]
        %v1156 = vld [vmem:[%s3 + $0x20] sm:$0xff]
        %v1157 = vld [vmem:[%s3 + $0x28] sm:$0xff]
        %v1158 = vld [vmem:[%s3 + $0x30] sm:$0xff]
        %v1159 = vld [vmem:[%s3 + $0x38] sm:$0xff]
        %v1160 = vld [vmem:[%s3 + $0x40] sm:$0xff]
        %v1161 = vld [vmem:[%s3 + $0x48] sm:$0xff]
        %v1162 = vld [vmem:[%s3 + $0x50] sm:$0xff]
        %v1163 = vld [vmem:[%s3 + $0x58] sm:$0xff]
        %v1164 = vld [vmem:[%s3 + $0x60] sm:$0xff]
        %v1165 = vld [vmem:[%s3 + $0x68] sm:$0xff]
        %v1166 = vld [vmem:[%s3 + $0x70] sm:$0xff]
        %v1167 = vld [vmem:[%s3 + $0x78] sm:$0xff]
        %v1168 = vld [vmem:[%s3 + $0x80] sm:$0xff]
        %v1169 = vld [vmem:[%s3 + $0x88] sm:$0xff]
        %v1170 = vld [vmem:[%s3 + $0x90] sm:$0xff]
        %v1171 = vld [vmem:[%s3 + $0x98] sm:$0xff]
        %v1172 = vld [vmem:[%s3 + $0xa0] sm:$0xff]
        %v1173 = vld [vmem:[%s3 + $0xa8] sm:$0xff]
        %v1174 = vld [vmem:[%s3 + $0xb0] sm:$0xff]
        %v1175 = vld [vmem:[%s3 + $0xb8] sm:$0xff]
        %v1176 = vld [vmem:[%s3 + $0xc0] sm:$0xff]
        %v1177 = vld [vmem:[%s3 + $0xc8] sm:$0xff]
        %v1178 = vld [vmem:[%s3 + $0xd0] sm:$0xff]
        %v1179 = vld [vmem:[%s3 + $0xd8] sm:$0xff]
        %v1180 = vld [vmem:[%s3 + $0xe0] sm:$0xff]
        %v1181 = vld [vmem:[%s3 + $0xe8] sm:$0xff]
        %v1182 = vld [vmem:[%s3 + $0xf0] sm:$0xff]
        %v1183 = vld [vmem:[%s3 + $0xf8] sm:$0xff]
        %v1184 = vld [vmem:[%s3 + $0x100] sm:$0xff]
        %v1185 = vld [vmem:[%s3 + $0x108] sm:$0xff]
        %v1186 = vld [vmem:[%s3 + $0x110] sm:$0xff]
        %v1187 = vld [vmem:[%s3 + $0x118] sm:$0xff]
        %v1188 = vld [vmem:[%s3 + $0x120] sm:$0xff]
        %v1189 = vld [vmem:[%s3 + $0x128] sm:$0xff]
        %v1190 = vld [vmem:[%s3 + $0x130] sm:$0xff]
        %v1191 = vld [vmem:[%s3 + $0x138] sm:$0xff]
        %v1192 = vld [vmem:[%s3 + $0x140] sm:$0xff]
        %v1193 = vld [vmem:[%s3 + $0x148] sm:$0xff]
        %v1194 = vld [vmem:[%s3 + $0x150] sm:$0xff]
        %v1195 = vld [vmem:[%s3 + $0x158] sm:$0xff]
        %v1196 = vld [vmem:[%s3 + $0x160] sm:$0xff]
        %v1197 = vld [vmem:[%s3 + $0x168] sm:$0xff]
        %v1198 = vld [vmem:[%s3 + $0x170] sm:$0xff]
        %v1199 = vld [vmem:[%s3 + $0x178] sm:$0xff]
        %v1200 = vld [vmem:[%s3 + $0x180] sm:$0xff]
        %v1201 = vld [vmem:[%s3 + $0x188] sm:$0xff]
        %v1202 = vld [vmem:[%s3 + $0x190] sm:$0xff]
        %v1203 = vld [vmem:[%s3 + $0x198] sm:$0xff]
        %v1204 = vld [vmem:[%s3 + $0x1a0] sm:$0xff]
        %v1205 = vld [vmem:[%s3 + $0x1a8] sm:$0xff]
        %v1206 = vld [vmem:[%s3 + $0x1b0] sm:$0xff]
        %v1207 = vld [vmem:[%s3 + $0x1b8] sm:$0xff]
        %v1208 = vld [vmem:[%s3 + $0x1c0] sm:$0xff]
        %v1209 = vld [vmem:[%s3 + $0x1c8] sm:$0xff]
        %v1210 = vld [vmem:[%s3 + $0x1d0] sm:$0xff]
        %v1211 = vld [vmem:[%s3 + $0x1d8] sm:$0xff]
        %v1212 = vld [vmem:[%s3 + $0x1e0] sm:$0xff]
        %v1213 = vld [vmem:[%s3 + $0x1e8] sm:$0xff]
        %v1214 = vld [vmem:[%s3 + $0x1f0] sm:$0xff]
        %v1215 = vld [vmem:[%s3 + $0x1f8] sm:$0xff]
        %v1216 = vld [vmem:[%s4] sm:$0x3]
        %v1217 = vpack.c.bf16 %v1148, %v1148
        %v1218 = vpack.c.bf16 %v1149, %v1149
        %v1219 = vpack.c.bf16 %v1150, %v1150
        %v1220 = vpack.c.bf16 %v1151, %v1151
        %v1222 = vlaneseq
        %v1223 = vshrl.u32 %v1222, 7
        %v1224 = vsub.s32 0, %v1223
        %v1225 = vrot.slane %v1216, %v1224
        %v1226 = vlaneseq
        %v1227 = vshrl.u32 %v1226, 7
        %v1228 = vsub.s32 1, %v1227
        %v1229 = vrot.slane %v1216, %v1228
        %v1296 = vunpack.c.l.b16 %v1152
        %v1297 = vunpack.c.h.b16 %v1152
        %v1298 = vunpack.c.l.b16 %v1153
        %v1299 = vunpack.c.h.b16 %v1153
        %v1300 = vunpack.c.l.b16 %v1154
        %v1301 = vunpack.c.h.b16 %v1154
        %v1302 = vunpack.c.l.b16 %v1155
        %v1303 = vunpack.c.h.b16 %v1155
        %v1304 = vunpack.c.l.b16 %v1156
        %v1305 = vunpack.c.h.b16 %v1156
        %v1306 = vunpack.c.l.b16 %v1157
        %v1307 = vunpack.c.h.b16 %v1157
        %v1308 = vunpack.c.l.b16 %v1158
        %v1309 = vunpack.c.h.b16 %v1158
        %v1310 = vunpack.c.l.b16 %v1159
        %v1311 = vunpack.c.h.b16 %v1159
        %v1312 = vunpack.c.l.b16 %v1160
        %v1313 = vunpack.c.h.b16 %v1160
        %v1314 = vunpack.c.l.b16 %v1161
        %v1315 = vunpack.c.h.b16 %v1161
        %v1316 = vunpack.c.l.b16 %v1162
        %v1317 = vunpack.c.h.b16 %v1162
        %v1318 = vunpack.c.l.b16 %v1163
        %v1319 = vunpack.c.h.b16 %v1163
        %v1320 = vunpack.c.l.b16 %v1164
        %v1321 = vunpack.c.h.b16 %v1164
        %v1322 = vunpack.c.l.b16 %v1165
        %v1323 = vunpack.c.h.b16 %v1165
        %v1324 = vunpack.c.l.b16 %v1166
        %v1325 = vunpack.c.h.b16 %v1166
        %v1326 = vunpack.c.l.b16 %v1167
        %v1327 = vunpack.c.h.b16 %v1167
        %v1328 = vunpack.c.l.b16 %v1168
        %v1329 = vunpack.c.h.b16 %v1168
        %v1330 = vunpack.c.l.b16 %v1169
        %v1331 = vunpack.c.h.b16 %v1169
        %v1332 = vunpack.c.l.b16 %v1170
        %v1333 = vunpack.c.h.b16 %v1170
        %v1334 = vunpack.c.l.b16 %v1171
        %v1335 = vunpack.c.h.b16 %v1171
        %v1336 = vunpack.c.l.b16 %v1172
        %v1337 = vunpack.c.h.b16 %v1172
        %v1338 = vunpack.c.l.b16 %v1173
        %v1339 = vunpack.c.h.b16 %v1173
        %v1340 = vunpack.c.l.b16 %v1174
        %v1341 = vunpack.c.h.b16 %v1174
        %v1342 = vunpack.c.l.b16 %v1175
        %v1343 = vunpack.c.h.b16 %v1175
        %v1344 = vunpack.c.l.b16 %v1176
        %v1345 = vunpack.c.h.b16 %v1176
        %v1346 = vunpack.c.l.b16 %v1177
        %v1347 = vunpack.c.h.b16 %v1177
        %v1348 = vunpack.c.l.b16 %v1178
        %v1349 = vunpack.c.h.b16 %v1178
        %v1350 = vunpack.c.l.b16 %v1179
        %v1351 = vunpack.c.h.b16 %v1179
        %v1352 = vunpack.c.l.b16 %v1180
        %v1353 = vunpack.c.h.b16 %v1180
        %v1354 = vunpack.c.l.b16 %v1181
        %v1355 = vunpack.c.h.b16 %v1181
        %v1356 = vunpack.c.l.b16 %v1182
        %v1357 = vunpack.c.h.b16 %v1182
        %v1358 = vunpack.c.l.b16 %v1183
        %v1359 = vunpack.c.h.b16 %v1183
        %v1360 = vunpack.c.l.b16 %v1184
        %v1361 = vunpack.c.h.b16 %v1184
        %v1362 = vunpack.c.l.b16 %v1185
        %v1363 = vunpack.c.h.b16 %v1185
        %v1364 = vunpack.c.l.b16 %v1186
        %v1365 = vunpack.c.h.b16 %v1186
        %v1366 = vunpack.c.l.b16 %v1187
        %v1367 = vunpack.c.h.b16 %v1187
        %v1368 = vunpack.c.l.b16 %v1188
        %v1369 = vunpack.c.h.b16 %v1188
        %v1370 = vunpack.c.l.b16 %v1189
        %v1371 = vunpack.c.h.b16 %v1189
        %v1372 = vunpack.c.l.b16 %v1190
        %v1373 = vunpack.c.h.b16 %v1190
        %v1374 = vunpack.c.l.b16 %v1191
        %v1375 = vunpack.c.h.b16 %v1191
        %v1376 = vunpack.c.l.b16 %v1192
        %v1377 = vunpack.c.h.b16 %v1192
        %v1378 = vunpack.c.l.b16 %v1193
        %v1379 = vunpack.c.h.b16 %v1193
        %v1380 = vunpack.c.l.b16 %v1194
        %v1381 = vunpack.c.h.b16 %v1194
        %v1382 = vunpack.c.l.b16 %v1195
        %v1383 = vunpack.c.h.b16 %v1195
        %v1384 = vunpack.c.l.b16 %v1196
        %v1385 = vunpack.c.h.b16 %v1196
        %v1386 = vunpack.c.l.b16 %v1197
        %v1387 = vunpack.c.h.b16 %v1197
        %v1388 = vunpack.c.l.b16 %v1198
        %v1389 = vunpack.c.h.b16 %v1198
        %v1390 = vunpack.c.l.b16 %v1199
        %v1391 = vunpack.c.h.b16 %v1199
        %v1392 = vunpack.c.l.b16 %v1200
        %v1393 = vunpack.c.h.b16 %v1200
        %v1394 = vunpack.c.l.b16 %v1201
        %v1395 = vunpack.c.h.b16 %v1201
        %v1396 = vunpack.c.l.b16 %v1202
        %v1397 = vunpack.c.h.b16 %v1202
        %v1398 = vunpack.c.l.b16 %v1203
        %v1399 = vunpack.c.h.b16 %v1203
        %v1400 = vunpack.c.l.b16 %v1204
        %v1401 = vunpack.c.h.b16 %v1204
        %v1402 = vunpack.c.l.b16 %v1205
        %v1403 = vunpack.c.h.b16 %v1205
        %v1404 = vunpack.c.l.b16 %v1206
        %v1405 = vunpack.c.h.b16 %v1206
        %v1406 = vunpack.c.l.b16 %v1207
        %v1407 = vunpack.c.h.b16 %v1207
        %v1408 = vunpack.c.l.b16 %v1208
        %v1409 = vunpack.c.h.b16 %v1208
        %v1410 = vunpack.c.l.b16 %v1209
        %v1411 = vunpack.c.h.b16 %v1209
        %v1412 = vunpack.c.l.b16 %v1210
        %v1413 = vunpack.c.h.b16 %v1210
        %v1414 = vunpack.c.l.b16 %v1211
        %v1415 = vunpack.c.h.b16 %v1211
        %v1416 = vunpack.c.l.b16 %v1212
        %v1417 = vunpack.c.h.b16 %v1212
        %v1418 = vunpack.c.l.b16 %v1213
        %v1419 = vunpack.c.h.b16 %v1213
        %v1420 = vunpack.c.l.b16 %v1214
        %v1421 = vunpack.c.h.b16 %v1214
        %v1422 = vunpack.c.l.b16 %v1215
        %v1423 = vunpack.c.h.b16 %v1215
        %v1424 = vpack.c.b16 %v1298, %v1296
        %v1425 = vpack.c.b16 %v1299, %v1297
        %v1426 = vpack.c.b16 %v1302, %v1300
        %v1427 = vpack.c.b16 %v1303, %v1301
        %v1428 = vpack.c.b16 %v1306, %v1304
        %v1429 = vpack.c.b16 %v1307, %v1305
        %v1430 = vpack.c.b16 %v1310, %v1308
        %v1431 = vpack.c.b16 %v1311, %v1309
        %v1432 = vpack.c.b16 %v1314, %v1312
        %v1433 = vpack.c.b16 %v1315, %v1313
        %v1434 = vpack.c.b16 %v1318, %v1316
        %v1435 = vpack.c.b16 %v1319, %v1317
        %v1436 = vpack.c.b16 %v1322, %v1320
        %v1437 = vpack.c.b16 %v1323, %v1321
        %v1438 = vpack.c.b16 %v1326, %v1324
        %v1439 = vpack.c.b16 %v1327, %v1325
        %v1440 = vpack.c.b16 %v1330, %v1328
        %v1441 = vpack.c.b16 %v1331, %v1329
        %v1442 = vpack.c.b16 %v1334, %v1332
        %v1443 = vpack.c.b16 %v1335, %v1333
        %v1444 = vpack.c.b16 %v1338, %v1336
        %v1445 = vpack.c.b16 %v1339, %v1337
        %v1446 = vpack.c.b16 %v1342, %v1340
        %v1447 = vpack.c.b16 %v1343, %v1341
        %v1448 = vpack.c.b16 %v1346, %v1344
        %v1449 = vpack.c.b16 %v1347, %v1345
        %v1450 = vpack.c.b16 %v1350, %v1348
        %v1451 = vpack.c.b16 %v1351, %v1349
        %v1452 = vpack.c.b16 %v1354, %v1352
        %v1453 = vpack.c.b16 %v1355, %v1353
        %v1454 = vpack.c.b16 %v1358, %v1356
        %v1455 = vpack.c.b16 %v1359, %v1357
        %v1456 = vpack.c.b16 %v1362, %v1360
        %v1457 = vpack.c.b16 %v1363, %v1361
        %v1458 = vpack.c.b16 %v1366, %v1364
        %v1459 = vpack.c.b16 %v1367, %v1365
        %v1460 = vpack.c.b16 %v1370, %v1368
        %v1461 = vpack.c.b16 %v1371, %v1369
        %v1462 = vpack.c.b16 %v1374, %v1372
        %v1463 = vpack.c.b16 %v1375, %v1373
        %v1464 = vpack.c.b16 %v1378, %v1376
        %v1465 = vpack.c.b16 %v1379, %v1377
        %v1466 = vpack.c.b16 %v1382, %v1380
        %v1467 = vpack.c.b16 %v1383, %v1381
        %v1468 = vpack.c.b16 %v1386, %v1384
        %v1469 = vpack.c.b16 %v1387, %v1385
        %v1470 = vpack.c.b16 %v1390, %v1388
        %v1471 = vpack.c.b16 %v1391, %v1389
        %v1472 = vpack.c.b16 %v1394, %v1392
        %v1473 = vpack.c.b16 %v1395, %v1393
        %v1474 = vpack.c.b16 %v1398, %v1396
        %v1475 = vpack.c.b16 %v1399, %v1397
        %v1476 = vpack.c.b16 %v1402, %v1400
        %v1477 = vpack.c.b16 %v1403, %v1401
        %v1478 = vpack.c.b16 %v1406, %v1404
        %v1479 = vpack.c.b16 %v1407, %v1405
        %v1480 = vpack.c.b16 %v1410, %v1408
        %v1481 = vpack.c.b16 %v1411, %v1409
        %v1482 = vpack.c.b16 %v1414, %v1412
        %v1483 = vpack.c.b16 %v1415, %v1413
        %v1484 = vpack.c.b16 %v1418, %v1416
        %v1485 = vpack.c.b16 %v1419, %v1417
        %v1486 = vpack.c.b16 %v1422, %v1420
        %v1487 = vpack.c.b16 %v1423, %v1421
        %1552 = vmatprep.subr.bf16.mxu0 %v1425
        %1553 = vmatpush1.bf16.msra.mxu0 %v1424
        %1554 = vmatprep.subr.bf16.mxu0 %v1427
        %1555 = vmatpush1.bf16.msra.mxu0 %v1426
        %1556 = vmatprep.subr.bf16.mxu0 %v1429
        %1557 = vmatpush1.bf16.msra.mxu0 %v1428
        %1558 = vmatprep.subr.bf16.mxu0 %v1431
        %1559 = vmatpush1.bf16.msra.mxu0 %v1430
        %1560 = vmatprep.subr.bf16.mxu0 %v1433
        %1561 = vmatpush1.bf16.msra.mxu0 %v1432
        %1562 = vmatprep.subr.bf16.mxu0 %v1435
        %1563 = vmatpush1.bf16.msra.mxu0 %v1434
        %1564 = vmatprep.subr.bf16.mxu0 %v1437
        %1565 = vmatpush1.bf16.msra.mxu0 %v1436
        %1566 = vmatprep.subr.bf16.mxu0 %v1439
        %1567 = vmatpush1.bf16.msra.mxu0 %v1438
        %1568 = vmatprep.subr.bf16.mxu0 %v1441
        %1569 = vmatpush1.bf16.msra.mxu0 %v1440
        %1570 = vmatprep.subr.bf16.mxu0 %v1443
        %1571 = vmatpush1.bf16.msra.mxu0 %v1442
        %1572 = vmatprep.subr.bf16.mxu0 %v1445
        %1573 = vmatpush1.bf16.msra.mxu0 %v1444
        %1574 = vmatprep.subr.bf16.mxu0 %v1447
        %1575 = vmatpush1.bf16.msra.mxu0 %v1446
        %1576 = vmatprep.subr.bf16.mxu0 %v1449
        %1577 = vmatpush1.bf16.msra.mxu0 %v1448
        %1578 = vmatprep.subr.bf16.mxu0 %v1451
        %1579 = vmatpush1.bf16.msra.mxu0 %v1450
        %1580 = vmatprep.subr.bf16.mxu0 %v1453
        %1581 = vmatpush1.bf16.msra.mxu0 %v1452
        %1582 = vmatprep.subr.bf16.mxu0 %v1455
        %1583 = vmatpush1.bf16.msra.mxu0 %v1454
        %1584 = vmatprep.mubr.bf16.mxu0 %v1218
        %1585 = vmatmul.mubr.bf16.gmra.mrb[0].mxu0 %v1217
        %v1586 = vpop.f32.mrb[0].mxu0
        %v1587 = vadd.f32 %v1225, %v1586
        %v1588 = vpop.f32.mrb[0].mxu0
        %v1589 = vadd.f32 %v1229, %v1588
        %v1590 = vpop.f32.mrb[0].mxu0
        %v1591 = vpop.f32.mrb[0].mxu0
        %1592 = vdwg.mxu0
        %1593 = vmatprep.subr.bf16.mxu0 %v1457
        %1594 = vmatpush1.bf16.msra.mxu0 %v1456
        %1595 = vmatprep.subr.bf16.mxu0 %v1459
        %1596 = vmatpush1.bf16.msra.mxu0 %v1458
        %1597 = vmatprep.subr.bf16.mxu0 %v1461
        %1598 = vmatpush1.bf16.msra.mxu0 %v1460
        %1599 = vmatprep.subr.bf16.mxu0 %v1463
        %1600 = vmatpush1.bf16.msra.mxu0 %v1462
        %1601 = vmatprep.subr.bf16.mxu0 %v1465
        %1602 = vmatpush1.bf16.msra.mxu0 %v1464
        %1603 = vmatprep.subr.bf16.mxu0 %v1467
        %1604 = vmatpush1.bf16.msra.mxu0 %v1466
        %1605 = vmatprep.subr.bf16.mxu0 %v1469
        %1606 = vmatpush1.bf16.msra.mxu0 %v1468
        %1607 = vmatprep.subr.bf16.mxu0 %v1471
        %1608 = vmatpush1.bf16.msra.mxu0 %v1470
        %1609 = vmatprep.subr.bf16.mxu0 %v1473
        %1610 = vmatpush1.bf16.msra.mxu0 %v1472
        %1611 = vmatprep.subr.bf16.mxu0 %v1475
        %1612 = vmatpush1.bf16.msra.mxu0 %v1474
        %1613 = vmatprep.subr.bf16.mxu0 %v1477
        %1614 = vmatpush1.bf16.msra.mxu0 %v1476
        %1615 = vmatprep.subr.bf16.mxu0 %v1479
        %1616 = vmatpush1.bf16.msra.mxu0 %v1478
        %1617 = vmatprep.subr.bf16.mxu0 %v1481
        %1618 = vmatpush1.bf16.msra.mxu0 %v1480
        %1619 = vmatprep.subr.bf16.mxu0 %v1483
        %1620 = vmatpush1.bf16.msra.mxu0 %v1482
        %1621 = vmatprep.subr.bf16.mxu0 %v1485
        %1622 = vmatpush1.bf16.msra.mxu0 %v1484
        %1623 = vmatprep.subr.bf16.mxu0 %v1487
        %1624 = vmatpush1.bf16.msra.mxu0 %v1486
        %1625 = vmatprep.mubr.bf16.mxu0 %v1220
        %1626 = vmatmul.mubr.bf16.gmra.mrb[0].mxu0 %v1219
        %v1627 = vpop.f32.mrb[0].mxu0
        %v1628 = vadd.f32 %v1587, %v1627
        %v1629 = vpop.f32.mrb[0].mxu0
        %v1630 = vadd.f32 %v1589, %v1629
        %v1631 = vpop.f32.mrb[0].mxu0
        %v1632 = vpop.f32.mrb[0].mxu0
        %1633 = vdwg.mxu0
        %v1634 = vmax.f32 %v1628, 0.0
        %v1635 = vmax.f32 %v1630, 0.0
        %v1636 = vld [vmem:[%s5] sm:$0xf]
        %v1637 = vld [vmem:[%s5 + $0x4] sm:$0xf]
        %v1638 = vld [vmem:[%s5 + $0x8] sm:$0xf]
        %v1639 = vld [vmem:[%s5 + $0xc] sm:$0xf]
        %v1640 = vld [vmem:[%s5 + $0x10] sm:$0xf]
        %v1641 = vld [vmem:[%s5 + $0x14] sm:$0xf]
        %v1642 = vld [vmem:[%s5 + $0x18] sm:$0xf]
        %v1643 = vld [vmem:[%s5 + $0x1c] sm:$0xf]
        %v1644 = vld [vmem:[%s5 + $0x20] sm:$0xf]
        %v1645 = vld [vmem:[%s5 + $0x24] sm:$0xf]
        %v1646 = vld [vmem:[%s5 + $0x28] sm:$0xf]
        %v1647 = vld [vmem:[%s5 + $0x2c] sm:$0xf]
        %v1648 = vld [vmem:[%s5 + $0x30] sm:$0xf]
        %v1649 = vld [vmem:[%s5 + $0x34] sm:$0xf]
        %v1650 = vld [vmem:[%s5 + $0x38] sm:$0xf]
        %v1651 = vld [vmem:[%s5 + $0x3c] sm:$0xf]
        %v1652 = vld [vmem:[%s5 + $0x40] sm:$0xf]
        %v1653 = vld [vmem:[%s5 + $0x44] sm:$0xf]
        %v1654 = vld [vmem:[%s5 + $0x48] sm:$0xf]
        %v1655 = vld [vmem:[%s5 + $0x4c] sm:$0xf]
        %v1656 = vld [vmem:[%s5 + $0x50] sm:$0xf]
        %v1657 = vld [vmem:[%s5 + $0x54] sm:$0xf]
        %v1658 = vld [vmem:[%s5 + $0x58] sm:$0xf]
        %v1659 = vld [vmem:[%s5 + $0x5c] sm:$0xf]
        %v1660 = vld [vmem:[%s5 + $0x60] sm:$0xf]
        %v1661 = vld [vmem:[%s5 + $0x64] sm:$0xf]
        %v1662 = vld [vmem:[%s5 + $0x68] sm:$0xf]
        %v1663 = vld [vmem:[%s5 + $0x6c] sm:$0xf]
        %v1664 = vld [vmem:[%s5 + $0x70] sm:$0xf]
        %v1665 = vld [vmem:[%s5 + $0x74] sm:$0xf]
        %v1666 = vld [vmem:[%s5 + $0x78] sm:$0xf]
        %v1667 = vld [vmem:[%s5 + $0x7c] sm:$0xf]
        %v1668 = vld [vmem:[%s6] sm:$0x1]
        %v1669 = vpack.c.bf16 %v1634, %v1634
        %v1670 = vpack.c.bf16 %v1635, %v1635
        %v1672 = vlaneseq
        %v1673 = vshrl.u32 %v1672, 7
        %v1674 = vsub.s32 0, %v1673
        %v1675 = vrot.slane %v1668, %v1674
        %v1709 = vunpack.c.l.b16 %v1636
        %v1710 = vunpack.c.l.b16 %v1637
        %v1711 = vunpack.c.l.b16 %v1638
        %v1712 = vunpack.c.l.b16 %v1639
        %v1713 = vunpack.c.l.b16 %v1640
        %v1714 = vunpack.c.l.b16 %v1641
        %v1715 = vunpack.c.l.b16 %v1642
        %v1716 = vunpack.c.l.b16 %v1643
        %v1717 = vunpack.c.l.b16 %v1644
        %v1718 = vunpack.c.l.b16 %v1645
        %v1719 = vunpack.c.l.b16 %v1646
        %v1720 = vunpack.c.l.b16 %v1647
        %v1721 = vunpack.c.l.b16 %v1648
        %v1722 = vunpack.c.l.b16 %v1649
        %v1723 = vunpack.c.l.b16 %v1650
        %v1724 = vunpack.c.l.b16 %v1651
        %v1725 = vunpack.c.l.b16 %v1652
        %v1726 = vunpack.c.l.b16 %v1653
        %v1727 = vunpack.c.l.b16 %v1654
        %v1728 = vunpack.c.l.b16 %v1655
        %v1729 = vunpack.c.l.b16 %v1656
        %v1730 = vunpack.c.l.b16 %v1657
        %v1731 = vunpack.c.l.b16 %v1658
        %v1732 = vunpack.c.l.b16 %v1659
        %v1733 = vunpack.c.l.b16 %v1660
        %v1734 = vunpack.c.l.b16 %v1661
        %v1735 = vunpack.c.l.b16 %v1662
        %v1736 = vunpack.c.l.b16 %v1663
        %v1737 = vunpack.c.l.b16 %v1664
        %v1738 = vunpack.c.l.b16 %v1665
        %v1739 = vunpack.c.l.b16 %v1666
        %v1740 = vunpack.c.l.b16 %v1667
        %v1741 = vpack.c.b16 %v1710, %v1709
        %v1742 = vpack.c.b16 %v1712, %v1711
        %v1743 = vpack.c.b16 %v1714, %v1713
        %v1744 = vpack.c.b16 %v1716, %v1715
        %v1745 = vpack.c.b16 %v1718, %v1717
        %v1746 = vpack.c.b16 %v1720, %v1719
        %v1747 = vpack.c.b16 %v1722, %v1721
        %v1748 = vpack.c.b16 %v1724, %v1723
        %v1749 = vpack.c.b16 %v1726, %v1725
        %v1750 = vpack.c.b16 %v1728, %v1727
        %v1751 = vpack.c.b16 %v1730, %v1729
        %v1752 = vpack.c.b16 %v1732, %v1731
        %v1753 = vpack.c.b16 %v1734, %v1733
        %v1754 = vpack.c.b16 %v1736, %v1735
        %v1755 = vpack.c.b16 %v1738, %v1737
        %v1756 = vpack.c.b16 %v1740, %v1739
        %1773 = vmatprep.subr.bf16.mxu0 0
        %1774 = vmatpush1.bf16.msra.mxu0 %v1741
        %1775 = vmatprep.subr.bf16.mxu0 0
        %1776 = vmatpush1.bf16.msra.mxu0 %v1742
        %1777 = vmatprep.subr.bf16.mxu0 0
        %1778 = vmatpush1.bf16.msra.mxu0 %v1743
        %1779 = vmatprep.subr.bf16.mxu0 0
        %1780 = vmatpush1.bf16.msra.mxu0 %v1744
        %1781 = vmatprep.subr.bf16.mxu0 0
        %1782 = vmatpush1.bf16.msra.mxu0 %v1745
        %1783 = vmatprep.subr.bf16.mxu0 0
        %1784 = vmatpush1.bf16.msra.mxu0 %v1746
        %1785 = vmatprep.subr.bf16.mxu0 0
        %1786 = vmatpush1.bf16.msra.mxu0 %v1747
        %1787 = vmatprep.subr.bf16.mxu0 0
        %1788 = vmatpush1.bf16.msra.mxu0 %v1748
        %1789 = vmatprep.subr.bf16.mxu0 0
        %1790 = vmatpush1.bf16.msra.mxu0 %v1749
        %1791 = vmatprep.subr.bf16.mxu0 0
        %1792 = vmatpush1.bf16.msra.mxu0 %v1750
        %1793 = vmatprep.subr.bf16.mxu0 0
        %1794 = vmatpush1.bf16.msra.mxu0 %v1751
        %1795 = vmatprep.subr.bf16.mxu0 0
        %1796 = vmatpush1.bf16.msra.mxu0 %v1752
        %1797 = vmatprep.subr.bf16.mxu0 0
        %1798 = vmatpush1.bf16.msra.mxu0 %v1753
        %1799 = vmatprep.subr.bf16.mxu0 0
        %1800 = vmatpush1.bf16.msra.mxu0 %v1754
        %1801 = vmatprep.subr.bf16.mxu0 0
        %1802 = vmatpush1.bf16.msra.mxu0 %v1755
        %1803 = vmatprep.subr.bf16.mxu0 0
        %1804 = vmatpush1.bf16.msra.mxu0 %v1756
        %1805 = vmatprep.mubr.bf16.mxu0 %v1670
        %1806 = vmatmul.mubr.bf16.gmra.mrb[0].mxu0 %v1669
        %v1807 = vpop.f32.mrb[0].mxu0
        %v1808 = vadd.f32 %v1675, %v1807
        %v1809 = vpop.f32.mrb[0].mxu0
        %v1810 = vpop.f32.mrb[0].mxu0
        %v1811 = vpop.f32.mrb[0].mxu0
        %1812 = vdwg.mxu0
        %v1813 = vmax.f32 %v1808, 0.0
        %v1814 = vld [vmem:[%s7] sm:$0xf]
        %v1815 = vld [vmem:[%s7 + $0x4] sm:$0xf]
        %v1816 = vld [vmem:[%s7 + $0x8] sm:$0xf]
        %v1817 = vld [vmem:[%s7 + $0xc] sm:$0xf]
        %v1818 = vld [vmem:[%s7 + $0x10] sm:$0xf]
        %v1819 = vld [vmem:[%s7 + $0x14] sm:$0xf]
        %v1820 = vld [vmem:[%s7 + $0x18] sm:$0xf]
        %v1821 = vld [vmem:[%s7 + $0x1c] sm:$0xf]
        %v1822 = vld [vmem:[%s7 + $0x20] sm:$0xf]
        %v1823 = vld [vmem:[%s7 + $0x24] sm:$0xf]
        %v1824 = vld [vmem:[%s7 + $0x28] sm:$0xf]
        %v1825 = vld [vmem:[%s7 + $0x2c] sm:$0xf]
        %v1826 = vld [vmem:[%s7 + $0x30] sm:$0xf]
        %v1827 = vld [vmem:[%s7 + $0x34] sm:$0xf]
        %v1828 = vld [vmem:[%s7 + $0x38] sm:$0xf]
        %v1829 = vld [vmem:[%s7 + $0x3c] sm:$0xf]
        %v1830 = vld [vmem:[%s8] sm:$0x1]
        %v1831 = vpack.c.bf16 %v1813, %v1813
        %v1833 = vlaneseq
        %v1834 = vshrl.u32 %v1833, 7
        %v1835 = vsub.s32 0, %v1834
        %v1836 = vrot.slane %v1830, %v1835
        %v1854 = vunpack.c.l.b16 %v1814
        %v1855 = vunpack.c.l.b16 %v1815
        %v1856 = vunpack.c.l.b16 %v1816
        %v1857 = vunpack.c.l.b16 %v1817
        %v1858 = vunpack.c.l.b16 %v1818
        %v1859 = vunpack.c.l.b16 %v1819
        %v1860 = vunpack.c.l.b16 %v1820
        %v1861 = vunpack.c.l.b16 %v1821
        %v1862 = vunpack.c.l.b16 %v1822
        %v1863 = vunpack.c.l.b16 %v1823
        %v1864 = vunpack.c.l.b16 %v1824
        %v1865 = vunpack.c.l.b16 %v1825
        %v1866 = vunpack.c.l.b16 %v1826
        %v1867 = vunpack.c.l.b16 %v1827
        %v1868 = vunpack.c.l.b16 %v1828
        %v1869 = vunpack.c.l.b16 %v1829
        %v1870 = vpack.c.b16 %v1855, %v1854
        %v1871 = vpack.c.b16 %v1857, %v1856
        %v1872 = vpack.c.b16 %v1859, %v1858
        %v1873 = vpack.c.b16 %v1861, %v1860
        %v1874 = vpack.c.b16 %v1863, %v1862
        %v1875 = vpack.c.b16 %v1865, %v1864
        %v1876 = vpack.c.b16 %v1867, %v1866
        %v1877 = vpack.c.b16 %v1869, %v1868
        %1886 = vmatprep.subr.bf16.mxu0 0
        %1887 = vmatpush1.bf16.msra.mxu0 %v1870
        %1888 = vmatprep.subr.bf16.mxu0 0
        %1889 = vmatpush1.bf16.msra.mxu0 %v1871
        %1890 = vmatprep.subr.bf16.mxu0 0
        %1891 = vmatpush1.bf16.msra.mxu0 %v1872
        %1892 = vmatprep.subr.bf16.mxu0 0
        %1893 = vmatpush1.bf16.msra.mxu0 %v1873
        %1894 = vmatprep.subr.bf16.mxu0 0
        %1895 = vmatpush1.bf16.msra.mxu0 %v1874
        %1896 = vmatprep.subr.bf16.mxu0 0
        %1897 = vmatpush1.bf16.msra.mxu0 %v1875
        %1898 = vmatprep.subr.bf16.mxu0 0
        %1899 = vmatpush1.bf16.msra.mxu0 %v1876
        %1900 = vmatprep.subr.bf16.mxu0 0
        %1901 = vmatpush1.bf16.msra.mxu0 %v1877
        %1902 = vmatprep.subr.bf16.mxu0 0
        %1903 = vmatpush1.bf16.msra.mxu0 0
        %1904 = vmatprep.subr.bf16.mxu0 0
        %1905 = vmatpush1.bf16.msra.mxu0 0
        %1906 = vmatprep.subr.bf16.mxu0 0
        %1907 = vmatpush1.bf16.msra.mxu0 0
        %1908 = vmatprep.subr.bf16.mxu0 0
        %1909 = vmatpush1.bf16.msra.mxu0 0
        %1910 = vmatprep.subr.bf16.mxu0 0
        %1911 = vmatpush1.bf16.msra.mxu0 0
        %1912 = vmatprep.subr.bf16.mxu0 0
        %1913 = vmatpush1.bf16.msra.mxu0 0
        %1914 = vmatprep.subr.bf16.mxu0 0
        %1915 = vmatpush1.bf16.msra.mxu0 0
        %1916 = vmatprep.subr.bf16.mxu0 0
        %1917 = vmatpush1.bf16.msra.mxu0 0
        %1918 = vmatprep.mubr.bf16.mxu0 0
        %1919 = vmatmul.mubr.bf16.gmra.mrb[0].mxu0 %v1831
        %v1920 = vpop.f32.mrb[0].mxu0
        %v1921 = vadd.f32 %v1836, %v1920
        %v1922 = vpop.f32.mrb[0].mxu0
        %v1923 = vpop.f32.mrb[0].mxu0
        %v1924 = vpop.f32.mrb[0].mxu0
        %1925 = vdwg.mxu0
        %v1926 = vmax.f32 %v1921, 0.0
        %v1927 = vld [vmem:[%s9] sm:$0xf]
        %v1928 = vld [vmem:[%s9 + $0x4] sm:$0xf]
        %v1929 = vld [vmem:[%s9 + $0x8] sm:$0xf]
        %v1930 = vld [vmem:[%s9 + $0xc] sm:$0xf]
        %v1931 = vld [vmem:[%s9 + $0x10] sm:$0xf]
        %v1932 = vld [vmem:[%s9 + $0x14] sm:$0xf]
        %v1933 = vld [vmem:[%s9 + $0x18] sm:$0xf]
        %v1934 = vld [vmem:[%s9 + $0x1c] sm:$0xf]
        %v1935 = vld [vmem:[%s9 + $0x20] sm:$0xf]
        %v1936 = vld [vmem:[%s9 + $0x24] sm:$0xf]
        %v1937 = vld [vmem:[%s9 + $0x28] sm:$0xf]
        %v1938 = vld [vmem:[%s9 + $0x2c] sm:$0xf]
        %v1939 = vld [vmem:[%s9 + $0x30] sm:$0xf]
        %v1940 = vld [vmem:[%s9 + $0x34] sm:$0xf]
        %v1941 = vld [vmem:[%s9 + $0x38] sm:$0xf]
        %v1942 = vld [vmem:[%s9 + $0x3c] sm:$0xf]
        %v1943 = vld [vmem:[%s10] sm:$0x1]
        %v1944 = vpack.c.bf16 %v1926, %v1926
        %v1946 = vlaneseq
        %v1947 = vshrl.u32 %v1946, 7
        %v1948 = vsub.s32 0, %v1947
        %v1949 = vrot.slane %v1943, %v1948
        %v1967 = vunpack.c.l.b16 %v1927
        %v1968 = vunpack.c.l.b16 %v1928
        %v1969 = vunpack.c.l.b16 %v1929
        %v1970 = vunpack.c.l.b16 %v1930
        %v1971 = vunpack.c.l.b16 %v1931
        %v1972 = vunpack.c.l.b16 %v1932
        %v1973 = vunpack.c.l.b16 %v1933
        %v1974 = vunpack.c.l.b16 %v1934
        %v1975 = vunpack.c.l.b16 %v1935
        %v1976 = vunpack.c.l.b16 %v1936
        %v1977 = vunpack.c.l.b16 %v1937
        %v1978 = vunpack.c.l.b16 %v1938
        %v1979 = vunpack.c.l.b16 %v1939
        %v1980 = vunpack.c.l.b16 %v1940
        %v1981 = vunpack.c.l.b16 %v1941
        %v1982 = vunpack.c.l.b16 %v1942
        %v1983 = vpack.c.b16 %v1968, %v1967
        %v1984 = vpack.c.b16 %v1970, %v1969
        %v1985 = vpack.c.b16 %v1972, %v1971
        %v1986 = vpack.c.b16 %v1974, %v1973
        %v1987 = vpack.c.b16 %v1976, %v1975
        %v1988 = vpack.c.b16 %v1978, %v1977
        %v1989 = vpack.c.b16 %v1980, %v1979
        %v1990 = vpack.c.b16 %v1982, %v1981
        %1999 = vmatprep.subr.bf16.mxu0 0
        %2000 = vmatpush1.bf16.msra.mxu0 %v1983
        %2001 = vmatprep.subr.bf16.mxu0 0
        %2002 = vmatpush1.bf16.msra.mxu0 %v1984
        %2003 = vmatprep.subr.bf16.mxu0 0
        %2004 = vmatpush1.bf16.msra.mxu0 %v1985
        %2005 = vmatprep.subr.bf16.mxu0 0
        %2006 = vmatpush1.bf16.msra.mxu0 %v1986
        %2007 = vmatprep.subr.bf16.mxu0 0
        %2008 = vmatpush1.bf16.msra.mxu0 %v1987
        %2009 = vmatprep.subr.bf16.mxu0 0
        %2010 = vmatpush1.bf16.msra.mxu0 %v1988
        %2011 = vmatprep.subr.bf16.mxu0 0
        %2012 = vmatpush1.bf16.msra.mxu0 %v1989
        %2013 = vmatprep.subr.bf16.mxu0 0
        %2014 = vmatpush1.bf16.msra.mxu0 %v1990
        %2015 = vmatprep.subr.bf16.mxu0 0
        %2016 = vmatpush1.bf16.msra.mxu0 0
        %2017 = vmatprep.subr.bf16.mxu0 0
        %2018 = vmatpush1.bf16.msra.mxu0 0
        %2019 = vmatprep.subr.bf16.mxu0 0
        %2020 = vmatpush1.bf16.msra.mxu0 0
        %2021 = vmatprep.subr.bf16.mxu0 0
        %2022 = vmatpush1.bf16.msra.mxu0 0
        %2023 = vmatprep.subr.bf16.mxu0 0
        %2024 = vmatpush1.bf16.msra.mxu0 0
        %2025 = vmatprep.subr.bf16.mxu0 0
        %2026 = vmatpush1.bf16.msra.mxu0 0
        %2027 = vmatprep.subr.bf16.mxu0 0
        %2028 = vmatpush1.bf16.msra.mxu0 0
        %2029 = vmatprep.subr.bf16.mxu0 0
        %2030 = vmatpush1.bf16.msra.mxu0 0
        %2031 = vmatprep.mubr.bf16.mxu0 0
        %2032 = vmatmul.mubr.bf16.gmra.mrb[0].mxu0 %v1944
        %v2033 = vpop.f32.mrb[0].mxu0
        %v2034 = vadd.f32 %v1949, %v2033
        %v2035 = vpop.f32.mrb[0].mxu0
        %v2036 = vpop.f32.mrb[0].mxu0
        %v2037 = vpop.f32.mrb[0].mxu0
        %2038 = vdwg.mxu0
        %v2039 = vmax.f32 %v2034, 0.0
        %v2040 = vld [vmem:[%s11] sm:$0xf]
        %v2041 = vld [vmem:[%s11 + $0x4] sm:$0xf]
        %v2042 = vld [vmem:[%s11 + $0x8] sm:$0xf]
        %v2043 = vld [vmem:[%s11 + $0xc] sm:$0xf]
        %v2044 = vld [vmem:[%s11 + $0x10] sm:$0xf]
        %v2045 = vld [vmem:[%s11 + $0x14] sm:$0xf]
        %v2046 = vld [vmem:[%s11 + $0x18] sm:$0xf]
        %v2047 = vld [vmem:[%s11 + $0x1c] sm:$0xf]
        %v2048 = vld [vmem:[%s11 + $0x20] sm:$0xf]
        %v2049 = vld [vmem:[%s11 + $0x24] sm:$0xf]
        %v2050 = vld [vmem:[%s11 + $0x28] sm:$0xf]
        %v2051 = vld [vmem:[%s11 + $0x2c] sm:$0xf]
        %v2052 = vld [vmem:[%s11 + $0x30] sm:$0xf]
        %v2053 = vld [vmem:[%s11 + $0x34] sm:$0xf]
        %v2054 = vld [vmem:[%s11 + $0x38] sm:$0xf]
        %v2055 = vld [vmem:[%s11 + $0x3c] sm:$0xf]
        %v2056 = vld [vmem:[%s12] sm:$0x1]
        %v2057 = vpack.c.bf16 %v2039, %v2039
        %v2059 = vlaneseq
        %v2060 = vshrl.u32 %v2059, 7
        %v2061 = vsub.s32 0, %v2060
        %v2062 = vrot.slane %v2056, %v2061
        %v2080 = vunpack.c.l.b16 %v2040
        %v2081 = vunpack.c.l.b16 %v2041
        %v2082 = vunpack.c.l.b16 %v2042
        %v2083 = vunpack.c.l.b16 %v2043
        %v2084 = vunpack.c.l.b16 %v2044
        %v2085 = vunpack.c.l.b16 %v2045
        %v2086 = vunpack.c.l.b16 %v2046
        %v2087 = vunpack.c.l.b16 %v2047
        %v2088 = vunpack.c.l.b16 %v2048
        %v2089 = vunpack.c.l.b16 %v2049
        %v2090 = vunpack.c.l.b16 %v2050
        %v2091 = vunpack.c.l.b16 %v2051
        %v2092 = vunpack.c.l.b16 %v2052
        %v2093 = vunpack.c.l.b16 %v2053
        %v2094 = vunpack.c.l.b16 %v2054
        %v2095 = vunpack.c.l.b16 %v2055
        %v2096 = vpack.c.b16 %v2081, %v2080
        %v2097 = vpack.c.b16 %v2083, %v2082
        %v2098 = vpack.c.b16 %v2085, %v2084
        %v2099 = vpack.c.b16 %v2087, %v2086
        %v2100 = vpack.c.b16 %v2089, %v2088
        %v2101 = vpack.c.b16 %v2091, %v2090
        %v2102 = vpack.c.b16 %v2093, %v2092
        %v2103 = vpack.c.b16 %v2095, %v2094
        %2112 = vmatprep.subr.bf16.mxu0 0
        %2113 = vmatpush1.bf16.msra.mxu0 %v2096
        %2114 = vmatprep.subr.bf16.mxu0 0
        %2115 = vmatpush1.bf16.msra.mxu0 %v2097
        %2116 = vmatprep.subr.bf16.mxu0 0
        %2117 = vmatpush1.bf16.msra.mxu0 %v2098
        %2118 = vmatprep.subr.bf16.mxu0 0
        %2119 = vmatpush1.bf16.msra.mxu0 %v2099
        %2120 = vmatprep.subr.bf16.mxu0 0
        %2121 = vmatpush1.bf16.msra.mxu0 %v2100
        %2122 = vmatprep.subr.bf16.mxu0 0
        %2123 = vmatpush1.bf16.msra.mxu0 %v2101
        %2124 = vmatprep.subr.bf16.mxu0 0
        %2125 = vmatpush1.bf16.msra.mxu0 %v2102
        %2126 = vmatprep.subr.bf16.mxu0 0
        %2127 = vmatpush1.bf16.msra.mxu0 %v2103
        %2128 = vmatprep.subr.bf16.mxu0 0
        %2129 = vmatpush1.bf16.msra.mxu0 0
        %2130 = vmatprep.subr.bf16.mxu0 0
        %2131 = vmatpush1.bf16.msra.mxu0 0
        %2132 = vmatprep.subr.bf16.mxu0 0
        %2133 = vmatpush1.bf16.msra.mxu0 0
        %2134 = vmatprep.subr.bf16.mxu0 0
        %2135 = vmatpush1.bf16.msra.mxu0 0
        %2136 = vmatprep.subr.bf16.mxu0 0
        %2137 = vmatpush1.bf16.msra.mxu0 0
        %2138 = vmatprep.subr.bf16.mxu0 0
        %2139 = vmatpush1.bf16.msra.mxu0 0
        %2140 = vmatprep.subr.bf16.mxu0 0
        %2141 = vmatpush1.bf16.msra.mxu0 0
        %2142 = vmatprep.subr.bf16.mxu0 0
        %2143 = vmatpush1.bf16.msra.mxu0 0
        %2144 = vmatprep.mubr.bf16.mxu0 0
        %2145 = vmatmul.mubr.bf16.gmra.mrb[0].mxu0 %v2057
        %v2146 = vpop.f32.mrb[0].mxu0
        %v2147 = vadd.f32 %v2062, %v2146
        %v2148 = vpop.f32.mrb[0].mxu0
        %v2149 = vpop.f32.mrb[0].mxu0
        %v2150 = vpop.f32.mrb[0].mxu0
        %2151 = vdwg.mxu0
        %v2152 = vmax.f32 %v2147, 0.0
        %v2153 = vld [vmem:[%s13] sm:$0xf]
        %v2154 = vld [vmem:[%s13 + $0x4] sm:$0xf]
        %v2155 = vld [vmem:[%s13 + $0x8] sm:$0xf]
        %v2156 = vld [vmem:[%s13 + $0xc] sm:$0xf]
        %v2157 = vld [vmem:[%s13 + $0x10] sm:$0xf]
        %v2158 = vld [vmem:[%s13 + $0x14] sm:$0xf]
        %v2159 = vld [vmem:[%s13 + $0x18] sm:$0xf]
        %v2160 = vld [vmem:[%s13 + $0x1c] sm:$0xf]
        %v2161 = vld [vmem:[%s13 + $0x20] sm:$0xf]
        %v2162 = vld [vmem:[%s13 + $0x24] sm:$0xf]
        %v2163 = vld [vmem:[%s13 + $0x28] sm:$0xf]
        %v2164 = vld [vmem:[%s13 + $0x2c] sm:$0xf]
        %v2165 = vld [vmem:[%s13 + $0x30] sm:$0xf]
        %v2166 = vld [vmem:[%s13 + $0x34] sm:$0xf]
        %v2167 = vld [vmem:[%s13 + $0x38] sm:$0xf]
        %v2168 = vld [vmem:[%s13 + $0x3c] sm:$0xf]
        %v2169 = vld [vmem:[%s14] sm:$0x1]
        %v2170 = vpack.c.bf16 %v2152, %v2152
        %v2172 = vlaneseq
        %v2173 = vshrl.u32 %v2172, 7
        %v2174 = vsub.s32 0, %v2173
        %v2175 = vrot.slane %v2169, %v2174
        %v2193 = vunpack.c.l.b16 %v2153
        %v2194 = vunpack.c.l.b16 %v2154
        %v2195 = vunpack.c.l.b16 %v2155
        %v2196 = vunpack.c.l.b16 %v2156
        %v2197 = vunpack.c.l.b16 %v2157
        %v2198 = vunpack.c.l.b16 %v2158
        %v2199 = vunpack.c.l.b16 %v2159
        %v2200 = vunpack.c.l.b16 %v2160
        %v2201 = vunpack.c.l.b16 %v2161
        %v2202 = vunpack.c.l.b16 %v2162
        %v2203 = vunpack.c.l.b16 %v2163
        %v2204 = vunpack.c.l.b16 %v2164
        %v2205 = vunpack.c.l.b16 %v2165
        %v2206 = vunpack.c.l.b16 %v2166
        %v2207 = vunpack.c.l.b16 %v2167
        %v2208 = vunpack.c.l.b16 %v2168
        %v2209 = vpack.c.b16 %v2194, %v2193
        %v2210 = vpack.c.b16 %v2196, %v2195
        %v2211 = vpack.c.b16 %v2198, %v2197
        %v2212 = vpack.c.b16 %v2200, %v2199
        %v2213 = vpack.c.b16 %v2202, %v2201
        %v2214 = vpack.c.b16 %v2204, %v2203
        %v2215 = vpack.c.b16 %v2206, %v2205
        %v2216 = vpack.c.b16 %v2208, %v2207
        %2225 = vmatprep.subr.bf16.mxu0 0
        %2226 = vmatpush1.bf16.msra.mxu0 %v2209
        %2227 = vmatprep.subr.bf16.mxu0 0
        %2228 = vmatpush1.bf16.msra.mxu0 %v2210
        %2229 = vmatprep.subr.bf16.mxu0 0
        %2230 = vmatpush1.bf16.msra.mxu0 %v2211
        %2231 = vmatprep.subr.bf16.mxu0 0
        %2232 = vmatpush1.bf16.msra.mxu0 %v2212
        %2233 = vmatprep.subr.bf16.mxu0 0
        %2234 = vmatpush1.bf16.msra.mxu0 %v2213
        %2235 = vmatprep.subr.bf16.mxu0 0
        %2236 = vmatpush1.bf16.msra.mxu0 %v2214
        %2237 = vmatprep.subr.bf16.mxu0 0
        %2238 = vmatpush1.bf16.msra.mxu0 %v2215
        %2239 = vmatprep.subr.bf16.mxu0 0
        %2240 = vmatpush1.bf16.msra.mxu0 %v2216
        %2241 = vmatprep.subr.bf16.mxu0 0
        %2242 = vmatpush1.bf16.msra.mxu0 0
        %2243 = vmatprep.subr.bf16.mxu0 0
        %2244 = vmatpush1.bf16.msra.mxu0 0
        %2245 = vmatprep.subr.bf16.mxu0 0
        %2246 = vmatpush1.bf16.msra.mxu0 0
        %2247 = vmatprep.subr.bf16.mxu0 0
        %2248 = vmatpush1.bf16.msra.mxu0 0
        %2249 = vmatprep.subr.bf16.mxu0 0
        %2250 = vmatpush1.bf16.msra.mxu0 0
        %2251 = vmatprep.subr.bf16.mxu0 0
        %2252 = vmatpush1.bf16.msra.mxu0 0
        %2253 = vmatprep.subr.bf16.mxu0 0
        %2254 = vmatpush1.bf16.msra.mxu0 0
        %2255 = vmatprep.subr.bf16.mxu0 0
        %2256 = vmatpush1.bf16.msra.mxu0 0
        %2257 = vmatprep.mubr.bf16.mxu0 0
        %2258 = vmatmul.mubr.bf16.gmra.mrb[0].mxu0 %v2170
        %v2259 = vpop.f32.mrb[0].mxu0
        %v2260 = vadd.f32 %v2175, %v2259
        %v2261 = vpop.f32.mrb[0].mxu0
        %v2262 = vpop.f32.mrb[0].mxu0
        %v2263 = vpop.f32.mrb[0].mxu0
        %2264 = vdwg.mxu0
        %v2265 = vmax.f32 %v2260, 0.0
        %v2266 = vld [vmem:[%s15] sm:$0xff]
        %v2267 = vld [vmem:[%s15 + $0x8] sm:$0xff]
        %v2268 = vld [vmem:[%s15 + $0x10] sm:$0xff]
        %v2269 = vld [vmem:[%s15 + $0x18] sm:$0xff]
        %v2270 = vld [vmem:[%s15 + $0x20] sm:$0xff]
        %v2271 = vld [vmem:[%s15 + $0x28] sm:$0xff]
        %v2272 = vld [vmem:[%s15 + $0x30] sm:$0xff]
        %v2273 = vld [vmem:[%s15 + $0x38] sm:$0xff]
        %v2274 = vld [vmem:[%s15 + $0x40] sm:$0xff]
        %v2275 = vld [vmem:[%s15 + $0x48] sm:$0xff]
        %v2276 = vld [vmem:[%s15 + $0x50] sm:$0xff]
        %v2277 = vld [vmem:[%s15 + $0x58] sm:$0xff]
        %v2278 = vld [vmem:[%s15 + $0x60] sm:$0xff]
        %v2279 = vld [vmem:[%s15 + $0x68] sm:$0xff]
        %v2280 = vld [vmem:[%s15 + $0x70] sm:$0xff]
        %v2281 = vld [vmem:[%s15 + $0x78] sm:$0xff]
        %v2282 = vld [vmem:[%s16] sm:$0x3]
        %v2283 = vpack.c.bf16 %v2265, %v2265
        %v2285 = vlaneseq
        %v2286 = vshrl.u32 %v2285, 7
        %v2287 = vsub.s32 0, %v2286
        %v2288 = vrot.slane %v2282, %v2287
        %v2289 = vlaneseq
        %v2290 = vshrl.u32 %v2289, 7
        %v2291 = vsub.s32 1, %v2290
        %v2292 = vrot.slane %v2282, %v2291
        %v2311 = vunpack.c.l.b16 %v2266
        %v2312 = vunpack.c.h.b16 %v2266
        %v2313 = vunpack.c.l.b16 %v2267
        %v2314 = vunpack.c.h.b16 %v2267
        %v2315 = vunpack.c.l.b16 %v2268
        %v2316 = vunpack.c.h.b16 %v2268
        %v2317 = vunpack.c.l.b16 %v2269
        %v2318 = vunpack.c.h.b16 %v2269
        %v2319 = vunpack.c.l.b16 %v2270
        %v2320 = vunpack.c.h.b16 %v2270
        %v2321 = vunpack.c.l.b16 %v2271
        %v2322 = vunpack.c.h.b16 %v2271
        %v2323 = vunpack.c.l.b16 %v2272
        %v2324 = vunpack.c.h.b16 %v2272
        %v2325 = vunpack.c.l.b16 %v2273
        %v2326 = vunpack.c.h.b16 %v2273
        %v2327 = vunpack.c.l.b16 %v2274
        %v2328 = vunpack.c.h.b16 %v2274
        %v2329 = vunpack.c.l.b16 %v2275
        %v2330 = vunpack.c.h.b16 %v2275
        %v2331 = vunpack.c.l.b16 %v2276
        %v2332 = vunpack.c.h.b16 %v2276
        %v2333 = vunpack.c.l.b16 %v2277
        %v2334 = vunpack.c.h.b16 %v2277
        %v2335 = vunpack.c.l.b16 %v2278
        %v2336 = vunpack.c.h.b16 %v2278
        %v2337 = vunpack.c.l.b16 %v2279
        %v2338 = vunpack.c.h.b16 %v2279
        %v2339 = vunpack.c.l.b16 %v2280
        %v2340 = vunpack.c.h.b16 %v2280
        %v2341 = vunpack.c.l.b16 %v2281
        %v2342 = vunpack.c.h.b16 %v2281
        %v2343 = vpack.c.b16 %v2313, %v2311
        %v2344 = vpack.c.b16 %v2314, %v2312
        %v2345 = vpack.c.b16 %v2317, %v2315
        %v2346 = vpack.c.b16 %v2318, %v2316
        %v2347 = vpack.c.b16 %v2321, %v2319
        %v2348 = vpack.c.b16 %v2322, %v2320
        %v2349 = vpack.c.b16 %v2325, %v2323
        %v2350 = vpack.c.b16 %v2326, %v2324
        %v2351 = vpack.c.b16 %v2329, %v2327
        %v2352 = vpack.c.b16 %v2330, %v2328
        %v2353 = vpack.c.b16 %v2333, %v2331
        %v2354 = vpack.c.b16 %v2334, %v2332
        %v2355 = vpack.c.b16 %v2337, %v2335
        %v2356 = vpack.c.b16 %v2338, %v2336
        %v2357 = vpack.c.b16 %v2341, %v2339
        %v2358 = vpack.c.b16 %v2342, %v2340
        %2375 = vmatprep.subr.bf16.mxu0 %v2344
        %2376 = vmatpush1.bf16.msra.mxu0 %v2343
        %2377 = vmatprep.subr.bf16.mxu0 %v2346
        %2378 = vmatpush1.bf16.msra.mxu0 %v2345
        %2379 = vmatprep.subr.bf16.mxu0 %v2348
        %2380 = vmatpush1.bf16.msra.mxu0 %v2347
        %2381 = vmatprep.subr.bf16.mxu0 %v2350
        %2382 = vmatpush1.bf16.msra.mxu0 %v2349
        %2383 = vmatprep.subr.bf16.mxu0 %v2352
        %2384 = vmatpush1.bf16.msra.mxu0 %v2351
        %2385 = vmatprep.subr.bf16.mxu0 %v2354
        %2386 = vmatpush1.bf16.msra.mxu0 %v2353
        %2387 = vmatprep.subr.bf16.mxu0 %v2356
        %2388 = vmatpush1.bf16.msra.mxu0 %v2355
        %2389 = vmatprep.subr.bf16.mxu0 %v2358
        %2390 = vmatpush1.bf16.msra.mxu0 %v2357
        %2391 = vmatprep.subr.bf16.mxu0 0
        %2392 = vmatpush1.bf16.msra.mxu0 0
        %2393 = vmatprep.subr.bf16.mxu0 0
        %2394 = vmatpush1.bf16.msra.mxu0 0
        %2395 = vmatprep.subr.bf16.mxu0 0
        %2396 = vmatpush1.bf16.msra.mxu0 0
        %2397 = vmatprep.subr.bf16.mxu0 0
        %2398 = vmatpush1.bf16.msra.mxu0 0
        %2399 = vmatprep.subr.bf16.mxu0 0
        %2400 = vmatpush1.bf16.msra.mxu0 0
        %2401 = vmatprep.subr.bf16.mxu0 0
        %2402 = vmatpush1.bf16.msra.mxu0 0
        %2403 = vmatprep.subr.bf16.mxu0 0
        %2404 = vmatpush1.bf16.msra.mxu0 0
        %2405 = vmatprep.subr.bf16.mxu0 0
        %2406 = vmatpush1.bf16.msra.mxu0 0
        %2407 = vmatprep.mubr.bf16.mxu0 0
        %2408 = vmatmul.mubr.bf16.gmra.mrb[0].mxu0 %v2283
        %v2409 = vpop.f32.mrb[0].mxu0
        %v2410 = vadd.f32 %v2288, %v2409
        %v2411 = vpop.f32.mrb[0].mxu0
        %v2412 = vadd.f32 %v2292, %v2411
        %v2413 = vpop.f32.mrb[0].mxu0
        %v2414 = vpop.f32.mrb[0].mxu0
        %2415 = vdwg.mxu0
        %v2416 = vmax.f32 %v2410, 0.0
        %v2417 = vmax.f32 %v2412, 0.0
        %v2418 = vld [vmem:[%s17] sm:$0xff]
        %v2419 = vld [vmem:[%s17 + $0x8] sm:$0xff]
        %v2420 = vld [vmem:[%s17 + $0x10] sm:$0xff]
        %v2421 = vld [vmem:[%s17 + $0x18] sm:$0xff]
        %v2422 = vld [vmem:[%s17 + $0x20] sm:$0xff]
        %v2423 = vld [vmem:[%s17 + $0x28] sm:$0xff]
        %v2424 = vld [vmem:[%s17 + $0x30] sm:$0xff]
        %v2425 = vld [vmem:[%s17 + $0x38] sm:$0xff]
        %v2426 = vld [vmem:[%s17 + $0x40] sm:$0xff]
        %v2427 = vld [vmem:[%s17 + $0x48] sm:$0xff]
        %v2428 = vld [vmem:[%s17 + $0x50] sm:$0xff]
        %v2429 = vld [vmem:[%s17 + $0x58] sm:$0xff]
        %v2430 = vld [vmem:[%s17 + $0x60] sm:$0xff]
        %v2431 = vld [vmem:[%s17 + $0x68] sm:$0xff]
        %v2432 = vld [vmem:[%s17 + $0x70] sm:$0xff]
        %v2433 = vld [vmem:[%s17 + $0x78] sm:$0xff]
        %v2434 = vld [vmem:[%s17 + $0x80] sm:$0xff]
        %v2435 = vld [vmem:[%s17 + $0x88] sm:$0xff]
        %v2436 = vld [vmem:[%s17 + $0x90] sm:$0xff]
        %v2437 = vld [vmem:[%s17 + $0x98] sm:$0xff]
        %v2438 = vld [vmem:[%s17 + $0xa0] sm:$0xff]
        %v2439 = vld [vmem:[%s17 + $0xa8] sm:$0xff]
        %v2440 = vld [vmem:[%s17 + $0xb0] sm:$0xff]
        %v2441 = vld [vmem:[%s17 + $0xb8] sm:$0xff]
        %v2442 = vld [vmem:[%s17 + $0xc0] sm:$0xff]
        %v2443 = vld [vmem:[%s17 + $0xc8] sm:$0xff]
        %v2444 = vld [vmem:[%s17 + $0xd0] sm:$0xff]
        %v2445 = vld [vmem:[%s17 + $0xd8] sm:$0xff]
        %v2446 = vld [vmem:[%s17 + $0xe0] sm:$0xff]
        %v2447 = vld [vmem:[%s17 + $0xe8] sm:$0xff]
        %v2448 = vld [vmem:[%s17 + $0xf0] sm:$0xff]
        %v2449 = vld [vmem:[%s17 + $0xf8] sm:$0xff]
        %v2450 = vld [vmem:[%s17 + $0x100] sm:$0xff]
        %v2451 = vld [vmem:[%s17 + $0x108] sm:$0xff]
        %v2452 = vld [vmem:[%s17 + $0x110] sm:$0xff]
        %v2453 = vld [vmem:[%s17 + $0x118] sm:$0xff]
        %v2454 = vld [vmem:[%s17 + $0x120] sm:$0xff]
        %v2455 = vld [vmem:[%s17 + $0x128] sm:$0xff]
        %v2456 = vld [vmem:[%s17 + $0x130] sm:$0xff]
        %v2457 = vld [vmem:[%s17 + $0x138] sm:$0xff]
        %v2458 = vld [vmem:[%s17 + $0x140] sm:$0xff]
        %v2459 = vld [vmem:[%s17 + $0x148] sm:$0xff]
        %v2460 = vld [vmem:[%s17 + $0x150] sm:$0xff]
        %v2461 = vld [vmem:[%s17 + $0x158] sm:$0xff]
        %v2462 = vld [vmem:[%s17 + $0x160] sm:$0xff]
        %v2463 = vld [vmem:[%s17 + $0x168] sm:$0xff]
        %v2464 = vld [vmem:[%s17 + $0x170] sm:$0xff]
        %v2465 = vld [vmem:[%s17 + $0x178] sm:$0xff]
        %v2466 = vld [vmem:[%s17 + $0x180] sm:$0xff]
        %v2467 = vld [vmem:[%s17 + $0x188] sm:$0xff]
        %v2468 = vld [vmem:[%s17 + $0x190] sm:$0xff]
        %v2469 = vld [vmem:[%s17 + $0x198] sm:$0xff]
        %v2470 = vld [vmem:[%s17 + $0x1a0] sm:$0xff]
        %v2471 = vld [vmem:[%s17 + $0x1a8] sm:$0xff]
        %v2472 = vld [vmem:[%s17 + $0x1b0] sm:$0xff]
        %v2473 = vld [vmem:[%s17 + $0x1b8] sm:$0xff]
        %v2474 = vld [vmem:[%s17 + $0x1c0] sm:$0xff]
        %v2475 = vld [vmem:[%s17 + $0x1c8] sm:$0xff]
        %v2476 = vld [vmem:[%s17 + $0x1d0] sm:$0xff]
        %v2477 = vld [vmem:[%s17 + $0x1d8] sm:$0xff]
        %v2478 = vld [vmem:[%s17 + $0x1e0] sm:$0xff]
        %v2479 = vld [vmem:[%s17 + $0x1e8] sm:$0xff]
        %v2480 = vld [vmem:[%s17 + $0x1f0] sm:$0xff]
        %v2481 = vld [vmem:[%s17 + $0x1f8] sm:$0xff]
        %v2482 = vld [vmem:[%s18] sm:$0xf]
        %v2483 = vpack.c.bf16 %v2416, %v2416
        %v2484 = vpack.c.bf16 %v2417, %v2417
        %v2486 = vlaneseq
        %v2487 = vshrl.u32 %v2486, 7
        %v2488 = vsub.s32 0, %v2487
        %v2489 = vrot.slane %v2482, %v2488
        %v2490 = vlaneseq
        %v2491 = vshrl.u32 %v2490, 7
        %v2492 = vsub.s32 1, %v2491
        %v2493 = vrot.slane %v2482, %v2492
        %v2494 = vlaneseq
        %v2495 = vshrl.u32 %v2494, 7
        %v2496 = vsub.s32 2, %v2495
        %v2497 = vrot.slane %v2482, %v2496
        %v2498 = vlaneseq
        %v2499 = vshrl.u32 %v2498, 7
        %v2500 = vsub.s32 3, %v2499
        %v2501 = vrot.slane %v2482, %v2500
        %v2570 = vunpack.c.l.b16 %v2418
        %v2571 = vunpack.c.h.b16 %v2418
        %v2572 = vunpack.c.l.b16 %v2419
        %v2573 = vunpack.c.h.b16 %v2419
        %v2574 = vunpack.c.l.b16 %v2420
        %v2575 = vunpack.c.h.b16 %v2420
        %v2576 = vunpack.c.l.b16 %v2421
        %v2577 = vunpack.c.h.b16 %v2421
        %v2578 = vunpack.c.l.b16 %v2422
        %v2579 = vunpack.c.h.b16 %v2422
        %v2580 = vunpack.c.l.b16 %v2423
        %v2581 = vunpack.c.h.b16 %v2423
        %v2582 = vunpack.c.l.b16 %v2424
        %v2583 = vunpack.c.h.b16 %v2424
        %v2584 = vunpack.c.l.b16 %v2425
        %v2585 = vunpack.c.h.b16 %v2425
        %v2586 = vunpack.c.l.b16 %v2426
        %v2587 = vunpack.c.h.b16 %v2426
        %v2588 = vunpack.c.l.b16 %v2427
        %v2589 = vunpack.c.h.b16 %v2427
        %v2590 = vunpack.c.l.b16 %v2428
        %v2591 = vunpack.c.h.b16 %v2428
        %v2592 = vunpack.c.l.b16 %v2429
        %v2593 = vunpack.c.h.b16 %v2429
        %v2594 = vunpack.c.l.b16 %v2430
        %v2595 = vunpack.c.h.b16 %v2430
        %v2596 = vunpack.c.l.b16 %v2431
        %v2597 = vunpack.c.h.b16 %v2431
        %v2598 = vunpack.c.l.b16 %v2432
        %v2599 = vunpack.c.h.b16 %v2432
        %v2600 = vunpack.c.l.b16 %v2433
        %v2601 = vunpack.c.h.b16 %v2433
        %v2602 = vunpack.c.l.b16 %v2434
        %v2603 = vunpack.c.h.b16 %v2434
        %v2604 = vunpack.c.l.b16 %v2435
        %v2605 = vunpack.c.h.b16 %v2435
        %v2606 = vunpack.c.l.b16 %v2436
        %v2607 = vunpack.c.h.b16 %v2436
        %v2608 = vunpack.c.l.b16 %v2437
        %v2609 = vunpack.c.h.b16 %v2437
        %v2610 = vunpack.c.l.b16 %v2438
        %v2611 = vunpack.c.h.b16 %v2438
        %v2612 = vunpack.c.l.b16 %v2439
        %v2613 = vunpack.c.h.b16 %v2439
        %v2614 = vunpack.c.l.b16 %v2440
        %v2615 = vunpack.c.h.b16 %v2440
        %v2616 = vunpack.c.l.b16 %v2441
        %v2617 = vunpack.c.h.b16 %v2441
        %v2618 = vunpack.c.l.b16 %v2442
        %v2619 = vunpack.c.h.b16 %v2442
        %v2620 = vunpack.c.l.b16 %v2443
        %v2621 = vunpack.c.h.b16 %v2443
        %v2622 = vunpack.c.l.b16 %v2444
        %v2623 = vunpack.c.h.b16 %v2444
        %v2624 = vunpack.c.l.b16 %v2445
        %v2625 = vunpack.c.h.b16 %v2445
        %v2626 = vunpack.c.l.b16 %v2446
        %v2627 = vunpack.c.h.b16 %v2446
        %v2628 = vunpack.c.l.b16 %v2447
        %v2629 = vunpack.c.h.b16 %v2447
        %v2630 = vunpack.c.l.b16 %v2448
        %v2631 = vunpack.c.h.b16 %v2448
        %v2632 = vunpack.c.l.b16 %v2449
        %v2633 = vunpack.c.h.b16 %v2449
        %v2634 = vunpack.c.l.b16 %v2450
        %v2635 = vunpack.c.h.b16 %v2450
        %v2636 = vunpack.c.l.b16 %v2451
        %v2637 = vunpack.c.h.b16 %v2451
        %v2638 = vunpack.c.l.b16 %v2452
        %v2639 = vunpack.c.h.b16 %v2452
        %v2640 = vunpack.c.l.b16 %v2453
        %v2641 = vunpack.c.h.b16 %v2453
        %v2642 = vunpack.c.l.b16 %v2454
        %v2643 = vunpack.c.h.b16 %v2454
        %v2644 = vunpack.c.l.b16 %v2455
        %v2645 = vunpack.c.h.b16 %v2455
        %v2646 = vunpack.c.l.b16 %v2456
        %v2647 = vunpack.c.h.b16 %v2456
        %v2648 = vunpack.c.l.b16 %v2457
        %v2649 = vunpack.c.h.b16 %v2457
        %v2650 = vunpack.c.l.b16 %v2458
        %v2651 = vunpack.c.h.b16 %v2458
        %v2652 = vunpack.c.l.b16 %v2459
        %v2653 = vunpack.c.h.b16 %v2459
        %v2654 = vunpack.c.l.b16 %v2460
        %v2655 = vunpack.c.h.b16 %v2460
        %v2656 = vunpack.c.l.b16 %v2461
        %v2657 = vunpack.c.h.b16 %v2461
        %v2658 = vunpack.c.l.b16 %v2462
        %v2659 = vunpack.c.h.b16 %v2462
        %v2660 = vunpack.c.l.b16 %v2463
        %v2661 = vunpack.c.h.b16 %v2463
        %v2662 = vunpack.c.l.b16 %v2464
        %v2663 = vunpack.c.h.b16 %v2464
        %v2664 = vunpack.c.l.b16 %v2465
        %v2665 = vunpack.c.h.b16 %v2465
        %v2666 = vunpack.c.l.b16 %v2466
        %v2667 = vunpack.c.h.b16 %v2466
        %v2668 = vunpack.c.l.b16 %v2467
        %v2669 = vunpack.c.h.b16 %v2467
        %v2670 = vunpack.c.l.b16 %v2468
        %v2671 = vunpack.c.h.b16 %v2468
        %v2672 = vunpack.c.l.b16 %v2469
        %v2673 = vunpack.c.h.b16 %v2469
        %v2674 = vunpack.c.l.b16 %v2470
        %v2675 = vunpack.c.h.b16 %v2470
        %v2676 = vunpack.c.l.b16 %v2471
        %v2677 = vunpack.c.h.b16 %v2471
        %v2678 = vunpack.c.l.b16 %v2472
        %v2679 = vunpack.c.h.b16 %v2472
        %v2680 = vunpack.c.l.b16 %v2473
        %v2681 = vunpack.c.h.b16 %v2473
        %v2682 = vunpack.c.l.b16 %v2474
        %v2683 = vunpack.c.h.b16 %v2474
        %v2684 = vunpack.c.l.b16 %v2475
        %v2685 = vunpack.c.h.b16 %v2475
        %v2686 = vunpack.c.l.b16 %v2476
        %v2687 = vunpack.c.h.b16 %v2476
        %v2688 = vunpack.c.l.b16 %v2477
        %v2689 = vunpack.c.h.b16 %v2477
        %v2690 = vunpack.c.l.b16 %v2478
        %v2691 = vunpack.c.h.b16 %v2478
        %v2692 = vunpack.c.l.b16 %v2479
        %v2693 = vunpack.c.h.b16 %v2479
        %v2694 = vunpack.c.l.b16 %v2480
        %v2695 = vunpack.c.h.b16 %v2480
        %v2696 = vunpack.c.l.b16 %v2481
        %v2697 = vunpack.c.h.b16 %v2481
        %v2698 = vpack.c.b16 %v2574, %v2570
        %v2699 = vpack.c.b16 %v2575, %v2571
        %v2700 = vpack.c.b16 %v2576, %v2572
        %v2701 = vpack.c.b16 %v2577, %v2573
        %v2702 = vpack.c.b16 %v2582, %v2578
        %v2703 = vpack.c.b16 %v2583, %v2579
        %v2704 = vpack.c.b16 %v2584, %v2580
        %v2705 = vpack.c.b16 %v2585, %v2581
        %v2706 = vpack.c.b16 %v2590, %v2586
        %v2707 = vpack.c.b16 %v2591, %v2587
        %v2708 = vpack.c.b16 %v2592, %v2588
        %v2709 = vpack.c.b16 %v2593, %v2589
        %v2710 = vpack.c.b16 %v2598, %v2594
        %v2711 = vpack.c.b16 %v2599, %v2595
        %v2712 = vpack.c.b16 %v2600, %v2596
        %v2713 = vpack.c.b16 %v2601, %v2597
        %v2714 = vpack.c.b16 %v2606, %v2602
        %v2715 = vpack.c.b16 %v2607, %v2603
        %v2716 = vpack.c.b16 %v2608, %v2604
        %v2717 = vpack.c.b16 %v2609, %v2605
        %v2718 = vpack.c.b16 %v2614, %v2610
        %v2719 = vpack.c.b16 %v2615, %v2611
        %v2720 = vpack.c.b16 %v2616, %v2612
        %v2721 = vpack.c.b16 %v2617, %v2613
        %v2722 = vpack.c.b16 %v2622, %v2618
        %v2723 = vpack.c.b16 %v2623, %v2619
        %v2724 = vpack.c.b16 %v2624, %v2620
        %v2725 = vpack.c.b16 %v2625, %v2621
        %v2726 = vpack.c.b16 %v2630, %v2626
        %v2727 = vpack.c.b16 %v2631, %v2627
        %v2728 = vpack.c.b16 %v2632, %v2628
        %v2729 = vpack.c.b16 %v2633, %v2629
        %v2730 = vpack.c.b16 %v2638, %v2634
        %v2731 = vpack.c.b16 %v2639, %v2635
        %v2732 = vpack.c.b16 %v2640, %v2636
        %v2733 = vpack.c.b16 %v2641, %v2637
        %v2734 = vpack.c.b16 %v2646, %v2642
        %v2735 = vpack.c.b16 %v2647, %v2643
        %v2736 = vpack.c.b16 %v2648, %v2644
        %v2737 = vpack.c.b16 %v2649, %v2645
        %v2738 = vpack.c.b16 %v2654, %v2650
        %v2739 = vpack.c.b16 %v2655, %v2651
        %v2740 = vpack.c.b16 %v2656, %v2652
        %v2741 = vpack.c.b16 %v2657, %v2653
        %v2742 = vpack.c.b16 %v2662, %v2658
        %v2743 = vpack.c.b16 %v2663, %v2659
        %v2744 = vpack.c.b16 %v2664, %v2660
        %v2745 = vpack.c.b16 %v2665, %v2661
        %v2746 = vpack.c.b16 %v2670, %v2666
        %v2747 = vpack.c.b16 %v2671, %v2667
        %v2748 = vpack.c.b16 %v2672, %v2668
        %v2749 = vpack.c.b16 %v2673, %v2669
        %v2750 = vpack.c.b16 %v2678, %v2674
        %v2751 = vpack.c.b16 %v2679, %v2675
        %v2752 = vpack.c.b16 %v2680, %v2676
        %v2753 = vpack.c.b16 %v2681, %v2677
        %v2754 = vpack.c.b16 %v2686, %v2682
        %v2755 = vpack.c.b16 %v2687, %v2683
        %v2756 = vpack.c.b16 %v2688, %v2684
        %v2757 = vpack.c.b16 %v2689, %v2685
        %v2758 = vpack.c.b16 %v2694, %v2690
        %v2759 = vpack.c.b16 %v2695, %v2691
        %v2760 = vpack.c.b16 %v2696, %v2692
        %v2761 = vpack.c.b16 %v2697, %v2693
        %2826 = vmatprep.subr.bf16.mxu0 %v2699
        %2827 = vmatpush1.bf16.msra.mxu0 %v2698
        %2828 = vmatprep.subr.bf16.mxu0 %v2703
        %2829 = vmatpush1.bf16.msra.mxu0 %v2702
        %2830 = vmatprep.subr.bf16.mxu0 %v2707
        %2831 = vmatpush1.bf16.msra.mxu0 %v2706
        %2832 = vmatprep.subr.bf16.mxu0 %v2711
        %2833 = vmatpush1.bf16.msra.mxu0 %v2710
        %2834 = vmatprep.subr.bf16.mxu0 %v2715
        %2835 = vmatpush1.bf16.msra.mxu0 %v2714
        %2836 = vmatprep.subr.bf16.mxu0 %v2719
        %2837 = vmatpush1.bf16.msra.mxu0 %v2718
        %2838 = vmatprep.subr.bf16.mxu0 %v2723
        %2839 = vmatpush1.bf16.msra.mxu0 %v2722
        %2840 = vmatprep.subr.bf16.mxu0 %v2727
        %2841 = vmatpush1.bf16.msra.mxu0 %v2726
        %2842 = vmatprep.subr.bf16.mxu0 %v2731
        %2843 = vmatpush1.bf16.msra.mxu0 %v2730
        %2844 = vmatprep.subr.bf16.mxu0 %v2735
        %2845 = vmatpush1.bf16.msra.mxu0 %v2734
        %2846 = vmatprep.subr.bf16.mxu0 %v2739
        %2847 = vmatpush1.bf16.msra.mxu0 %v2738
        %2848 = vmatprep.subr.bf16.mxu0 %v2743
        %2849 = vmatpush1.bf16.msra.mxu0 %v2742
        %2850 = vmatprep.subr.bf16.mxu0 %v2747
        %2851 = vmatpush1.bf16.msra.mxu0 %v2746
        %2852 = vmatprep.subr.bf16.mxu0 %v2751
        %2853 = vmatpush1.bf16.msra.mxu0 %v2750
        %2854 = vmatprep.subr.bf16.mxu0 %v2755
        %2855 = vmatpush1.bf16.msra.mxu0 %v2754
        %2856 = vmatprep.subr.bf16.mxu0 %v2759
        %2857 = vmatpush1.bf16.msra.mxu0 %v2758
        %2858 = vmatprep.mubr.bf16.mxu0 %v2484
        %2859 = vmatmul.mubr.bf16.gmra.mrb[0].mxu0 %v2483
        %v2860 = vpop.f32.mrb[0].mxu0
        %v2861 = vadd.f32 %v2489, %v2860
        %v2862 = vpop.f32.mrb[0].mxu0
        %v2863 = vadd.f32 %v2493, %v2862
        %v2864 = vpop.f32.mrb[0].mxu0
        %v2865 = vpop.f32.mrb[0].mxu0
        %2866 = vdwg.mxu0
        %2867 = vmatprep.subr.bf16.mxu0 %v2701
        %2868 = vmatpush1.bf16.msra.mxu0 %v2700
        %2869 = vmatprep.subr.bf16.mxu0 %v2705
        %2870 = vmatpush1.bf16.msra.mxu0 %v2704
        %2871 = vmatprep.subr.bf16.mxu0 %v2709
        %2872 = vmatpush1.bf16.msra.mxu0 %v2708
        %2873 = vmatprep.subr.bf16.mxu0 %v2713
        %2874 = vmatpush1.bf16.msra.mxu0 %v2712
        %2875 = vmatprep.subr.bf16.mxu0 %v2717
        %2876 = vmatpush1.bf16.msra.mxu0 %v2716
        %2877 = vmatprep.subr.bf16.mxu0 %v2721
        %2878 = vmatpush1.bf16.msra.mxu0 %v2720
        %2879 = vmatprep.subr.bf16.mxu0 %v2725
        %2880 = vmatpush1.bf16.msra.mxu0 %v2724
        %2881 = vmatprep.subr.bf16.mxu0 %v2729
        %2882 = vmatpush1.bf16.msra.mxu0 %v2728
        %2883 = vmatprep.subr.bf16.mxu0 %v2733
        %2884 = vmatpush1.bf16.msra.mxu0 %v2732
        %2885 = vmatprep.subr.bf16.mxu0 %v2737
        %2886 = vmatpush1.bf16.msra.mxu0 %v2736
        %2887 = vmatprep.subr.bf16.mxu0 %v2741
        %2888 = vmatpush1.bf16.msra.mxu0 %v2740
        %2889 = vmatprep.subr.bf16.mxu0 %v2745
        %2890 = vmatpush1.bf16.msra.mxu0 %v2744
        %2891 = vmatprep.subr.bf16.mxu0 %v2749
        %2892 = vmatpush1.bf16.msra.mxu0 %v2748
        %2893 = vmatprep.subr.bf16.mxu0 %v2753
        %2894 = vmatpush1.bf16.msra.mxu0 %v2752
        %2895 = vmatprep.subr.bf16.mxu0 %v2757
        %2896 = vmatpush1.bf16.msra.mxu0 %v2756
        %2897 = vmatprep.subr.bf16.mxu0 %v2761
        %2898 = vmatpush1.bf16.msra.mxu0 %v2760
        %2899 = vmatprep.mubr.bf16.mxu0 %v2484
        %2900 = vmatmul.mubr.bf16.gmra.mrb[0].mxu0 %v2483
        %v2901 = vpop.f32.mrb[0].mxu0
        %v2902 = vadd.f32 %v2497, %v2901
        %v2903 = vpop.f32.mrb[0].mxu0
        %v2904 = vadd.f32 %v2501, %v2903
        %v2905 = vpop.f32.mrb[0].mxu0
        %v2906 = vpop.f32.mrb[0].mxu0
        %2907 = vdwg.mxu0
        %v2908 = vmax.f32 %v2861, 0.0
        %v2909 = vmax.f32 %v2863, 0.0
        %v2910 = vmax.f32 %v2902, 0.0
        %v2911 = vmax.f32 %v2904, 0.0
        %v2912 = vld [vmem:[%s19] sm:$0xff]
        %v2913 = vld [vmem:[%s19 + $0x8] sm:$0xff]
        %v2914 = vld [vmem:[%s19 + $0x10] sm:$0xff]
        %v2915 = vld [vmem:[%s19 + $0x18] sm:$0xff]
        %v2916 = vld [vmem:[%s19 + $0x20] sm:$0xff]
        %v2917 = vld [vmem:[%s19 + $0x28] sm:$0xff]
        %v2918 = vld [vmem:[%s19 + $0x30] sm:$0xff]
        %v2919 = vld [vmem:[%s19 + $0x38] sm:$0xff]
        %v2920 = vld [vmem:[%s19 + $0x40] sm:$0xff]
        %v2921 = vld [vmem:[%s19 + $0x48] sm:$0xff]
        %v2922 = vld [vmem:[%s19 + $0x50] sm:$0xff]
        %v2923 = vld [vmem:[%s19 + $0x58] sm:$0xff]
        %v2924 = vld [vmem:[%s19 + $0x60] sm:$0xff]
        %v2925 = vld [vmem:[%s19 + $0x68] sm:$0xff]
        %v2926 = vld [vmem:[%s19 + $0x70] sm:$0xff]
        %v2927 = vld [vmem:[%s19 + $0x78] sm:$0xff]
        %v2928 = vld [vmem:[%s19 + $0x80] sm:$0xff]
        %v2929 = vld [vmem:[%s19 + $0x88] sm:$0xff]
        %v2930 = vld [vmem:[%s19 + $0x90] sm:$0xff]
        %v2931 = vld [vmem:[%s19 + $0x98] sm:$0xff]
        %v2932 = vld [vmem:[%s19 + $0xa0] sm:$0xff]
        %v2933 = vld [vmem:[%s19 + $0xa8] sm:$0xff]
        %v2934 = vld [vmem:[%s19 + $0xb0] sm:$0xff]
        %v2935 = vld [vmem:[%s19 + $0xb8] sm:$0xff]
        %v2936 = vld [vmem:[%s19 + $0xc0] sm:$0xff]
        %v2937 = vld [vmem:[%s19 + $0xc8] sm:$0xff]
        %v2938 = vld [vmem:[%s19 + $0xd0] sm:$0xff]
        %v2939 = vld [vmem:[%s19 + $0xd8] sm:$0xff]
        %v2940 = vld [vmem:[%s19 + $0xe0] sm:$0xff]
        %v2941 = vld [vmem:[%s19 + $0xe8] sm:$0xff]
        %v2942 = vld [vmem:[%s19 + $0xf0] sm:$0xff]
        %v2943 = vld [vmem:[%s19 + $0xf8] sm:$0xff]
        %v2944 = vld [vmem:[%s19 + $0x100] sm:$0xff]
        %v2945 = vld [vmem:[%s19 + $0x108] sm:$0xff]
        %v2946 = vld [vmem:[%s19 + $0x110] sm:$0xff]
        %v2947 = vld [vmem:[%s19 + $0x118] sm:$0xff]
        %v2948 = vld [vmem:[%s19 + $0x120] sm:$0xff]
        %v2949 = vld [vmem:[%s19 + $0x128] sm:$0xff]
        %v2950 = vld [vmem:[%s19 + $0x130] sm:$0xff]
        %v2951 = vld [vmem:[%s19 + $0x138] sm:$0xff]
        %v2952 = vld [vmem:[%s19 + $0x140] sm:$0xff]
        %v2953 = vld [vmem:[%s19 + $0x148] sm:$0xff]
        %v2954 = vld [vmem:[%s19 + $0x150] sm:$0xff]
        %v2955 = vld [vmem:[%s19 + $0x158] sm:$0xff]
        %v2956 = vld [vmem:[%s19 + $0x160] sm:$0xff]
        %v2957 = vld [vmem:[%s19 + $0x168] sm:$0xff]
        %v2958 = vld [vmem:[%s19 + $0x170] sm:$0xff]
        %v2959 = vld [vmem:[%s19 + $0x178] sm:$0xff]
        %v2960 = vld [vmem:[%s19 + $0x180] sm:$0xff]
        %v2961 = vld [vmem:[%s19 + $0x188] sm:$0xff]
        %v2962 = vld [vmem:[%s19 + $0x190] sm:$0xff]
        %v2963 = vld [vmem:[%s19 + $0x198] sm:$0xff]
        %v2964 = vld [vmem:[%s19 + $0x1a0] sm:$0xff]
        %v2965 = vld [vmem:[%s19 + $0x1a8] sm:$0xff]
        %v2966 = vld [vmem:[%s19 + $0x1b0] sm:$0xff]
        %v2967 = vld [vmem:[%s19 + $0x1b8] sm:$0xff]
        %v2968 = vld [vmem:[%s19 + $0x1c0] sm:$0xff]
        %v2969 = vld [vmem:[%s19 + $0x1c8] sm:$0xff]
        %v2970 = vld [vmem:[%s19 + $0x1d0] sm:$0xff]
        %v2971 = vld [vmem:[%s19 + $0x1d8] sm:$0xff]
        %v2972 = vld [vmem:[%s19 + $0x1e0] sm:$0xff]
        %v2973 = vld [vmem:[%s19 + $0x1e8] sm:$0xff]
        %v2974 = vld [vmem:[%s19 + $0x1f0] sm:$0xff]
        %v2975 = vld [vmem:[%s19 + $0x1f8] sm:$0xff]
        %v2976 = vld [vmem:[%s20] sm:$0x3]
        %v2977 = vpack.c.bf16 %v2908, %v2908
        %v2978 = vpack.c.bf16 %v2909, %v2909
        %v2979 = vpack.c.bf16 %v2910, %v2910
        %v2980 = vpack.c.bf16 %v2911, %v2911
        %v2982 = vlaneseq
        %v2983 = vshrl.u32 %v2982, 7
        %v2984 = vsub.s32 0, %v2983
        %v2985 = vrot.slane %v2976, %v2984
        %v2986 = vlaneseq
        %v2987 = vshrl.u32 %v2986, 7
        %v2988 = vsub.s32 1, %v2987
        %v2989 = vrot.slane %v2976, %v2988
        %v3056 = vunpack.c.l.b16 %v2912
        %v3057 = vunpack.c.h.b16 %v2912
        %v3058 = vunpack.c.l.b16 %v2913
        %v3059 = vunpack.c.h.b16 %v2913
        %v3060 = vunpack.c.l.b16 %v2914
        %v3061 = vunpack.c.h.b16 %v2914
        %v3062 = vunpack.c.l.b16 %v2915
        %v3063 = vunpack.c.h.b16 %v2915
        %v3064 = vunpack.c.l.b16 %v2916
        %v3065 = vunpack.c.h.b16 %v2916
        %v3066 = vunpack.c.l.b16 %v2917
        %v3067 = vunpack.c.h.b16 %v2917
        %v3068 = vunpack.c.l.b16 %v2918
        %v3069 = vunpack.c.h.b16 %v2918
        %v3070 = vunpack.c.l.b16 %v2919
        %v3071 = vunpack.c.h.b16 %v2919
        %v3072 = vunpack.c.l.b16 %v2920
        %v3073 = vunpack.c.h.b16 %v2920
        %v3074 = vunpack.c.l.b16 %v2921
        %v3075 = vunpack.c.h.b16 %v2921
        %v3076 = vunpack.c.l.b16 %v2922
        %v3077 = vunpack.c.h.b16 %v2922
        %v3078 = vunpack.c.l.b16 %v2923
        %v3079 = vunpack.c.h.b16 %v2923
        %v3080 = vunpack.c.l.b16 %v2924
        %v3081 = vunpack.c.h.b16 %v2924
        %v3082 = vunpack.c.l.b16 %v2925
        %v3083 = vunpack.c.h.b16 %v2925
        %v3084 = vunpack.c.l.b16 %v2926
        %v3085 = vunpack.c.h.b16 %v2926
        %v3086 = vunpack.c.l.b16 %v2927
        %v3087 = vunpack.c.h.b16 %v2927
        %v3088 = vunpack.c.l.b16 %v2928
        %v3089 = vunpack.c.h.b16 %v2928
        %v3090 = vunpack.c.l.b16 %v2929
        %v3091 = vunpack.c.h.b16 %v2929
        %v3092 = vunpack.c.l.b16 %v2930
        %v3093 = vunpack.c.h.b16 %v2930
        %v3094 = vunpack.c.l.b16 %v2931
        %v3095 = vunpack.c.h.b16 %v2931
        %v3096 = vunpack.c.l.b16 %v2932
        %v3097 = vunpack.c.h.b16 %v2932
        %v3098 = vunpack.c.l.b16 %v2933
        %v3099 = vunpack.c.h.b16 %v2933
        %v3100 = vunpack.c.l.b16 %v2934
        %v3101 = vunpack.c.h.b16 %v2934
        %v3102 = vunpack.c.l.b16 %v2935
        %v3103 = vunpack.c.h.b16 %v2935
        %v3104 = vunpack.c.l.b16 %v2936
        %v3105 = vunpack.c.h.b16 %v2936
        %v3106 = vunpack.c.l.b16 %v2937
        %v3107 = vunpack.c.h.b16 %v2937
        %v3108 = vunpack.c.l.b16 %v2938
        %v3109 = vunpack.c.h.b16 %v2938
        %v3110 = vunpack.c.l.b16 %v2939
        %v3111 = vunpack.c.h.b16 %v2939
        %v3112 = vunpack.c.l.b16 %v2940
        %v3113 = vunpack.c.h.b16 %v2940
        %v3114 = vunpack.c.l.b16 %v2941
        %v3115 = vunpack.c.h.b16 %v2941
        %v3116 = vunpack.c.l.b16 %v2942
        %v3117 = vunpack.c.h.b16 %v2942
        %v3118 = vunpack.c.l.b16 %v2943
        %v3119 = vunpack.c.h.b16 %v2943
        %v3120 = vunpack.c.l.b16 %v2944
        %v3121 = vunpack.c.h.b16 %v2944
        %v3122 = vunpack.c.l.b16 %v2945
        %v3123 = vunpack.c.h.b16 %v2945
        %v3124 = vunpack.c.l.b16 %v2946
        %v3125 = vunpack.c.h.b16 %v2946
        %v3126 = vunpack.c.l.b16 %v2947
        %v3127 = vunpack.c.h.b16 %v2947
        %v3128 = vunpack.c.l.b16 %v2948
        %v3129 = vunpack.c.h.b16 %v2948
        %v3130 = vunpack.c.l.b16 %v2949
        %v3131 = vunpack.c.h.b16 %v2949
        %v3132 = vunpack.c.l.b16 %v2950
        %v3133 = vunpack.c.h.b16 %v2950
        %v3134 = vunpack.c.l.b16 %v2951
        %v3135 = vunpack.c.h.b16 %v2951
        %v3136 = vunpack.c.l.b16 %v2952
        %v3137 = vunpack.c.h.b16 %v2952
        %v3138 = vunpack.c.l.b16 %v2953
        %v3139 = vunpack.c.h.b16 %v2953
        %v3140 = vunpack.c.l.b16 %v2954
        %v3141 = vunpack.c.h.b16 %v2954
        %v3142 = vunpack.c.l.b16 %v2955
        %v3143 = vunpack.c.h.b16 %v2955
        %v3144 = vunpack.c.l.b16 %v2956
        %v3145 = vunpack.c.h.b16 %v2956
        %v3146 = vunpack.c.l.b16 %v2957
        %v3147 = vunpack.c.h.b16 %v2957
        %v3148 = vunpack.c.l.b16 %v2958
        %v3149 = vunpack.c.h.b16 %v2958
        %v3150 = vunpack.c.l.b16 %v2959
        %v3151 = vunpack.c.h.b16 %v2959
        %v3152 = vunpack.c.l.b16 %v2960
        %v3153 = vunpack.c.h.b16 %v2960
        %v3154 = vunpack.c.l.b16 %v2961
        %v3155 = vunpack.c.h.b16 %v2961
        %v3156 = vunpack.c.l.b16 %v2962
        %v3157 = vunpack.c.h.b16 %v2962
        %v3158 = vunpack.c.l.b16 %v2963
        %v3159 = vunpack.c.h.b16 %v2963
        %v3160 = vunpack.c.l.b16 %v2964
        %v3161 = vunpack.c.h.b16 %v2964
        %v3162 = vunpack.c.l.b16 %v2965
        %v3163 = vunpack.c.h.b16 %v2965
        %v3164 = vunpack.c.l.b16 %v2966
        %v3165 = vunpack.c.h.b16 %v2966
        %v3166 = vunpack.c.l.b16 %v2967
        %v3167 = vunpack.c.h.b16 %v2967
        %v3168 = vunpack.c.l.b16 %v2968
        %v3169 = vunpack.c.h.b16 %v2968
        %v3170 = vunpack.c.l.b16 %v2969
        %v3171 = vunpack.c.h.b16 %v2969
        %v3172 = vunpack.c.l.b16 %v2970
        %v3173 = vunpack.c.h.b16 %v2970
        %v3174 = vunpack.c.l.b16 %v2971
        %v3175 = vunpack.c.h.b16 %v2971
        %v3176 = vunpack.c.l.b16 %v2972
        %v3177 = vunpack.c.h.b16 %v2972
        %v3178 = vunpack.c.l.b16 %v2973
        %v3179 = vunpack.c.h.b16 %v2973
        %v3180 = vunpack.c.l.b16 %v2974
        %v3181 = vunpack.c.h.b16 %v2974
        %v3182 = vunpack.c.l.b16 %v2975
        %v3183 = vunpack.c.h.b16 %v2975
        %v3184 = vpack.c.b16 %v3058, %v3056
        %v3185 = vpack.c.b16 %v3059, %v3057
        %v3186 = vpack.c.b16 %v3062, %v3060
        %v3187 = vpack.c.b16 %v3063, %v3061
        %v3188 = vpack.c.b16 %v3066, %v3064
        %v3189 = vpack.c.b16 %v3067, %v3065
        %v3190 = vpack.c.b16 %v3070, %v3068
        %v3191 = vpack.c.b16 %v3071, %v3069
        %v3192 = vpack.c.b16 %v3074, %v3072
        %v3193 = vpack.c.b16 %v3075, %v3073
        %v3194 = vpack.c.b16 %v3078, %v3076
        %v3195 = vpack.c.b16 %v3079, %v3077
        %v3196 = vpack.c.b16 %v3082, %v3080
        %v3197 = vpack.c.b16 %v3083, %v3081
        %v3198 = vpack.c.b16 %v3086, %v3084
        %v3199 = vpack.c.b16 %v3087, %v3085
        %v3200 = vpack.c.b16 %v3090, %v3088
        %v3201 = vpack.c.b16 %v3091, %v3089
        %v3202 = vpack.c.b16 %v3094, %v3092
        %v3203 = vpack.c.b16 %v3095, %v3093
        %v3204 = vpack.c.b16 %v3098, %v3096
        %v3205 = vpack.c.b16 %v3099, %v3097
        %v3206 = vpack.c.b16 %v3102, %v3100
        %v3207 = vpack.c.b16 %v3103, %v3101
        %v3208 = vpack.c.b16 %v3106, %v3104
        %v3209 = vpack.c.b16 %v3107, %v3105
        %v3210 = vpack.c.b16 %v3110, %v3108
        %v3211 = vpack.c.b16 %v3111, %v3109
        %v3212 = vpack.c.b16 %v3114, %v3112
        %v3213 = vpack.c.b16 %v3115, %v3113
        %v3214 = vpack.c.b16 %v3118, %v3116
        %v3215 = vpack.c.b16 %v3119, %v3117
        %v3216 = vpack.c.b16 %v3122, %v3120
        %v3217 = vpack.c.b16 %v3123, %v3121
        %v3218 = vpack.c.b16 %v3126, %v3124
        %v3219 = vpack.c.b16 %v3127, %v3125
        %v3220 = vpack.c.b16 %v3130, %v3128
        %v3221 = vpack.c.b16 %v3131, %v3129
        %v3222 = vpack.c.b16 %v3134, %v3132
        %v3223 = vpack.c.b16 %v3135, %v3133
        %v3224 = vpack.c.b16 %v3138, %v3136
        %v3225 = vpack.c.b16 %v3139, %v3137
        %v3226 = vpack.c.b16 %v3142, %v3140
        %v3227 = vpack.c.b16 %v3143, %v3141
        %v3228 = vpack.c.b16 %v3146, %v3144
        %v3229 = vpack.c.b16 %v3147, %v3145
        %v3230 = vpack.c.b16 %v3150, %v3148
        %v3231 = vpack.c.b16 %v3151, %v3149
        %v3232 = vpack.c.b16 %v3154, %v3152
        %v3233 = vpack.c.b16 %v3155, %v3153
        %v3234 = vpack.c.b16 %v3158, %v3156
        %v3235 = vpack.c.b16 %v3159, %v3157
        %v3236 = vpack.c.b16 %v3162, %v3160
        %v3237 = vpack.c.b16 %v3163, %v3161
        %v3238 = vpack.c.b16 %v3166, %v3164
        %v3239 = vpack.c.b16 %v3167, %v3165
        %v3240 = vpack.c.b16 %v3170, %v3168
        %v3241 = vpack.c.b16 %v3171, %v3169
        %v3242 = vpack.c.b16 %v3174, %v3172
        %v3243 = vpack.c.b16 %v3175, %v3173
        %v3244 = vpack.c.b16 %v3178, %v3176
        %v3245 = vpack.c.b16 %v3179, %v3177
        %v3246 = vpack.c.b16 %v3182, %v3180
        %v3247 = vpack.c.b16 %v3183, %v3181
        %3312 = vmatprep.subr.bf16.mxu0 %v3185
        %3313 = vmatpush1.bf16.msra.mxu0 %v3184
        %3314 = vmatprep.subr.bf16.mxu0 %v3187
        %3315 = vmatpush1.bf16.msra.mxu0 %v3186
        %3316 = vmatprep.subr.bf16.mxu0 %v3189
        %3317 = vmatpush1.bf16.msra.mxu0 %v3188
        %3318 = vmatprep.subr.bf16.mxu0 %v3191
        %3319 = vmatpush1.bf16.msra.mxu0 %v3190
        %3320 = vmatprep.subr.bf16.mxu0 %v3193
        %3321 = vmatpush1.bf16.msra.mxu0 %v3192
        %3322 = vmatprep.subr.bf16.mxu0 %v3195
        %3323 = vmatpush1.bf16.msra.mxu0 %v3194
        %3324 = vmatprep.subr.bf16.mxu0 %v3197
        %3325 = vmatpush1.bf16.msra.mxu0 %v3196
        %3326 = vmatprep.subr.bf16.mxu0 %v3199
        %3327 = vmatpush1.bf16.msra.mxu0 %v3198
        %3328 = vmatprep.subr.bf16.mxu0 %v3201
        %3329 = vmatpush1.bf16.msra.mxu0 %v3200
        %3330 = vmatprep.subr.bf16.mxu0 %v3203
        %3331 = vmatpush1.bf16.msra.mxu0 %v3202
        %3332 = vmatprep.subr.bf16.mxu0 %v3205
        %3333 = vmatpush1.bf16.msra.mxu0 %v3204
        %3334 = vmatprep.subr.bf16.mxu0 %v3207
        %3335 = vmatpush1.bf16.msra.mxu0 %v3206
        %3336 = vmatprep.subr.bf16.mxu0 %v3209
        %3337 = vmatpush1.bf16.msra.mxu0 %v3208
        %3338 = vmatprep.subr.bf16.mxu0 %v3211
        %3339 = vmatpush1.bf16.msra.mxu0 %v3210
        %3340 = vmatprep.subr.bf16.mxu0 %v3213
        %3341 = vmatpush1.bf16.msra.mxu0 %v3212
        %3342 = vmatprep.subr.bf16.mxu0 %v3215
        %3343 = vmatpush1.bf16.msra.mxu0 %v3214
        %3344 = vmatprep.mubr.bf16.mxu0 %v2978
        %3345 = vmatmul.mubr.bf16.gmra.mrb[0].mxu0 %v2977
        %v3346 = vpop.f32.mrb[0].mxu0
        %v3347 = vadd.f32 %v2985, %v3346
        %v3348 = vpop.f32.mrb[0].mxu0
        %v3349 = vadd.f32 %v2989, %v3348
        %v3350 = vpop.f32.mrb[0].mxu0
        %v3351 = vpop.f32.mrb[0].mxu0
        %3352 = vdwg.mxu0
        %3353 = vmatprep.subr.bf16.mxu0 %v3217
        %3354 = vmatpush1.bf16.msra.mxu0 %v3216
        %3355 = vmatprep.subr.bf16.mxu0 %v3219
        %3356 = vmatpush1.bf16.msra.mxu0 %v3218
        %3357 = vmatprep.subr.bf16.mxu0 %v3221
        %3358 = vmatpush1.bf16.msra.mxu0 %v3220
        %3359 = vmatprep.subr.bf16.mxu0 %v3223
        %3360 = vmatpush1.bf16.msra.mxu0 %v3222
        %3361 = vmatprep.subr.bf16.mxu0 %v3225
        %3362 = vmatpush1.bf16.msra.mxu0 %v3224
        %3363 = vmatprep.subr.bf16.mxu0 %v3227
        %3364 = vmatpush1.bf16.msra.mxu0 %v3226
        %3365 = vmatprep.subr.bf16.mxu0 %v3229
        %3366 = vmatpush1.bf16.msra.mxu0 %v3228
        %3367 = vmatprep.subr.bf16.mxu0 %v3231
        %3368 = vmatpush1.bf16.msra.mxu0 %v3230
        %3369 = vmatprep.subr.bf16.mxu0 %v3233
        %3370 = vmatpush1.bf16.msra.mxu0 %v3232
        %3371 = vmatprep.subr.bf16.mxu0 %v3235
        %3372 = vmatpush1.bf16.msra.mxu0 %v3234
        %3373 = vmatprep.subr.bf16.mxu0 %v3237
        %3374 = vmatpush1.bf16.msra.mxu0 %v3236
        %3375 = vmatprep.subr.bf16.mxu0 %v3239
        %3376 = vmatpush1.bf16.msra.mxu0 %v3238
        %3377 = vmatprep.subr.bf16.mxu0 %v3241
        %3378 = vmatpush1.bf16.msra.mxu0 %v3240
        %3379 = vmatprep.subr.bf16.mxu0 %v3243
        %3380 = vmatpush1.bf16.msra.mxu0 %v3242
        %3381 = vmatprep.subr.bf16.mxu0 %v3245
        %3382 = vmatpush1.bf16.msra.mxu0 %v3244
        %3383 = vmatprep.subr.bf16.mxu0 %v3247
        %3384 = vmatpush1.bf16.msra.mxu0 %v3246
        %3385 = vmatprep.mubr.bf16.mxu0 %v2980
        %3386 = vmatmul.mubr.bf16.gmra.mrb[0].mxu0 %v2979
        %v3387 = vpop.f32.mrb[0].mxu0
        %v3388 = vadd.f32 %v3347, %v3387
        %v3389 = vpop.f32.mrb[0].mxu0
        %v3390 = vadd.f32 %v3349, %v3389
        %v3391 = vpop.f32.mrb[0].mxu0
        %v3392 = vpop.f32.mrb[0].mxu0
        %3393 = vdwg.mxu0
        %v3394 = vmax.f32 %v3388, 0.0
        %v3395 = vmax.f32 %v3390, 0.0
        %3396 = vst [vmem:[%s649] sm:$0xff] %v3394
        %3397 = vst [vmem:[%s649 + $0x8] sm:$0xff] %v3395
        %s3398 = sand.u32 %s489, 1
        %s3399 = scalar_lea.sflag [#allocation3], %s3398
        %s3400 = sand.u32 %s489, 1
        %s3401 = smul.addr %s3400, 16
        %s3402 = scalar_lea.vmem [#allocation2], %s3401
        // Predicated region
        $region105: #{conv_ae_forward.1} parent=103 // pred_check
          %p3403 = pneg %p499
        $region106: #{conv_ae_forward.1} parent=103 // pred_check_branch
          %3405 = sbr.rel (%p3403) target = $region108
        $region107: #{conv_ae_forward.1} parent=103 // pred_region
          %s3407 = ssub.s32 256, 256
          %3408 = vsyncadd %s3399, %s3407
          %s3409 = smul.addr %s35, 2
          %s3410 = smul.addr %s3409, 128
          %s3411 = scalar_lea.hbm %s21, %s3410
          %s3413 = sshll.u32 %s3402, 4
          %s3414 = int_to_ptr.vmem [resolvable:$true] %s3413
          %3416 = dma.vmem_to_hbm [thread:$0]  %s3414, 256, %s3411, %s3399
        $region108: #{conv_ae_forward.1} parent=103 // pred_fallthru
          _
      $region104: #{conv_ae_forward.1} parent=5 // pred_fallthru
        _
      %p3417 = scmp.le.s32.totalorder 2, %s30
      // Predicated region
      $region109: #{conv_ae_forward.1} parent=5 // pred_check
        %p3418 = pneg %p3417
      $region110: #{conv_ae_forward.1} parent=5 // pred_check_branch
        %3420 = sbr.rel (%p3418) target = $region112
      $region111: #{conv_ae_forward.1} parent=5 // pred_region
        %s3421 = ssub.s32 %s30, 2
        // Predicated region
        $region113: #{conv_ae_forward.1} parent=111 // pred_check
          %p3422 = pneg %p505
        $region114: #{conv_ae_forward.1} parent=111 // pred_check_branch
          %3424 = sbr.rel (%p3422) target = $region116
        $region115: #{conv_ae_forward.1} parent=111 // pred_region
          %s3425 = sand.u32 %s490, 1
          %s3426 = scalar_lea.sflag [#allocation3], %s3425
          %s3427 = sand.u32 %s490, 1
          %s3428 = smul.addr %s3427, 16
          %s3429 = scalar_lea.vmem [#allocation2], %s3428
          %3430 = dma.done %s3426, 256
        $region116: #{conv_ae_forward.1} parent=111 // pred_fallthru
          _
      $region112: #{conv_ae_forward.1} parent=5 // pred_fallthru
        _
    $region6: #{conv_ae_forward.1} parent=1 // loop_footer
      %s34 = sadd.s32 1, %s30
    $region7: #{conv_ae_forward.1} parent=1 // loop_footer_branch
      %29 = sbr.rel target = $region3
    $region8: #{conv_ae_forward.1} parent=1 // loop_exit
      _
    %3431 = vsyncpa [#allocation3], 1
    %s3432 = scalar_lea.sflag [#allocation3], 1
    %3433 = vsyncpa %s3432, 1

</llo_original>
